<compile_context>
chip_gen: v7x
topology: tpu7x:2x2x1
jax: 0.10.0
libtpu: 0.0.40
codegen_flags: <defaults>
</compile_context>

<pallas_src>
import functools

import numpy as np

import jax
import jax.numpy as jnp
from jax.experimental import pallas as pl
from jax.experimental.pallas import tpu as pltpu


# ----------------------------------------------------------------------------
# host-side structural operators (shape-only constants, built with numpy)
# ----------------------------------------------------------------------------
def _lin_upsample_matrix(n):
    """(2n, n) linear-interp matrix = PyTorch linear upsample x2, align_corners=False."""
    U = np.zeros((2 * n, n), dtype=np.float32)
    for i in range(2 * n):
        src = min(max(i / 2.0 - 0.25, 0.0), n - 1.0)
        lo = int(np.floor(src))
        hi = min(lo + 1, n - 1)
        w = src - lo
        U[i, lo] += 1.0 - w
        U[i, hi] += w
    return U


def _band_selector(s2, pad_output):
    """SEL[s, dx, t] = 1 iff padded-input column s feeds output column t with kernel tap dx."""
    t_size = s2 + 2 if pad_output else s2
    off = 1 if pad_output else 0
    sel = np.zeros((s2 + 2, 3, t_size), dtype=np.float32)
    for dx in range(3):
        for p in range(s2):
            sel[p + dx, dx, p + off] = 1.0
    return sel


# ----------------------------------------------------------------------------
# fused Pallas kernel: one batch element per grid step
# ----------------------------------------------------------------------------
def _fused_kernel(x1_ref, x2_ref, a1_ref, a2_ref, e1_ref, v1_ref, v2_ref,
                  m1_ref, b1_ref, m2_ref, b2_ref, o_ref, pad1_ref, pad2_ref,
                  *, S3, S1, S2, C, Cm):
    f32 = jnp.float32
    R = S3 * S1                 # spatial rows handled per sample
    W1 = (S2 + 2) * C           # lane width of conv1's zero-bordered rows
    W2 = (S2 + 2) * Cm          # lane width of conv2's zero-bordered rows

    # ---- trilinear (2,2,1) upsample of inputs2 + channel concat with inputs1,
    #      both expressed as MXU matmuls into the lane-merged, zero-bordered layout.
    t = jnp.dot(a1_ref[...], x2_ref[0], preferred_element_type=f32)          # (R, S2h*C2)
    cat = (jnp.dot(x1_ref[0], e1_ref[...], preferred_element_type=f32)
           + jnp.dot(t, a2_ref[...], preferred_element_type=f32))            # (R, W1)

    # ---- SqEx: global average pool -> Linear -> ReLU -> Linear -> Sigmoid -> gate
    #      (pool map and gate replication are folded into V1 / V2 on the host side)
    m = jnp.mean(cat, axis=0, keepdims=True)                                 # (1, W1)
    h = jnp.maximum(jnp.dot(m, v1_ref[...], preferred_element_type=f32), 0.0)  # (1, Cr)
    z = jnp.dot(h, v2_ref[...], preferred_element_type=f32)                  # (1, W1) replicated
    gate = 1.0 / (1.0 + jnp.exp(-z))
    gated = cat * gate                                                       # (R, W1)

    # ---- conv1 (3x3x1, pad (1,1,0)) + bias + ReLU: stage rows in a VMEM scratch with a
    #      zero sublane border (only the two border slabs are zeroed), then 3 row-tap matmuls
    #      against the banded im2col weight (dx folded into K).  Bias folded into tap 0.
    zrow1 = jnp.zeros((S3, 1, W1), f32)
    pad1_ref[:, 0:1, :] = zrow1
    pad1_ref[:, S1 + 1:S1 + 2, :] = zrow1
    pad1_ref[:, 1:S1 + 1, :] = gated.reshape(S3, S1, W1)
    acc = (jnp.dot(pad1_ref[:, 0:S1, :].reshape(R, W1), m1_ref[0],
                   preferred_element_type=f32) + b1_ref[...])
    for dy in range(1, 3):
        acc = acc + jnp.dot(pad1_ref[:, dy:dy + S1, :].reshape(R, W1), m1_ref[dy],
                            preferred_element_type=f32)
    y1 = jnp.maximum(acc, 0.0)                                               # (R, W2)

    # ---- conv2 (3x3x1, pad (1,1,0)) + bias + ReLU, same staging scheme
    zrow2 = jnp.zeros((S3, 1, W2), f32)
    pad2_ref[:, 0:1, :] = zrow2
    pad2_ref[:, S1 + 1:S1 + 2, :] = zrow2
    pad2_ref[:, 1:S1 + 1, :] = y1.reshape(S3, S1, W2)
    acc2 = (jnp.dot(pad2_ref[:, 0:S1, :].reshape(R, W2), m2_ref[0],
                    preferred_element_type=f32) + b2_ref[...])
    for dy in range(1, 3):
        acc2 = acc2 + jnp.dot(pad2_ref[:, dy:dy + S1, :].reshape(R, W2), m2_ref[dy],
                              preferred_element_type=f32)

    # lane-dense store: last dim = S2*Cm (multiple of 128 in practice) -> unmasked stores
    o_ref[0] = jnp.maximum(acc2, 0.0).astype(o_ref.dtype)


# ----------------------------------------------------------------------------
# wrapper: PyTorch layout in / out, one fused pallas_call
# ----------------------------------------------------------------------------
def unet_up3_sqex_forward(inputs1, inputs2, params):
    """inputs1: (N, out_size, S1, S2, S3) skip features; inputs2: (N, in_size, S1/2, S2/2, S3)."""
    w_se1, w_se2 = params["w_se1"], params["w_se2"]
    w1, b1, w2, b2 = params["w1"], params["b1"], params["w2"], params["b2"]

    N, C1, S1, S2, S3 = inputs1.shape
    _, C2, S1h, S2h, S3b = inputs2.shape

    # self.up output size, then the module's offset / F.pad step (no-op when offset == 0).
    offset = 2 * S1h - S1
    o2 = offset // 2
    if o2 != 0:
        # F.pad(inputs1, 2*[o2, o2, 0]) pads (last dim first): S3:(o2,o2), S2:(0,o2), S1:(o2,0)
        inputs1 = jnp.pad(inputs1, ((0, 0), (0, 0), (o2, 0), (0, o2), (o2, o2)))
        N, C1, S1, S2, S3 = inputs1.shape
    assert (S1, S2, S3) == (2 * S1h, 2 * S2h, S3b), "spatial sizes must line up for concat"

    C = C1 + C2
    Cm = b1.shape[0]
    R = S3 * S1
    W1 = (S2 + 2) * C
    W2 = (S2 + 2) * Cm
    f32 = np.float32

    # --- structural operators ------------------------------------------------
    U1 = _lin_upsample_matrix(S1h)                                            # (S1, S1h)
    U2 = _lin_upsample_matrix(S2h)                                            # (S2, S2h)
    A1 = np.kron(np.eye(S3, dtype=f32), U1)                                   # (R, S3*S1h)
    U2p = np.concatenate([np.zeros((S2h, 1), f32), U2.T.astype(f32),
                          np.zeros((S2h, 1), f32)], axis=1)                   # (S2h, S2+2)
    emb2 = np.concatenate([np.zeros((C2, C1), f32), np.eye(C2, dtype=f32)], axis=1)
    A2 = np.kron(U2p, emb2)                                                   # (S2h*C2, W1)
    G = np.eye(S2, S2 + 2, k=1, dtype=f32)
    emb1 = np.concatenate([np.eye(C1, dtype=f32), np.zeros((C1, C2), f32)], axis=1)
    E1 = np.kron(G, emb1)                                                     # (S2*C1, W1)
    P = np.kron(np.ones((S2 + 2, 1), f32) / S2, np.eye(C, dtype=f32))         # pooling map
    K = np.kron(np.ones((1, S2 + 2), f32), np.eye(C, dtype=f32))              # gate replication

    # --- fold module weights into kernel-ready operators (tiny XLA ops, once per call) ----
    V1 = jnp.asarray(P) @ w_se1                                               # (W1, Cr)
    V2 = w_se2 @ jnp.asarray(K)                                               # (Cr, W1)
    SELp = jnp.asarray(_band_selector(S2, pad_output=True))                   # (S2+2, 3, S2+2)
    SELo = jnp.asarray(_band_selector(S2, pad_output=False))                  # (S2+2, 3, S2)
    M1 = jnp.einsum("sdt,ydio->ysito", SELp, w1).reshape(3, W1, W2)
    M2 = jnp.einsum("sdt,ydio->ysito", SELo, w2).reshape(3, W2, S2 * Cm)
    b1p = jnp.concatenate([jnp.zeros((1, Cm), jnp.float32),
                           jnp.tile(b1.reshape(1, Cm), (1, S2)),
                           jnp.zeros((1, Cm), jnp.float32)], axis=1)          # (1, W2)
    b2t = jnp.tile(b2.reshape(1, Cm), (1, S2))                                # (1, S2*Cm)

    # --- one-time layout change: (N, C, S1, S2, S3) -> rows=(S3,S1), lanes=(S2,C) ----
    x1 = jnp.transpose(inputs1, (0, 4, 2, 3, 1)).reshape(N, R, S2 * C1)
    x2 = jnp.transpose(inputs2, (0, 4, 2, 3, 1)).reshape(N, S3 * S1h, S2h * C2)

    kernel = functools.partial(_fused_kernel, S3=S3, S1=S1, S2=S2, C=C, Cm=Cm)
    out_flat = pl.pallas_call(
        kernel,
        out_shape=jax.ShapeDtypeStruct((N, R, S2 * Cm), jnp.float32),
        grid=(N,),
        in_specs=[
            pl.BlockSpec((1, R, S2 * C1), lambda n: (n, 0, 0)),
            pl.BlockSpec((1, S3 * S1h, S2h * C2), lambda n: (n, 0, 0)),
            pl.BlockSpec(A1.shape, lambda n: (0, 0)),
            pl.BlockSpec(A2.shape, lambda n: (0, 0)),
            pl.BlockSpec(E1.shape, lambda n: (0, 0)),
            pl.BlockSpec(V1.shape, lambda n: (0, 0)),
            pl.BlockSpec(V2.shape, lambda n: (0, 0)),
            pl.BlockSpec(M1.shape, lambda n: (0, 0, 0)),
            pl.BlockSpec(b1p.shape, lambda n: (0, 0)),
            pl.BlockSpec(M2.shape, lambda n: (0, 0, 0)),
            pl.BlockSpec(b2t.shape, lambda n: (0, 0)),
        ],
        out_specs=pl.BlockSpec((1, R, S2 * Cm), lambda n: (n, 0, 0)),
        scratch_shapes=[
            pltpu.VMEM((S3, S1 + 2, W1), jnp.float32),   # zero-bordered conv1 input rows
            pltpu.VMEM((S3, S1 + 2, W2), jnp.float32),   # zero-bordered conv2 input rows
        ],
        compiler_params=pltpu.CompilerParams(dimension_semantics=("parallel",)),
    )(x1, x2, jnp.asarray(A1), jnp.asarray(A2), jnp.asarray(E1),
      V1, V2, M1, b1p, M2, b2t)

    # back to the PyTorch (N, C, S1, S2, S3) layout
    return jnp.transpose(out_flat.reshape(N, S3, S1, S2, Cm), (0, 4, 2, 3, 1))


# ----------------------------------------------------------------------------
# pure-JAX reference (independent implementation) for correctness checking
# ----------------------------------------------------------------------------
def _ref_upsample2x(x, axis):
    n = x.shape[axis]
    i = jnp.arange(2 * n, dtype=jnp.float32)
    src = jnp.clip(i / 2.0 - 0.25, 0.0, float(n - 1))
    lo = jnp.floor(src).astype(jnp.int32)
    hi = jnp.minimum(lo + 1, n - 1)
    w = src - lo.astype(jnp.float32)
    shape = [1] * x.ndim
    shape[axis] = 2 * n
    w = w.reshape(shape)
    return jnp.take(x, lo, axis=axis) * (1.0 - w) + jnp.take(x, hi, axis=axis) * w


def _reference_forward(inputs1, inputs2, params):
    up = _ref_upsample2x(_ref_upsample2x(inputs2, axis=2), axis=3)
    o2 = (up.shape[2] - inputs1.shape[2]) // 2
    x1 = inputs1
    if o2 != 0:
        x1 = jnp.pad(x1, ((0, 0), (0, 0), (o2, 0), (0, o2), (o2, o2)))
    cat = jnp.concatenate([x1, up], axis=1)
    pooled = jnp.mean(cat, axis=(2, 3, 4))
    h = jnp.maximum(pooled @ params["w_se1"], 0.0)
    s = jax.nn.sigmoid(h @ params["w_se2"])
    gated = cat * s[:, :, None, None, None]

    def conv(x, w, b):
        y = jax.lax.conv_general_dilated(
            x, w[:, :, None, :, :], window_strides=(1, 1, 1),
            padding=((1, 1), (1, 1), (0, 0)),
            dimension_numbers=("NCDHW", "DHWIO", "NCDHW"))
        return jnp.maximum(y + b[None, :, None, None, None], 0.0)

    y = conv(gated, params["w1"], params["b1"])
    return conv(y, params["w2"], params["b2"])


# ----------------------------------------------------------------------------
if __name__ == "__main__":
    key = jax.random.PRNGKey(0)
    ks = jax.random.split(key, 8)

    N, in_size, out_size = 2, 16, 8          # SqEx n_features = 24, reduction 6 -> hidden 4
    S1 = S2 = 16
    S3 = 4
    C = in_size + out_size
    Cr = C // 6

    inputs1 = jax.random.normal(ks[0], (N, out_size, S1, S2, S3), jnp.float32)
    inputs2 = jax.random.normal(ks[1], (N, in_size, S1 // 2, S2 // 2, S3), jnp.float32)
    params = {
        "w_se1": jax.random.normal(ks[2], (C, Cr), jnp.float32) * 0.3,   # linear1.weight.T
        "w_se2": jax.random.normal(ks[3], (Cr, C), jnp.float32) * 0.3,   # linear2.weight.T
        "w1":    jax.random.normal(ks[4], (3, 3, C, out_size), jnp.float32) * 0.1,
        "b1":    jax.random.normal(ks[5], (out_size,), jnp.float32) * 0.1,
        "w2":    jax.random.normal(ks[6], (3, 3, out_size, out_size), jnp.float32) * 0.1,
        "b2":    jax.random.normal(ks[7], (out_size,), jnp.float32) * 0.1,
    }

    out = jax.jit(unet_up3_sqex_forward)(inputs1, inputs2, params)
    out = jax.block_until_ready(out)
    assert out.shape == (N, out_size, S1, S2, S3)

    ref = _reference_forward(inputs1, inputs2, params)
    err = float(jnp.max(jnp.abs(out - ref)))
    assert jnp.allclose(out, ref, atol=5e-3, rtol=5e-3), f"max abs err {err}"
    print("KERNEL_OK")
</pallas_src>

<mosaic_0001>
module attributes {stable_mosaic.version = 11 : i64} {
  func.func @_fused_kernel(%arg0: i32, %arg1: memref<1x64x128xf32, #tpu.memory_space<vmem>>, %arg2: memref<1x32x128xf32, #tpu.memory_space<vmem>>, %arg3: memref<64x32xf32, #tpu.memory_space<vmem>>, %arg4: memref<128x432xf32, #tpu.memory_space<vmem>>, %arg5: memref<128x432xf32, #tpu.memory_space<vmem>>, %arg6: memref<432x4xf32, #tpu.memory_space<vmem>>, %arg7: memref<4x432xf32, #tpu.memory_space<vmem>>, %arg8: memref<3x432x144xf32, #tpu.memory_space<vmem>>, %arg9: memref<1x144xf32, #tpu.memory_space<vmem>>, %arg10: memref<3x144x128xf32, #tpu.memory_space<vmem>>, %arg11: memref<1x128xf32, #tpu.memory_space<vmem>>, %arg12: memref<1x64x128xf32, #tpu.memory_space<vmem>>, %arg13: memref<4x18x432xf32, #tpu.memory_space<vmem>>, %arg14: memref<4x18x144xf32, #tpu.memory_space<vmem>>) attributes {dimension_semantics = [#tpu.dimension_semantics<parallel>], iteration_bounds = array<i64: 2>, scalar_prefetch = 0 : i64, scratch_operands = 2 : i64, tpu.core_type = #tpu.core_type<tc>, window_params = [{transform_indices = @transform_0, window_bounds = array<i64: 1, 64, 128>}, {transform_indices = @transform_1, window_bounds = array<i64: 1, 32, 128>}, {pipeline_mode = #tpu.pipeline_mode<synchronous>, transform_indices = @transform_2, window_bounds = array<i64: 64, 32>}, {pipeline_mode = #tpu.pipeline_mode<synchronous>, transform_indices = @transform_3, window_bounds = array<i64: 128, 432>}, {pipeline_mode = #tpu.pipeline_mode<synchronous>, transform_indices = @transform_4, window_bounds = array<i64: 128, 432>}, {pipeline_mode = #tpu.pipeline_mode<synchronous>, transform_indices = @transform_5, window_bounds = array<i64: 432, 4>}, {pipeline_mode = #tpu.pipeline_mode<synchronous>, transform_indices = @transform_6, window_bounds = array<i64: 4, 432>}, {pipeline_mode = #tpu.pipeline_mode<synchronous>, transform_indices = @transform_7, window_bounds = array<i64: 3, 432, 144>}, {pipeline_mode = #tpu.pipeline_mode<synchronous>, transform_indices = @transform_8, window_bounds = array<i64: 1, 144>}, {pipeline_mode = #tpu.pipeline_mode<synchronous>, transform_indices = @transform_9, window_bounds = array<i64: 3, 144, 128>}, {pipeline_mode = #tpu.pipeline_mode<synchronous>, transform_indices = @transform_10, window_bounds = array<i64: 1, 128>}, {transform_indices = @transform_11, window_bounds = array<i64: 1, 64, 128>}]} {
    %c0 = arith.constant 0 : index
    %c0_0 = arith.constant 0 : index
    %0 = vector.load %arg3[%c0, %c0_0] : memref<64x32xf32, #tpu.memory_space<vmem>>, vector<64x32xf32>
    %c0_1 = arith.constant 0 : index
    %c0_2 = arith.constant 0 : index
    %c0_3 = arith.constant 0 : index
    %1 = vector.load %arg2[%c0_1, %c0_2, %c0_3] : memref<1x32x128xf32, #tpu.memory_space<vmem>>, vector<1x32x128xf32>
    %2 = vector.shape_cast %1 : vector<1x32x128xf32> to vector<32x128xf32>
    %cst = arith.constant dense<0.000000e+00> : vector<64x128xf32>
    %3 = tpu.matmul %0, %2, %cst {dimension_numbers = #tpu.dot_dimension_numbers<[1], [0], [0], [1], [0, 0, 1, 1], [], []>} : vector<64x32xf32>, vector<32x128xf32>, vector<64x128xf32> -> vector<64x128xf32>
    %c0_4 = arith.constant 0 : index
    %c0_5 = arith.constant 0 : index
    %c0_6 = arith.constant 0 : index
    %4 = vector.load %arg1[%c0_4, %c0_5, %c0_6] : memref<1x64x128xf32, #tpu.memory_space<vmem>>, vector<1x64x128xf32>
    %5 = vector.shape_cast %4 : vector<1x64x128xf32> to vector<64x128xf32>
    %c0_7 = arith.constant 0 : index
    %c0_8 = arith.constant 0 : index
    %6 = vector.load %arg5[%c0_7, %c0_8] : memref<128x432xf32, #tpu.memory_space<vmem>>, vector<128x432xf32>
    %cst_9 = arith.constant dense<0.000000e+00> : vector<64x432xf32>
    %7 = tpu.matmul %5, %6, %cst_9 {dimension_numbers = #tpu.dot_dimension_numbers<[1], [0], [0], [1], [0, 0, 1, 1], [], []>} : vector<64x128xf32>, vector<128x432xf32>, vector<64x432xf32> -> vector<64x432xf32>
    %c0_10 = arith.constant 0 : index
    %c0_11 = arith.constant 0 : index
    %8 = vector.load %arg4[%c0_10, %c0_11] : memref<128x432xf32, #tpu.memory_space<vmem>>, vector<128x432xf32>
    %cst_12 = arith.constant dense<0.000000e+00> : vector<64x432xf32>
    %9 = tpu.matmul %3, %8, %cst_12 {dimension_numbers = #tpu.dot_dimension_numbers<[1], [0], [0], [1], [0, 0, 1, 1], [], []>} : vector<64x128xf32>, vector<128x432xf32>, vector<64x432xf32> -> vector<64x432xf32>
    %10 = arith.addf %7, %9 : vector<64x432xf32>
    %cst_13 = arith.constant dense<0.000000e+00> : vector<432xf32>
    %11 = vector.multi_reduction <add>, %10, %cst_13 [0] : vector<64x432xf32> to vector<432xf32>
    %12 = vector.shape_cast %11 : vector<432xf32> to vector<1x432xf32>
    %cst_14 = arith.constant 6.400000e+01 : f32
    %13 = vector.broadcast %cst_14 : f32 to vector<1x432xf32>
    %14 = arith.divf %12, %13 : vector<1x432xf32>
    %c0_15 = arith.constant 0 : index
    %c0_16 = arith.constant 0 : index
    %15 = vector.load %arg6[%c0_15, %c0_16] : memref<432x4xf32, #tpu.memory_space<vmem>>, vector<432x4xf32>
    %cst_17 = arith.constant dense<0.000000e+00> : vector<1x4xf32>
    %16 = tpu.matmul %14, %15, %cst_17 {dimension_numbers = #tpu.dot_dimension_numbers<[1], [0], [0], [1], [0, 0, 1, 1], [], []>} : vector<1x432xf32>, vector<432x4xf32>, vector<1x4xf32> -> vector<1x4xf32>
    %cst_18 = arith.constant 0.000000e+00 : f32
    %17 = vector.broadcast %cst_18 : f32 to vector<1x4xf32>
    %18 = arith.maximumf %16, %17 : vector<1x4xf32>
    %c0_19 = arith.constant 0 : index
    %c0_20 = arith.constant 0 : index
    %19 = vector.load %arg7[%c0_19, %c0_20] : memref<4x432xf32, #tpu.memory_space<vmem>>, vector<4x432xf32>
    %cst_21 = arith.constant dense<0.000000e+00> : vector<1x432xf32>
    %20 = tpu.matmul %18, %19, %cst_21 {dimension_numbers = #tpu.dot_dimension_numbers<[1], [0], [0], [1], [0, 0, 1, 1], [], []>} : vector<1x4xf32>, vector<4x432xf32>, vector<1x432xf32> -> vector<1x432xf32>
    %cst_22 = arith.constant 0.000000e+00 : f32
    %21 = vector.broadcast %cst_22 : f32 to vector<1x432xf32>
    %22 = arith.subf %21, %20 : vector<1x432xf32>
    %23 = math.exp %22 : vector<1x432xf32>
    %cst_23 = arith.constant 1.000000e+00 : f32
    %24 = vector.broadcast %cst_23 : f32 to vector<1x432xf32>
    %25 = arith.addf %24, %23 : vector<1x432xf32>
    %cst_24 = arith.constant 1.000000e+00 : f32
    %26 = vector.broadcast %cst_24 : f32 to vector<1x432xf32>
    %27 = arith.divf %26, %25 : vector<1x432xf32>
    %28 = vector.broadcast %27 : vector<1x432xf32> to vector<64x432xf32>
    %29 = arith.mulf %10, %28 : vector<64x432xf32>
    %cst_25 = arith.constant 0.000000e+00 : f32
    %30 = vector.broadcast %cst_25 : f32 to vector<4x1x432xf32>
    %c0_26 = arith.constant 0 : index
    %c0_27 = arith.constant 0 : index
    %c0_28 = arith.constant 0 : index
    %31 = vector.load %arg13[%c0_26, %c0_27, %c0_28] : memref<4x18x432xf32, #tpu.memory_space<vmem>>, vector<4x1x432xf32>
    tpu.vector_store %arg13[%c0_26, %c0_27, %c0_28], %30 {strides = array<i32>} : memref<4x18x432xf32, #tpu.memory_space<vmem>>, vector<4x1x432xf32>,
    %c0_29 = arith.constant 0 : index
    %c17 = arith.constant 17 : index
    %c0_30 = arith.constant 0 : index
    %32 = vector.load %arg13[%c0_29, %c17, %c0_30] : memref<4x18x432xf32, #tpu.memory_space<vmem>>, vector<4x1x432xf32>
    tpu.vector_store %arg13[%c0_29, %c17, %c0_30], %30 {strides = array<i32>} : memref<4x18x432xf32, #tpu.memory_space<vmem>>, vector<4x1x432xf32>,
    %33 = vector.shape_cast %29 : vector<64x432xf32> to vector<4x16x432xf32>
    %c0_31 = arith.constant 0 : index
    %c1 = arith.constant 1 : index
    %c0_32 = arith.constant 0 : index
    %34 = vector.load %arg13[%c0_31, %c1, %c0_32] : memref<4x18x432xf32, #tpu.memory_space<vmem>>, vector<4x16x432xf32>
    tpu.vector_store %arg13[%c0_31, %c1, %c0_32], %33 {strides = array<i32>} : memref<4x18x432xf32, #tpu.memory_space<vmem>>, vector<4x16x432xf32>,
    %c0_33 = arith.constant 0 : index
    %c0_34 = arith.constant 0 : index
    %c0_35 = arith.constant 0 : index
    %35 = vector.load %arg13[%c0_33, %c0_34, %c0_35] : memref<4x18x432xf32, #tpu.memory_space<vmem>>, vector<4x16x432xf32>
    %36 = vector.shape_cast %35 : vector<4x16x432xf32> to vector<64x432xf32>
    %c0_36 = arith.constant 0 : index
    %c0_37 = arith.constant 0 : index
    %c0_38 = arith.constant 0 : index
    %37 = vector.load %arg8[%c0_36, %c0_37, %c0_38] : memref<3x432x144xf32, #tpu.memory_space<vmem>>, vector<1x432x144xf32>
    %38 = vector.shape_cast %37 : vector<1x432x144xf32> to vector<432x144xf32>
    %cst_39 = arith.constant dense<0.000000e+00> : vector<64x144xf32>
    %39 = tpu.matmul %36, %38, %cst_39 {dimension_numbers = #tpu.dot_dimension_numbers<[1], [0], [0], [1], [0, 0, 1, 1], [], []>} : vector<64x432xf32>, vector<432x144xf32>, vector<64x144xf32> -> vector<64x144xf32>
    %c0_40 = arith.constant 0 : index
    %c0_41 = arith.constant 0 : index
    %40 = vector.load %arg9[%c0_40, %c0_41] : memref<1x144xf32, #tpu.memory_space<vmem>>, vector<1x144xf32>
    %41 = vector.broadcast %40 : vector<1x144xf32> to vector<64x144xf32>
    %42 = arith.addf %39, %41 : vector<64x144xf32>
    %c0_42 = arith.constant 0 : index
    %c1_43 = arith.constant 1 : index
    %c0_44 = arith.constant 0 : index
    %43 = vector.load %arg13[%c0_42, %c1_43, %c0_44] : memref<4x18x432xf32, #tpu.memory_space<vmem>>, vector<4x16x432xf32>
    %44 = vector.shape_cast %43 : vector<4x16x432xf32> to vector<64x432xf32>
    %c1_45 = arith.constant 1 : index
    %c0_46 = arith.constant 0 : index
    %c0_47 = arith.constant 0 : index
    %45 = vector.load %arg8[%c1_45, %c0_46, %c0_47] : memref<3x432x144xf32, #tpu.memory_space<vmem>>, vector<1x432x144xf32>
    %46 = vector.shape_cast %45 : vector<1x432x144xf32> to vector<432x144xf32>
    %cst_48 = arith.constant dense<0.000000e+00> : vector<64x144xf32>
    %47 = tpu.matmul %44, %46, %cst_48 {dimension_numbers = #tpu.dot_dimension_numbers<[1], [0], [0], [1], [0, 0, 1, 1], [], []>} : vector<64x432xf32>, vector<432x144xf32>, vector<64x144xf32> -> vector<64x144xf32>
    %48 = arith.addf %42, %47 : vector<64x144xf32>
    %c0_49 = arith.constant 0 : index
    %c2 = arith.constant 2 : index
    %c0_50 = arith.constant 0 : index
    %49 = vector.load %arg13[%c0_49, %c2, %c0_50] : memref<4x18x432xf32, #tpu.memory_space<vmem>>, vector<4x16x432xf32>
    %50 = vector.shape_cast %49 : vector<4x16x432xf32> to vector<64x432xf32>
    %c2_51 = arith.constant 2 : index
    %c0_52 = arith.constant 0 : index
    %c0_53 = arith.constant 0 : index
    %51 = vector.load %arg8[%c2_51, %c0_52, %c0_53] : memref<3x432x144xf32, #tpu.memory_space<vmem>>, vector<1x432x144xf32>
    %52 = vector.shape_cast %51 : vector<1x432x144xf32> to vector<432x144xf32>
    %cst_54 = arith.constant dense<0.000000e+00> : vector<64x144xf32>
    %53 = tpu.matmul %50, %52, %cst_54 {dimension_numbers = #tpu.dot_dimension_numbers<[1], [0], [0], [1], [0, 0, 1, 1], [], []>} : vector<64x432xf32>, vector<432x144xf32>, vector<64x144xf32> -> vector<64x144xf32>
    %54 = arith.addf %48, %53 : vector<64x144xf32>
    %cst_55 = arith.constant 0.000000e+00 : f32
    %55 = vector.broadcast %cst_55 : f32 to vector<64x144xf32>
    %56 = arith.maximumf %54, %55 : vector<64x144xf32>
    %cst_56 = arith.constant 0.000000e+00 : f32
    %57 = vector.broadcast %cst_56 : f32 to vector<4x1x144xf32>
    %c0_57 = arith.constant 0 : index
    %c0_58 = arith.constant 0 : index
    %c0_59 = arith.constant 0 : index
    %58 = vector.load %arg14[%c0_57, %c0_58, %c0_59] : memref<4x18x144xf32, #tpu.memory_space<vmem>>, vector<4x1x144xf32>
    tpu.vector_store %arg14[%c0_57, %c0_58, %c0_59], %57 {strides = array<i32>} : memref<4x18x144xf32, #tpu.memory_space<vmem>>, vector<4x1x144xf32>,
    %c0_60 = arith.constant 0 : index
    %c17_61 = arith.constant 17 : index
    %c0_62 = arith.constant 0 : index
    %59 = vector.load %arg14[%c0_60, %c17_61, %c0_62] : memref<4x18x144xf32, #tpu.memory_space<vmem>>, vector<4x1x144xf32>
    tpu.vector_store %arg14[%c0_60, %c17_61, %c0_62], %57 {strides = array<i32>} : memref<4x18x144xf32, #tpu.memory_space<vmem>>, vector<4x1x144xf32>,
    %60 = vector.shape_cast %56 : vector<64x144xf32> to vector<4x16x144xf32>
    %c0_63 = arith.constant 0 : index
    %c1_64 = arith.constant 1 : index
    %c0_65 = arith.constant 0 : index
    %61 = vector.load %arg14[%c0_63, %c1_64, %c0_65] : memref<4x18x144xf32, #tpu.memory_space<vmem>>, vector<4x16x144xf32>
    tpu.vector_store %arg14[%c0_63, %c1_64, %c0_65], %60 {strides = array<i32>} : memref<4x18x144xf32, #tpu.memory_space<vmem>>, vector<4x16x144xf32>,
    %c0_66 = arith.constant 0 : index
    %c0_67 = arith.constant 0 : index
    %c0_68 = arith.constant 0 : index
    %62 = vector.load %arg14[%c0_66, %c0_67, %c0_68] : memref<4x18x144xf32, #tpu.memory_space<vmem>>, vector<4x16x144xf32>
    %63 = vector.shape_cast %62 : vector<4x16x144xf32> to vector<64x144xf32>
    %c0_69 = arith.constant 0 : index
    %c0_70 = arith.constant 0 : index
    %c0_71 = arith.constant 0 : index
    %64 = vector.load %arg10[%c0_69, %c0_70, %c0_71] : memref<3x144x128xf32, #tpu.memory_space<vmem>>, vector<1x144x128xf32>
    %65 = vector.shape_cast %64 : vector<1x144x128xf32> to vector<144x128xf32>
    %cst_72 = arith.constant dense<0.000000e+00> : vector<64x128xf32>
    %66 = tpu.matmul %63, %65, %cst_72 {dimension_numbers = #tpu.dot_dimension_numbers<[1], [0], [0], [1], [0, 0, 1, 1], [], []>} : vector<64x144xf32>, vector<144x128xf32>, vector<64x128xf32> -> vector<64x128xf32>
    %c0_73 = arith.constant 0 : index
    %c0_74 = arith.constant 0 : index
    %67 = vector.load %arg11[%c0_73, %c0_74] : memref<1x128xf32, #tpu.memory_space<vmem>>, vector<1x128xf32>
    %68 = vector.broadcast %67 : vector<1x128xf32> to vector<64x128xf32>
    %69 = arith.addf %66, %68 : vector<64x128xf32>
    %c0_75 = arith.constant 0 : index
    %c1_76 = arith.constant 1 : index
    %c0_77 = arith.constant 0 : index
    %70 = vector.load %arg14[%c0_75, %c1_76, %c0_77] : memref<4x18x144xf32, #tpu.memory_space<vmem>>, vector<4x16x144xf32>
    %71 = vector.shape_cast %70 : vector<4x16x144xf32> to vector<64x144xf32>
    %c1_78 = arith.constant 1 : index
    %c0_79 = arith.constant 0 : index
    %c0_80 = arith.constant 0 : index
    %72 = vector.load %arg10[%c1_78, %c0_79, %c0_80] : memref<3x144x128xf32, #tpu.memory_space<vmem>>, vector<1x144x128xf32>
    %73 = vector.shape_cast %72 : vector<1x144x128xf32> to vector<144x128xf32>
    %cst_81 = arith.constant dense<0.000000e+00> : vector<64x128xf32>
    %74 = tpu.matmul %71, %73, %cst_81 {dimension_numbers = #tpu.dot_dimension_numbers<[1], [0], [0], [1], [0, 0, 1, 1], [], []>} : vector<64x144xf32>, vector<144x128xf32>, vector<64x128xf32> -> vector<64x128xf32>
    %75 = arith.addf %69, %74 : vector<64x128xf32>
    %c0_82 = arith.constant 0 : index
    %c2_83 = arith.constant 2 : index
    %c0_84 = arith.constant 0 : index
    %76 = vector.load %arg14[%c0_82, %c2_83, %c0_84] : memref<4x18x144xf32, #tpu.memory_space<vmem>>, vector<4x16x144xf32>
    %77 = vector.shape_cast %76 : vector<4x16x144xf32> to vector<64x144xf32>
    %c2_85 = arith.constant 2 : index
    %c0_86 = arith.constant 0 : index
    %c0_87 = arith.constant 0 : index
    %78 = vector.load %arg10[%c2_85, %c0_86, %c0_87] : memref<3x144x128xf32, #tpu.memory_space<vmem>>, vector<1x144x128xf32>
    %79 = vector.shape_cast %78 : vector<1x144x128xf32> to vector<144x128xf32>
    %cst_88 = arith.constant dense<0.000000e+00> : vector<64x128xf32>
    %80 = tpu.matmul %77, %79, %cst_88 {dimension_numbers = #tpu.dot_dimension_numbers<[1], [0], [0], [1], [0, 0, 1, 1], [], []>} : vector<64x144xf32>, vector<144x128xf32>, vector<64x128xf32> -> vector<64x128xf32>
    %81 = arith.addf %75, %80 : vector<64x128xf32>
    %cst_89 = arith.constant 0.000000e+00 : f32
    %82 = vector.broadcast %cst_89 : f32 to vector<64x128xf32>
    %83 = arith.maximumf %81, %82 : vector<64x128xf32>
    %c0_90 = arith.constant 0 : index
    %c0_91 = arith.constant 0 : index
    %c0_92 = arith.constant 0 : index
    %84 = vector.load %arg12[%c0_90, %c0_91, %c0_92] : memref<1x64x128xf32, #tpu.memory_space<vmem>>, vector<1x64x128xf32>
    %85 = vector.shape_cast %84 : vector<1x64x128xf32> to vector<64x128xf32>
    %86 = vector.shape_cast %83 : vector<64x128xf32> to vector<1x64x128xf32>
    tpu.vector_store %arg12[%c0_90, %c0_91, %c0_92], %86 {strides = array<i32>} : memref<1x64x128xf32, #tpu.memory_space<vmem>>, vector<1x64x128xf32>,
    return
  }
  func.func @transform_0(%arg0: i32) -> (i32, i32, i32) {
    %c0_i32 = arith.constant 0 : i32
    %c0_i32_0 = arith.constant 0 : i32
    %c0_i32_1 = arith.constant 0 : i32
    return %arg0, %c0_i32, %c0_i32_0 : i32, i32, i32
  }
  func.func @transform_1(%arg0: i32) -> (i32, i32, i32) {
    %c0_i32 = arith.constant 0 : i32
    %c0_i32_0 = arith.constant 0 : i32
    %c0_i32_1 = arith.constant 0 : i32
    return %arg0, %c0_i32, %c0_i32_0 : i32, i32, i32
  }
  func.func @transform_2(%arg0: i32) -> (i32, i32) {
    %c0_i32 = arith.constant 0 : i32
    %c0_i32_0 = arith.constant 0 : i32
    %c0_i32_1 = arith.constant 0 : i32
    return %c0_i32, %c0_i32_0 : i32, i32
  }
  func.func @transform_3(%arg0: i32) -> (i32, i32) {
    %c0_i32 = arith.constant 0 : i32
    %c0_i32_0 = arith.constant 0 : i32
    %c0_i32_1 = arith.constant 0 : i32
    return %c0_i32, %c0_i32_0 : i32, i32
  }
  func.func @transform_4(%arg0: i32) -> (i32, i32) {
    %c0_i32 = arith.constant 0 : i32
    %c0_i32_0 = arith.constant 0 : i32
    %c0_i32_1 = arith.constant 0 : i32
    return %c0_i32, %c0_i32_0 : i32, i32
  }
  func.func @transform_5(%arg0: i32) -> (i32, i32) {
    %c0_i32 = arith.constant 0 : i32
    %c0_i32_0 = arith.constant 0 : i32
    %c0_i32_1 = arith.constant 0 : i32
    return %c0_i32, %c0_i32_0 : i32, i32
  }
  func.func @transform_6(%arg0: i32) -> (i32, i32) {
    %c0_i32 = arith.constant 0 : i32
    %c0_i32_0 = arith.constant 0 : i32
    %c0_i32_1 = arith.constant 0 : i32
    return %c0_i32, %c0_i32_0 : i32, i32
  }
  func.func @transform_7(%arg0: i32) -> (i32, i32, i32) {
    %c0_i32 = arith.constant 0 : i32
    %c0_i32_0 = arith.constant 0 : i32
    %c0_i32_1 = arith.constant 0 : i32
    %c0_i32_2 = arith.constant 0 : i32
    return %c0_i32, %c0_i32_0, %c0_i32_1 : i32, i32, i32
  }
  func.func @transform_8(%arg0: i32) -> (i32, i32) {
    %c0_i32 = arith.constant 0 : i32
    %c0_i32_0 = arith.constant 0 : i32
    %c0_i32_1 = arith.constant 0 : i32
    return %c0_i32, %c0_i32_0 : i32, i32
  }
  func.func @transform_9(%arg0: i32) -> (i32, i32, i32) {
    %c0_i32 = arith.constant 0 : i32
    %c0_i32_0 = arith.constant 0 : i32
    %c0_i32_1 = arith.constant 0 : i32
    %c0_i32_2 = arith.constant 0 : i32
    return %c0_i32, %c0_i32_0, %c0_i32_1 : i32, i32, i32
  }
  func.func @transform_10(%arg0: i32) -> (i32, i32) {
    %c0_i32 = arith.constant 0 : i32
    %c0_i32_0 = arith.constant 0 : i32
    %c0_i32_1 = arith.constant 0 : i32
    return %c0_i32, %c0_i32_0 : i32, i32
  }
  func.func @transform_11(%arg0: i32) -> (i32, i32, i32) {
    %c0_i32 = arith.constant 0 : i32
    %c0_i32_0 = arith.constant 0 : i32
    %c0_i32_1 = arith.constant 0 : i32
    return %arg0, %c0_i32, %c0_i32_0 : i32, i32, i32
  }
}

</mosaic_0001>

<llo_original>
// kernel: unet_up3_sqex_forward.1
$region0: #{unet_up3_sqex_forward.1}
  #allocation0 [shape = 'u32[]', space=smem, size = 0x4, offset = 0x4, fixed_abs, tag = 'smem constant byte address 0x4 - core index']
  #allocation1 [shape = 'u32[144,128]{1,0:T(1,128)}', space=vmem, size = 0x12000, scoped, tag = 'internal scratch']
  #allocation2 [shape = 'f32[4,18,432]{2,1,0:T(8,128)}', space=vmem, size = 0x30000, scoped, tag = 'scratch operand']
  #allocation3 [shape = 'f32[4,18,144]{2,1,0:T(8,128)}', space=vmem, size = 0x18000, scoped, tag = 'scratch operand']
  %s0 = inlined_call_operand.vmem [shape: f32[2,64,128], index: 0, kind: input, shape index: {}]
  %s1 = inlined_call_operand.vmem [shape: f32[2,32,128], index: 1, kind: input, shape index: {}]
  %s2 = inlined_call_operand.vmem [shape: f32[64,32], index: 2, kind: input, shape index: {}]
  %s3 = inlined_call_operand.vmem [shape: f32[128,432], index: 3, kind: input, shape index: {}]
  %s4 = inlined_call_operand.vmem [shape: f32[128,432], index: 4, kind: input, shape index: {}]
  %s5 = inlined_call_operand.vmem [shape: f32[432,4], index: 5, kind: input, shape index: {}]
  %s6 = inlined_call_operand.vmem [shape: f32[4,432], index: 6, kind: input, shape index: {}]
  %s7 = inlined_call_operand.vmem [shape: f32[3,432,144], index: 7, kind: input, shape index: {}]
  %s8 = inlined_call_operand.vmem [shape: f32[1,144], index: 8, kind: input, shape index: {}]
  %s9 = inlined_call_operand.vmem [shape: f32[3,144,128], index: 9, kind: input, shape index: {}]
  %s10 = inlined_call_operand.vmem [shape: f32[1,128], index: 10, kind: input, shape index: {}]
  %s11 = inlined_call_operand.vmem [shape: f32[2,64,128], index: 11, kind: output, shape index: {}]
  %s12 = sld [smem:[#allocation0]]
  $region77: #{unet_up3_sqex_forward.1} parent=0
    _
  %s14 = ssub.s32 1, %s12
  %s15 = scalar_select 0, %s14, %s12
  loop: start=0, step=1, limit=4
  $region2: #{unet_up3_sqex_forward.1} parent=0 // loop_pre_header
    _
  $region3: #{unet_up3_sqex_forward.1} parent=0 // loop_header
    %s17 = sphi 0, %s21
    %p18 = scmp.ge.s32.totalorder %s17, 4
    %s27 = sphi 0, %s29
    %s30 = sphi 0, %s27
    %s31 = sphi 0, %s30
    %s47 = sphi 0, %s31
    %s53 = sphi 0, %s55
    %s56 = sphi 0, %s53
    %s57 = sphi 0, %s56
    %s73 = sphi 0, %s57
    %s77 = sphi 0, %s77
    %s79 = sphi 0, %s77
    %s80 = sphi 0, %s79
    %s94 = sphi 0, %s80
    %s98 = sphi 0, %s98
    %s100 = sphi 0, %s98
    %s101 = sphi 0, %s100
    %s115 = sphi 0, %s101
    %s119 = sphi 0, %s119
    %s121 = sphi 0, %s119
    %s122 = sphi 0, %s121
    %s136 = sphi 0, %s122
    %s140 = sphi 0, %s140
    %s142 = sphi 0, %s140
    %s143 = sphi 0, %s142
    %s157 = sphi 0, %s143
    %s161 = sphi 0, %s161
    %s163 = sphi 0, %s161
    %s164 = sphi 0, %s163
    %s178 = sphi 0, %s164
    %s182 = sphi 0, %s182
    %s184 = sphi 0, %s182
    %s185 = sphi 0, %s184
    %s199 = sphi 0, %s185
    %s203 = sphi 0, %s203
    %s205 = sphi 0, %s203
    %s206 = sphi 0, %s205
    %s220 = sphi 0, %s206
    %s224 = sphi 0, %s224
    %s226 = sphi 0, %s224
    %s227 = sphi 0, %s226
    %s241 = sphi 0, %s227
    %s245 = sphi 0, %s245
    %s247 = sphi 0, %s245
    %s248 = sphi 0, %s247
    %s262 = sphi 0, %s248
    %s268 = sphi 0, %s270
    %s271 = sphi 0, %s268
    %s272 = sphi 0, %s271
    %s288 = sphi 0, %s272
  $region4: #{unet_up3_sqex_forward.1} parent=0 // loop_header_branch
    %20 = sbr.rel (%p18) target = $region8
  $region5: #{unet_up3_sqex_forward.1} parent=0 // loop_body
    %s22 = ssub.s32 %s17, 1
    %s23 = ssub.s32 %s17, 2
    %s24 = sadd.s32 %s17, 1
    %s25 = ssub.s32 %s17, %s24
    %p26 = scmp.eq.s32.totalorder %s25, 0
    %s28 = sadd.s32 %s27, 1
    %s29 = scalar_select %p26, %s27, %s28
    %p32 = pneg %p26
    %p33 = scmp.eq.s32.totalorder %s17, 1
    %p34 = por %p32, %p33
    %p35 = scmp.ne.s32.totalorder %s27, %s30
    %p36 = scmp.eq.s32.totalorder %s17, 0
    %p37 = por %p35, %p36
    %p38 = scmp.ne.s32.totalorder %s27, %s30
    %p39 = scmp.eq.s32.totalorder %s22, 1
    %p40 = por %p38, %p39
    %p41 = scmp.ne.s32.totalorder %s30, %s31
    %p42 = scmp.eq.s32.totalorder %s22, 0
    %p43 = por %p41, %p42
    %p44 = scmp.ne.s32.totalorder %s30, %s31
    %p45 = scmp.eq.s32.totalorder %s23, 1
    %p46 = por %p44, %p45
    %p48 = scmp.ne.s32.totalorder %s31, %s47
    %p49 = scmp.eq.s32.totalorder %s23, 0
    %p50 = por %p48, %p49
    %s51 = ssub.s32 %s17, %s24
    %p52 = scmp.eq.s32.totalorder %s51, 0
    %s54 = sadd.s32 %s53, 1
    %s55 = scalar_select %p52, %s53, %s54
    %p58 = pneg %p52
    %p59 = scmp.eq.s32.totalorder %s17, 1
    %p60 = por %p58, %p59
    %p61 = scmp.ne.s32.totalorder %s53, %s56
    %p62 = scmp.eq.s32.totalorder %s17, 0
    %p63 = por %p61, %p62
    %p64 = scmp.ne.s32.totalorder %s53, %s56
    %p65 = scmp.eq.s32.totalorder %s22, 1
    %p66 = por %p64, %p65
    %p67 = scmp.ne.s32.totalorder %s56, %s57
    %p68 = scmp.eq.s32.totalorder %s22, 0
    %p69 = por %p67, %p68
    %p70 = scmp.ne.s32.totalorder %s56, %s57
    %p71 = scmp.eq.s32.totalorder %s23, 1
    %p72 = por %p70, %p71
    %p74 = scmp.ne.s32.totalorder %s57, %s73
    %p75 = scmp.eq.s32.totalorder %s23, 0
    %p76 = por %p74, %p75
    %s78 = sadd.s32 %s77, 1
    %p81 = scmp.eq.s32.totalorder %s17, 1
    %p82 = scmp.ne.s32.totalorder %s77, %s79
    %p83 = scmp.eq.s32.totalorder %s17, 0
    %p84 = por %p82, %p83
    %p85 = scmp.ne.s32.totalorder %s77, %s79
    %p86 = scmp.eq.s32.totalorder %s22, 1
    %p87 = por %p85, %p86
    %p88 = scmp.ne.s32.totalorder %s79, %s80
    %p89 = scmp.eq.s32.totalorder %s22, 0
    %p90 = por %p88, %p89
    %p91 = scmp.ne.s32.totalorder %s79, %s80
    %p92 = scmp.eq.s32.totalorder %s23, 1
    %p93 = por %p91, %p92
    %p95 = scmp.ne.s32.totalorder %s80, %s94
    %p96 = scmp.eq.s32.totalorder %s23, 0
    %p97 = por %p95, %p96
    %s99 = sadd.s32 %s98, 1
    %p102 = scmp.eq.s32.totalorder %s17, 1
    %p103 = scmp.ne.s32.totalorder %s98, %s100
    %p104 = scmp.eq.s32.totalorder %s17, 0
    %p105 = por %p103, %p104
    %p106 = scmp.ne.s32.totalorder %s98, %s100
    %p107 = scmp.eq.s32.totalorder %s22, 1
    %p108 = por %p106, %p107
    %p109 = scmp.ne.s32.totalorder %s100, %s101
    %p110 = scmp.eq.s32.totalorder %s22, 0
    %p111 = por %p109, %p110
    %p112 = scmp.ne.s32.totalorder %s100, %s101
    %p113 = scmp.eq.s32.totalorder %s23, 1
    %p114 = por %p112, %p113
    %p116 = scmp.ne.s32.totalorder %s101, %s115
    %p117 = scmp.eq.s32.totalorder %s23, 0
    %p118 = por %p116, %p117
    %s120 = sadd.s32 %s119, 1
    %p123 = scmp.eq.s32.totalorder %s17, 1
    %p124 = scmp.ne.s32.totalorder %s119, %s121
    %p125 = scmp.eq.s32.totalorder %s17, 0
    %p126 = por %p124, %p125
    %p127 = scmp.ne.s32.totalorder %s119, %s121
    %p128 = scmp.eq.s32.totalorder %s22, 1
    %p129 = por %p127, %p128
    %p130 = scmp.ne.s32.totalorder %s121, %s122
    %p131 = scmp.eq.s32.totalorder %s22, 0
    %p132 = por %p130, %p131
    %p133 = scmp.ne.s32.totalorder %s121, %s122
    %p134 = scmp.eq.s32.totalorder %s23, 1
    %p135 = por %p133, %p134
    %p137 = scmp.ne.s32.totalorder %s122, %s136
    %p138 = scmp.eq.s32.totalorder %s23, 0
    %p139 = por %p137, %p138
    %s141 = sadd.s32 %s140, 1
    %p144 = scmp.eq.s32.totalorder %s17, 1
    %p145 = scmp.ne.s32.totalorder %s140, %s142
    %p146 = scmp.eq.s32.totalorder %s17, 0
    %p147 = por %p145, %p146
    %p148 = scmp.ne.s32.totalorder %s140, %s142
    %p149 = scmp.eq.s32.totalorder %s22, 1
    %p150 = por %p148, %p149
    %p151 = scmp.ne.s32.totalorder %s142, %s143
    %p152 = scmp.eq.s32.totalorder %s22, 0
    %p153 = por %p151, %p152
    %p154 = scmp.ne.s32.totalorder %s142, %s143
    %p155 = scmp.eq.s32.totalorder %s23, 1
    %p156 = por %p154, %p155
    %p158 = scmp.ne.s32.totalorder %s143, %s157
    %p159 = scmp.eq.s32.totalorder %s23, 0
    %p160 = por %p158, %p159
    %s162 = sadd.s32 %s161, 1
    %p165 = scmp.eq.s32.totalorder %s17, 1
    %p166 = scmp.ne.s32.totalorder %s161, %s163
    %p167 = scmp.eq.s32.totalorder %s17, 0
    %p168 = por %p166, %p167
    %p169 = scmp.ne.s32.totalorder %s161, %s163
    %p170 = scmp.eq.s32.totalorder %s22, 1
    %p171 = por %p169, %p170
    %p172 = scmp.ne.s32.totalorder %s163, %s164
    %p173 = scmp.eq.s32.totalorder %s22, 0
    %p174 = por %p172, %p173
    %p175 = scmp.ne.s32.totalorder %s163, %s164
    %p176 = scmp.eq.s32.totalorder %s23, 1
    %p177 = por %p175, %p176
    %p179 = scmp.ne.s32.totalorder %s164, %s178
    %p180 = scmp.eq.s32.totalorder %s23, 0
    %p181 = por %p179, %p180
    %s183 = sadd.s32 %s182, 1
    %p186 = scmp.eq.s32.totalorder %s17, 1
    %p187 = scmp.ne.s32.totalorder %s182, %s184
    %p188 = scmp.eq.s32.totalorder %s17, 0
    %p189 = por %p187, %p188
    %p190 = scmp.ne.s32.totalorder %s182, %s184
    %p191 = scmp.eq.s32.totalorder %s22, 1
    %p192 = por %p190, %p191
    %p193 = scmp.ne.s32.totalorder %s184, %s185
    %p194 = scmp.eq.s32.totalorder %s22, 0
    %p195 = por %p193, %p194
    %p196 = scmp.ne.s32.totalorder %s184, %s185
    %p197 = scmp.eq.s32.totalorder %s23, 1
    %p198 = por %p196, %p197
    %p200 = scmp.ne.s32.totalorder %s185, %s199
    %p201 = scmp.eq.s32.totalorder %s23, 0
    %p202 = por %p200, %p201
    %s204 = sadd.s32 %s203, 1
    %p207 = scmp.eq.s32.totalorder %s17, 1
    %p208 = scmp.ne.s32.totalorder %s203, %s205
    %p209 = scmp.eq.s32.totalorder %s17, 0
    %p210 = por %p208, %p209
    %p211 = scmp.ne.s32.totalorder %s203, %s205
    %p212 = scmp.eq.s32.totalorder %s22, 1
    %p213 = por %p211, %p212
    %p214 = scmp.ne.s32.totalorder %s205, %s206
    %p215 = scmp.eq.s32.totalorder %s22, 0
    %p216 = por %p214, %p215
    %p217 = scmp.ne.s32.totalorder %s205, %s206
    %p218 = scmp.eq.s32.totalorder %s23, 1
    %p219 = por %p217, %p218
    %p221 = scmp.ne.s32.totalorder %s206, %s220
    %p222 = scmp.eq.s32.totalorder %s23, 0
    %p223 = por %p221, %p222
    %s225 = sadd.s32 %s224, 1
    %p228 = scmp.eq.s32.totalorder %s17, 1
    %p229 = scmp.ne.s32.totalorder %s224, %s226
    %p230 = scmp.eq.s32.totalorder %s17, 0
    %p231 = por %p229, %p230
    %p232 = scmp.ne.s32.totalorder %s224, %s226
    %p233 = scmp.eq.s32.totalorder %s22, 1
    %p234 = por %p232, %p233
    %p235 = scmp.ne.s32.totalorder %s226, %s227
    %p236 = scmp.eq.s32.totalorder %s22, 0
    %p237 = por %p235, %p236
    %p238 = scmp.ne.s32.totalorder %s226, %s227
    %p239 = scmp.eq.s32.totalorder %s23, 1
    %p240 = por %p238, %p239
    %p242 = scmp.ne.s32.totalorder %s227, %s241
    %p243 = scmp.eq.s32.totalorder %s23, 0
    %p244 = por %p242, %p243
    %s246 = sadd.s32 %s245, 1
    %p249 = scmp.eq.s32.totalorder %s17, 1
    %p250 = scmp.ne.s32.totalorder %s245, %s247
    %p251 = scmp.eq.s32.totalorder %s17, 0
    %p252 = por %p250, %p251
    %p253 = scmp.ne.s32.totalorder %s245, %s247
    %p254 = scmp.eq.s32.totalorder %s22, 1
    %p255 = por %p253, %p254
    %p256 = scmp.ne.s32.totalorder %s247, %s248
    %p257 = scmp.eq.s32.totalorder %s22, 0
    %p258 = por %p256, %p257
    %p259 = scmp.ne.s32.totalorder %s247, %s248
    %p260 = scmp.eq.s32.totalorder %s23, 1
    %p261 = por %p259, %p260
    %p263 = scmp.ne.s32.totalorder %s248, %s262
    %p264 = scmp.eq.s32.totalorder %s23, 0
    %p265 = por %p263, %p264
    %s266 = ssub.s32 %s17, %s24
    %p267 = scmp.eq.s32.totalorder %s266, 0
    %s269 = sadd.s32 %s268, 1
    %s270 = scalar_select %p267, %s268, %s269
    %p273 = pneg %p267
    %p274 = scmp.eq.s32.totalorder %s17, 1
    %p275 = por %p273, %p274
    %p276 = scmp.ne.s32.totalorder %s268, %s271
    %p277 = scmp.eq.s32.totalorder %s17, 0
    %p278 = por %p276, %p277
    %p279 = scmp.ne.s32.totalorder %s268, %s271
    %p280 = scmp.eq.s32.totalorder %s22, 1
    %p281 = por %p279, %p280
    %p282 = scmp.ne.s32.totalorder %s271, %s272
    %p283 = scmp.eq.s32.totalorder %s22, 0
    %p284 = por %p282, %p283
    %p285 = scmp.ne.s32.totalorder %s271, %s272
    %p286 = scmp.eq.s32.totalorder %s23, 1
    %p287 = por %p285, %p286
    %p289 = scmp.ne.s32.totalorder %s272, %s288
    %p290 = scmp.eq.s32.totalorder %s23, 0
    %p291 = por %p289, %p290
    %p292 = scmp.le.s32.totalorder 1, %s17
    %p293 = scmp.lt.s32.totalorder %s17, 3
    %p294 = pnand %p292, %p293
    %p295 = pneg %p294
    // Predicated region
    $region9: #{unet_up3_sqex_forward.1} parent=5 // pred_check
      _
    $region10: #{unet_up3_sqex_forward.1} parent=5 // pred_check_branch
      %297 = sbr.rel (%p294) target = $region12
    $region11: #{unet_up3_sqex_forward.1} parent=5 // pred_region
      %s298 = ssub.s32 %s17, 1
      // Predicated region
      $region13: #{unet_up3_sqex_forward.1} parent=11 // pred_check
        %p299 = pneg %p90
      $region14: #{unet_up3_sqex_forward.1} parent=11 // pred_check_branch
        %301 = sbr.rel (%p299) target = $region16
      $region15: #{unet_up3_sqex_forward.1} parent=11 // pred_region
        _
      $region16: #{unet_up3_sqex_forward.1} parent=11 // pred_fallthru
        _
      // Predicated region
      $region17: #{unet_up3_sqex_forward.1} parent=11 // pred_check
        %p302 = pneg %p111
      $region18: #{unet_up3_sqex_forward.1} parent=11 // pred_check_branch
        %304 = sbr.rel (%p302) target = $region20
      $region19: #{unet_up3_sqex_forward.1} parent=11 // pred_region
        _
      $region20: #{unet_up3_sqex_forward.1} parent=11 // pred_fallthru
        _
      // Predicated region
      $region21: #{unet_up3_sqex_forward.1} parent=11 // pred_check
        %p305 = pneg %p132
      $region22: #{unet_up3_sqex_forward.1} parent=11 // pred_check_branch
        %307 = sbr.rel (%p305) target = $region24
      $region23: #{unet_up3_sqex_forward.1} parent=11 // pred_region
        _
      $region24: #{unet_up3_sqex_forward.1} parent=11 // pred_fallthru
        _
      // Predicated region
      $region25: #{unet_up3_sqex_forward.1} parent=11 // pred_check
        %p308 = pneg %p153
      $region26: #{unet_up3_sqex_forward.1} parent=11 // pred_check_branch
        %310 = sbr.rel (%p308) target = $region28
      $region27: #{unet_up3_sqex_forward.1} parent=11 // pred_region
        _
      $region28: #{unet_up3_sqex_forward.1} parent=11 // pred_fallthru
        _
      // Predicated region
      $region29: #{unet_up3_sqex_forward.1} parent=11 // pred_check
        %p311 = pneg %p174
      $region30: #{unet_up3_sqex_forward.1} parent=11 // pred_check_branch
        %313 = sbr.rel (%p311) target = $region32
      $region31: #{unet_up3_sqex_forward.1} parent=11 // pred_region
        _
      $region32: #{unet_up3_sqex_forward.1} parent=11 // pred_fallthru
        _
      // Predicated region
      $region33: #{unet_up3_sqex_forward.1} parent=11 // pred_check
        %p314 = pneg %p195
      $region34: #{unet_up3_sqex_forward.1} parent=11 // pred_check_branch
        %316 = sbr.rel (%p314) target = $region36
      $region35: #{unet_up3_sqex_forward.1} parent=11 // pred_region
        _
      $region36: #{unet_up3_sqex_forward.1} parent=11 // pred_fallthru
        _
      // Predicated region
      $region37: #{unet_up3_sqex_forward.1} parent=11 // pred_check
        %p317 = pneg %p216
      $region38: #{unet_up3_sqex_forward.1} parent=11 // pred_check_branch
        %319 = sbr.rel (%p317) target = $region40
      $region39: #{unet_up3_sqex_forward.1} parent=11 // pred_region
        _
      $region40: #{unet_up3_sqex_forward.1} parent=11 // pred_fallthru
        _
      // Predicated region
      $region41: #{unet_up3_sqex_forward.1} parent=11 // pred_check
        %p320 = pneg %p237
      $region42: #{unet_up3_sqex_forward.1} parent=11 // pred_check_branch
        %322 = sbr.rel (%p320) target = $region44
      $region43: #{unet_up3_sqex_forward.1} parent=11 // pred_region
        _
      $region44: #{unet_up3_sqex_forward.1} parent=11 // pred_fallthru
        _
      // Predicated region
      $region45: #{unet_up3_sqex_forward.1} parent=11 // pred_check
        %p323 = pneg %p258
      $region46: #{unet_up3_sqex_forward.1} parent=11 // pred_check_branch
        %325 = sbr.rel (%p323) target = $region48
      $region47: #{unet_up3_sqex_forward.1} parent=11 // pred_region
        _
      $region48: #{unet_up3_sqex_forward.1} parent=11 // pred_fallthru
        _
    $region12: #{unet_up3_sqex_forward.1} parent=5 // pred_fallthru
      _
    %p326 = scmp.lt.s32.totalorder %s17, 2
    // Predicated region
    $region49: #{unet_up3_sqex_forward.1} parent=5 // pred_check
      %p327 = pneg %p326
    $region50: #{unet_up3_sqex_forward.1} parent=5 // pred_check_branch
      %329 = sbr.rel (%p327) target = $region52
    $region51: #{unet_up3_sqex_forward.1} parent=5 // pred_region
      // Predicated region
      $region53: #{unet_up3_sqex_forward.1} parent=51 // pred_check
        %p330 = pneg %p37
      $region54: #{unet_up3_sqex_forward.1} parent=51 // pred_check_branch
        %332 = sbr.rel (%p330) target = $region56
      $region55: #{unet_up3_sqex_forward.1} parent=51 // pred_region
        %p333 = scmp.lt.s32.totalorder %s17, 1
        %s334 = scalar_select %p333, %s17, 1
        %s335 = smul.addr %s334, 8
        %s336 = smul.addr %s335, 8
        %s337 = scalar_lea.vmem %s0, %s336
      $region56: #{unet_up3_sqex_forward.1} parent=51 // pred_fallthru
        _
      // Predicated region
      $region57: #{unet_up3_sqex_forward.1} parent=51 // pred_check
        %p338 = pneg %p63
      $region58: #{unet_up3_sqex_forward.1} parent=51 // pred_check_branch
        %340 = sbr.rel (%p338) target = $region60
      $region59: #{unet_up3_sqex_forward.1} parent=51 // pred_region
        %p341 = scmp.lt.s32.totalorder %s17, 1
        %s342 = scalar_select %p341, %s17, 1
        %s343 = smul.addr %s342, 4
        %s344 = smul.addr %s343, 8
        %s345 = scalar_lea.vmem %s1, %s344
      $region60: #{unet_up3_sqex_forward.1} parent=51 // pred_fallthru
        _
    $region52: #{unet_up3_sqex_forward.1} parent=5 // pred_fallthru
      _
    %p346 = scmp.le.s32.totalorder 1, %s17
    %p347 = scmp.lt.s32.totalorder %s17, 3
    %p348 = pnand %p346, %p347
    %p349 = pneg %p348
    // Predicated region
    $region61: #{unet_up3_sqex_forward.1} parent=5 // pred_check
      _
    $region62: #{unet_up3_sqex_forward.1} parent=5 // pred_check_branch
      %351 = sbr.rel (%p348) target = $region64
    $region63: #{unet_up3_sqex_forward.1} parent=5 // pred_region
      %s352 = ssub.s32 %s17, 1
      %p353 = scmp.lt.s32.totalorder %s22, 1
      %s354 = scalar_select %p353, %s22, 1
      %s355 = smul.addr %s354, 8
      %s356 = smul.addr %s355, 8
      %s357 = scalar_lea.vmem %s0, %s356
      %p358 = pneg %p43
      %p359 = pneg %p40
      %p360 = scmp.lt.s32.totalorder %s22, 1
      %s361 = scalar_select %p360, %s22, 1
      %s362 = smul.addr %s361, 4
      %s363 = smul.addr %s362, 8
      %s364 = scalar_lea.vmem %s1, %s363
      %p365 = pneg %p69
      %p366 = pneg %p66
      %p367 = pneg %p90
      %p368 = pneg %p87
      %p369 = pneg %p111
      %p370 = pneg %p108
      %p371 = pneg %p132
      %p372 = pneg %p129
      %p373 = pneg %p153
      %p374 = pneg %p150
      %p375 = pneg %p174
      %p376 = pneg %p171
      %p377 = pneg %p195
      %p378 = pneg %p192
      %p379 = pneg %p216
      %p380 = pneg %p213
      %p381 = pneg %p237
      %p382 = pneg %p234
      %p383 = pneg %p258
      %p384 = pneg %p255
      %p385 = pneg %p284
      %p386 = pneg %p281
      %p387 = scmp.lt.s32.totalorder %s22, 1
      %s388 = scalar_select %p387, %s22, 1
      %s389 = smul.addr %s388, 8
      %s390 = smul.addr %s389, 8
      %s391 = scalar_lea.vmem %s11, %s390
      %p392 = scmp.lt.s32.totalorder %s22, 1
      %s393 = scalar_select %p392, %s22, 1
      %s394 = smul.addr %s393, 8
      %s395 = smul.addr %s394, 8
      %s396 = scalar_lea.vmem %s0, %s395
      %p397 = scmp.lt.s32.totalorder %s22, 1
      %s398 = scalar_select %p397, %s22, 1
      %s399 = smul.addr %s398, 4
      %s400 = smul.addr %s399, 8
      %s401 = scalar_lea.vmem %s1, %s400
      %p402 = scmp.lt.s32.totalorder %s22, 1
      %s403 = scalar_select %p402, %s22, 1
      %s404 = smul.addr %s403, 8
      %s405 = smul.addr %s404, 8
      %s406 = scalar_lea.vmem %s11, %s405
      %v407 = vld [vmem:[%s2] sm:$0xff]
      %v408 = vld [vmem:[%s2 + $0x8] sm:$0xff]
      %v409 = vld [vmem:[%s2 + $0x10] sm:$0xff]
      %v410 = vld [vmem:[%s2 + $0x18] sm:$0xff]
      %v411 = vld [vmem:[%s2 + $0x20] sm:$0xff]
      %v412 = vld [vmem:[%s2 + $0x28] sm:$0xff]
      %v413 = vld [vmem:[%s2 + $0x30] sm:$0xff]
      %v414 = vld [vmem:[%s2 + $0x38] sm:$0xff]
      %v415 = vld [vmem:[%s401] sm:$0xff]
      %v416 = vld [vmem:[%s401 + $0x8] sm:$0xff]
      %v417 = vld [vmem:[%s401 + $0x10] sm:$0xff]
      %v418 = vld [vmem:[%s401 + $0x18] sm:$0xff]
      %vm419 = vcmask 261120
      %v421 = vsel %vm419, %v407, 0
      %v424 = vsel %vm419, %v408, 0
      %v427 = vsel %vm419, %v409, 0
      %v430 = vsel %vm419, %v410, 0
      %v433 = vsel %vm419, %v411, 0
      %v436 = vsel %vm419, %v412, 0
      %v439 = vsel %vm419, %v413, 0
      %v442 = vsel %vm419, %v414, 0
      %444 = vmatprep.subr.mxu0 0.0
      %445 = vmatpush1.msra.mxu0 %v415
      %446 = vmatprep.subr.mxu0 0.0
      %447 = vmatpush1.msra.mxu0 %v416
      %448 = vmatprep.subr.mxu0 0.0
      %449 = vmatpush1.msra.mxu0 %v417
      %450 = vmatprep.subr.mxu0 0.0
      %451 = vmatpush1.msra.mxu0 %v418
      %452 = vmatprep.subr.mxu0 0.0
      %453 = vmatpush1.msra.mxu0 0.0
      %454 = vmatprep.subr.mxu0 0.0
      %455 = vmatpush1.msra.mxu0 0.0
      %456 = vmatprep.subr.mxu0 0.0
      %457 = vmatpush1.msra.mxu0 0.0
      %458 = vmatprep.subr.mxu0 0.0
      %459 = vmatpush1.msra.mxu0 0.0
      %460 = vmatprep.subr.mxu0 0.0
      %461 = vmatpush1.msra.mxu0 0.0
      %462 = vmatprep.subr.mxu0 0.0
      %463 = vmatpush1.msra.mxu0 0.0
      %464 = vmatprep.subr.mxu0 0.0
      %465 = vmatpush1.msra.mxu0 0.0
      %466 = vmatprep.subr.mxu0 0.0
      %467 = vmatpush1.msra.mxu0 0.0
      %468 = vmatprep.subr.mxu0 0.0
      %469 = vmatpush1.msra.mxu0 0.0
      %470 = vmatprep.subr.mxu0 0.0
      %471 = vmatpush1.msra.mxu0 0.0
      %472 = vmatprep.subr.mxu0 0.0
      %473 = vmatpush1.msra.mxu0 0.0
      %474 = vmatprep.subr.mxu0 0.0
      %475 = vmatpush1.msra.mxu0 0.0
      %476 = vmatprep.subr.mxu0 0.0
      %477 = vmatpush1.msra.mxu0 0.0
      %478 = vmatprep.subr.mxu0 0.0
      %479 = vmatpush1.msra.mxu0 0.0
      %480 = vmatprep.subr.mxu0 0.0
      %481 = vmatpush1.msra.mxu0 0.0
      %482 = vmatprep.subr.mxu0 0.0
      %483 = vmatpush1.msra.mxu0 0.0
      %484 = vmatprep.subr.mxu0 0.0
      %485 = vmatpush1.msra.mxu0 0.0
      %486 = vmatprep.subr.mxu0 0.0
      %487 = vmatpush1.msra.mxu0 0.0
      %488 = vmatprep.subr.mxu0 0.0
      %489 = vmatpush1.msra.mxu0 0.0
      %490 = vmatprep.subr.mxu0 0.0
      %491 = vmatpush1.msra.mxu0 0.0
      %492 = vmatprep.subr.mxu0 0.0
      %493 = vmatpush1.msra.mxu0 0.0
      %494 = vmatprep.subr.mxu0 0.0
      %495 = vmatpush1.msra.mxu0 0.0
      %496 = vmatprep.subr.mxu0 0.0
      %497 = vmatpush1.msra.mxu0 0.0
      %498 = vmatprep.subr.mxu0 0.0
      %499 = vmatpush1.msra.mxu0 0.0
      %500 = vmatprep.subr.mxu0 0.0
      %501 = vmatpush1.msra.mxu0 0.0
      %502 = vmatprep.subr.mxu0 0.0
      %503 = vmatpush1.msra.mxu0 0.0
      %504 = vmatprep.subr.mxu0 0.0
      %505 = vmatpush1.msra.mxu0 0.0
      %506 = vmatprep.subr.mxu0 0.0
      %507 = vmatpush1.msra.mxu0 0.0
      %508 = vmatprep.mubr.f32.mxu0 0.0
      %509 = vmatmul.mubr.f32.gmra.mrb[0].mxu0 %v421
      %v510 = vpop.f32.mrb[0].mxu0
      %v511 = vadd.f32 0.0, %v510
      %v512 = vpop.f32.mrb[0].mxu0
      %513 = vmatprep.mubr.f32.mxu0 0.0
      %514 = vmatmul.mubr.f32.gmra.mrb[0].mxu0 %v424
      %v515 = vpop.f32.mrb[0].mxu0
      %v516 = vadd.f32 0.0, %v515
      %v517 = vpop.f32.mrb[0].mxu0
      %518 = vmatprep.mubr.f32.mxu0 0.0
      %519 = vmatmul.mubr.f32.gmra.mrb[0].mxu0 %v427
      %v520 = vpop.f32.mrb[0].mxu0
      %v521 = vadd.f32 0.0, %v520
      %v522 = vpop.f32.mrb[0].mxu0
      %523 = vmatprep.mubr.f32.mxu0 0.0
      %524 = vmatmul.mubr.f32.gmra.mrb[0].mxu0 %v430
      %v525 = vpop.f32.mrb[0].mxu0
      %v526 = vadd.f32 0.0, %v525
      %v527 = vpop.f32.mrb[0].mxu0
      %528 = vmatprep.mubr.f32.mxu0 0.0
      %529 = vmatmul.mubr.f32.gmra.mrb[0].mxu0 %v433
      %v530 = vpop.f32.mrb[0].mxu0
      %v531 = vadd.f32 0.0, %v530
      %v532 = vpop.f32.mrb[0].mxu0
      %533 = vmatprep.mubr.f32.mxu0 0.0
      %534 = vmatmul.mubr.f32.gmra.mrb[0].mxu0 %v436
      %v535 = vpop.f32.mrb[0].mxu0
      %v536 = vadd.f32 0.0, %v535
      %v537 = vpop.f32.mrb[0].mxu0
      %538 = vmatprep.mubr.f32.mxu0 0.0
      %539 = vmatmul.mubr.f32.gmra.mrb[0].mxu0 %v439
      %v540 = vpop.f32.mrb[0].mxu0
      %v541 = vadd.f32 0.0, %v540
      %v542 = vpop.f32.mrb[0].mxu0
      %543 = vmatprep.mubr.f32.mxu0 0.0
      %544 = vmatmul.mubr.f32.gmra.mrb[0].mxu0 %v442
      %v545 = vpop.f32.mrb[0].mxu0
      %v546 = vadd.f32 0.0, %v545
      %v547 = vpop.f32.mrb[0].mxu0
      %548 = vdwg.mxu0
      %v549 = vld [vmem:[%s396] sm:$0xff]
      %v550 = vld [vmem:[%s396 + $0x8] sm:$0xff]
      %v551 = vld [vmem:[%s396 + $0x10] sm:$0xff]
      %v552 = vld [vmem:[%s396 + $0x18] sm:$0xff]
      %v553 = vld [vmem:[%s396 + $0x20] sm:$0xff]
      %v554 = vld [vmem:[%s396 + $0x28] sm:$0xff]
      %v555 = vld [vmem:[%s396 + $0x30] sm:$0xff]
      %v556 = vld [vmem:[%s396 + $0x38] sm:$0xff]
      %v557 = vld [vmem:[%s4] sm:$0xff]
      %v558 = vld [vmem:[%s4 + $0x8] sm:$0xff]
      %v559 = vld [vmem:[%s4 + $0x10] sm:$0xff]
      %v560 = vld [vmem:[%s4 + $0x18] sm:$0xff]
      %v561 = vld [vmem:[%s4 + $0x20] sm:$0xff]
      %v562 = vld [vmem:[%s4 + $0x28] sm:$0xff]
      %v563 = vld [vmem:[%s4 + $0x30] sm:$0xff]
      %v564 = vld [vmem:[%s4 + $0x38] sm:$0xff]
      %v565 = vld [vmem:[%s4 + $0x40] sm:$0xff]
      %v566 = vld [vmem:[%s4 + $0x48] sm:$0xff]
      %v567 = vld [vmem:[%s4 + $0x50] sm:$0xff]
      %v568 = vld [vmem:[%s4 + $0x58] sm:$0xff]
      %v569 = vld [vmem:[%s4 + $0x60] sm:$0xff]
      %v570 = vld [vmem:[%s4 + $0x68] sm:$0xff]
      %v571 = vld [vmem:[%s4 + $0x70] sm:$0xff]
      %v572 = vld [vmem:[%s4 + $0x78] sm:$0xff]
      %v573 = vld [vmem:[%s4 + $0x80] sm:$0xff]
      %v574 = vld [vmem:[%s4 + $0x88] sm:$0xff]
      %v575 = vld [vmem:[%s4 + $0x90] sm:$0xff]
      %v576 = vld [vmem:[%s4 + $0x98] sm:$0xff]
      %v577 = vld [vmem:[%s4 + $0xa0] sm:$0xff]
      %v578 = vld [vmem:[%s4 + $0xa8] sm:$0xff]
      %v579 = vld [vmem:[%s4 + $0xb0] sm:$0xff]
      %v580 = vld [vmem:[%s4 + $0xb8] sm:$0xff]
      %v581 = vld [vmem:[%s4 + $0xc0] sm:$0xff]
      %v582 = vld [vmem:[%s4 + $0xc8] sm:$0xff]
      %v583 = vld [vmem:[%s4 + $0xd0] sm:$0xff]
      %v584 = vld [vmem:[%s4 + $0xd8] sm:$0xff]
      %v585 = vld [vmem:[%s4 + $0xe0] sm:$0xff]
      %v586 = vld [vmem:[%s4 + $0xe8] sm:$0xff]
      %v587 = vld [vmem:[%s4 + $0xf0] sm:$0xff]
      %v588 = vld [vmem:[%s4 + $0xf8] sm:$0xff]
      %v589 = vld [vmem:[%s4 + $0x100] sm:$0xff]
      %v590 = vld [vmem:[%s4 + $0x108] sm:$0xff]
      %v591 = vld [vmem:[%s4 + $0x110] sm:$0xff]
      %v592 = vld [vmem:[%s4 + $0x118] sm:$0xff]
      %v593 = vld [vmem:[%s4 + $0x120] sm:$0xff]
      %v594 = vld [vmem:[%s4 + $0x128] sm:$0xff]
      %v595 = vld [vmem:[%s4 + $0x130] sm:$0xff]
      %v596 = vld [vmem:[%s4 + $0x138] sm:$0xff]
      %v597 = vld [vmem:[%s4 + $0x140] sm:$0xff]
      %v598 = vld [vmem:[%s4 + $0x148] sm:$0xff]
      %v599 = vld [vmem:[%s4 + $0x150] sm:$0xff]
      %v600 = vld [vmem:[%s4 + $0x158] sm:$0xff]
      %v601 = vld [vmem:[%s4 + $0x160] sm:$0xff]
      %v602 = vld [vmem:[%s4 + $0x168] sm:$0xff]
      %v603 = vld [vmem:[%s4 + $0x170] sm:$0xff]
      %v604 = vld [vmem:[%s4 + $0x178] sm:$0xff]
      %v605 = vld [vmem:[%s4 + $0x180] sm:$0xff]
      %v606 = vld [vmem:[%s4 + $0x188] sm:$0xff]
      %v607 = vld [vmem:[%s4 + $0x190] sm:$0xff]
      %v608 = vld [vmem:[%s4 + $0x198] sm:$0xff]
      %v609 = vld [vmem:[%s4 + $0x1a0] sm:$0xff]
      %v610 = vld [vmem:[%s4 + $0x1a8] sm:$0xff]
      %v611 = vld [vmem:[%s4 + $0x1b0] sm:$0xff]
      %v612 = vld [vmem:[%s4 + $0x1b8] sm:$0xff]
      %v613 = vld [vmem:[%s4 + $0x1c0] sm:$0xff]
      %v614 = vld [vmem:[%s4 + $0x1c8] sm:$0xff]
      %v615 = vld [vmem:[%s4 + $0x1d0] sm:$0xff]
      %v616 = vld [vmem:[%s4 + $0x1d8] sm:$0xff]
      %v617 = vld [vmem:[%s4 + $0x1e0] sm:$0xff]
      %v618 = vld [vmem:[%s4 + $0x1e8] sm:$0xff]
      %v619 = vld [vmem:[%s4 + $0x1f0] sm:$0xff]
      %v620 = vld [vmem:[%s4 + $0x1f8] sm:$0xff]
      %v621 = vld [vmem:[%s3] sm:$0xff]
      %v622 = vld [vmem:[%s3 + $0x8] sm:$0xff]
      %v623 = vld [vmem:[%s3 + $0x10] sm:$0xff]
      %v624 = vld [vmem:[%s3 + $0x18] sm:$0xff]
      %v625 = vld [vmem:[%s3 + $0x20] sm:$0xff]
      %v626 = vld [vmem:[%s3 + $0x28] sm:$0xff]
      %v627 = vld [vmem:[%s3 + $0x30] sm:$0xff]
      %v628 = vld [vmem:[%s3 + $0x38] sm:$0xff]
      %v629 = vld [vmem:[%s3 + $0x40] sm:$0xff]
      %v630 = vld [vmem:[%s3 + $0x48] sm:$0xff]
      %v631 = vld [vmem:[%s3 + $0x50] sm:$0xff]
      %v632 = vld [vmem:[%s3 + $0x58] sm:$0xff]
      %v633 = vld [vmem:[%s3 + $0x60] sm:$0xff]
      %v634 = vld [vmem:[%s3 + $0x68] sm:$0xff]
      %v635 = vld [vmem:[%s3 + $0x70] sm:$0xff]
      %v636 = vld [vmem:[%s3 + $0x78] sm:$0xff]
      %v637 = vld [vmem:[%s3 + $0x80] sm:$0xff]
      %v638 = vld [vmem:[%s3 + $0x88] sm:$0xff]
      %v639 = vld [vmem:[%s3 + $0x90] sm:$0xff]
      %v640 = vld [vmem:[%s3 + $0x98] sm:$0xff]
      %v641 = vld [vmem:[%s3 + $0xa0] sm:$0xff]
      %v642 = vld [vmem:[%s3 + $0xa8] sm:$0xff]
      %v643 = vld [vmem:[%s3 + $0xb0] sm:$0xff]
      %v644 = vld [vmem:[%s3 + $0xb8] sm:$0xff]
      %v645 = vld [vmem:[%s3 + $0xc0] sm:$0xff]
      %v646 = vld [vmem:[%s3 + $0xc8] sm:$0xff]
      %v647 = vld [vmem:[%s3 + $0xd0] sm:$0xff]
      %v648 = vld [vmem:[%s3 + $0xd8] sm:$0xff]
      %v649 = vld [vmem:[%s3 + $0xe0] sm:$0xff]
      %v650 = vld [vmem:[%s3 + $0xe8] sm:$0xff]
      %v651 = vld [vmem:[%s3 + $0xf0] sm:$0xff]
      %v652 = vld [vmem:[%s3 + $0xf8] sm:$0xff]
      %v653 = vld [vmem:[%s3 + $0x100] sm:$0xff]
      %v654 = vld [vmem:[%s3 + $0x108] sm:$0xff]
      %v655 = vld [vmem:[%s3 + $0x110] sm:$0xff]
      %v656 = vld [vmem:[%s3 + $0x118] sm:$0xff]
      %v657 = vld [vmem:[%s3 + $0x120] sm:$0xff]
      %v658 = vld [vmem:[%s3 + $0x128] sm:$0xff]
      %v659 = vld [vmem:[%s3 + $0x130] sm:$0xff]
      %v660 = vld [vmem:[%s3 + $0x138] sm:$0xff]
      %v661 = vld [vmem:[%s3 + $0x140] sm:$0xff]
      %v662 = vld [vmem:[%s3 + $0x148] sm:$0xff]
      %v663 = vld [vmem:[%s3 + $0x150] sm:$0xff]
      %v664 = vld [vmem:[%s3 + $0x158] sm:$0xff]
      %v665 = vld [vmem:[%s3 + $0x160] sm:$0xff]
      %v666 = vld [vmem:[%s3 + $0x168] sm:$0xff]
      %v667 = vld [vmem:[%s3 + $0x170] sm:$0xff]
      %v668 = vld [vmem:[%s3 + $0x178] sm:$0xff]
      %v669 = vld [vmem:[%s3 + $0x180] sm:$0xff]
      %v670 = vld [vmem:[%s3 + $0x188] sm:$0xff]
      %v671 = vld [vmem:[%s3 + $0x190] sm:$0xff]
      %v672 = vld [vmem:[%s3 + $0x198] sm:$0xff]
      %v673 = vld [vmem:[%s3 + $0x1a0] sm:$0xff]
      %v674 = vld [vmem:[%s3 + $0x1a8] sm:$0xff]
      %v675 = vld [vmem:[%s3 + $0x1b0] sm:$0xff]
      %v676 = vld [vmem:[%s3 + $0x1b8] sm:$0xff]
      %v677 = vld [vmem:[%s3 + $0x1c0] sm:$0xff]
      %v678 = vld [vmem:[%s3 + $0x1c8] sm:$0xff]
      %v679 = vld [vmem:[%s3 + $0x1d0] sm:$0xff]
      %v680 = vld [vmem:[%s3 + $0x1d8] sm:$0xff]
      %v681 = vld [vmem:[%s3 + $0x1e0] sm:$0xff]
      %v682 = vld [vmem:[%s3 + $0x1e8] sm:$0xff]
      %v683 = vld [vmem:[%s3 + $0x1f0] sm:$0xff]
      %v684 = vld [vmem:[%s3 + $0x1f8] sm:$0xff]
      %685 = vmatprep.subr.mxu0 %v622
      %686 = vmatpush1.msra.mxu0 %v621
      %687 = vmatprep.subr.mxu0 %v626
      %688 = vmatpush1.msra.mxu0 %v625
      %689 = vmatprep.subr.mxu0 %v630
      %690 = vmatpush1.msra.mxu0 %v629
      %691 = vmatprep.subr.mxu0 %v634
      %692 = vmatpush1.msra.mxu0 %v633
      %693 = vmatprep.subr.mxu0 %v638
      %694 = vmatpush1.msra.mxu0 %v637
      %695 = vmatprep.subr.mxu0 %v642
      %696 = vmatpush1.msra.mxu0 %v641
      %697 = vmatprep.subr.mxu0 %v646
      %698 = vmatpush1.msra.mxu0 %v645
      %699 = vmatprep.subr.mxu0 %v650
      %700 = vmatpush1.msra.mxu0 %v649
      %701 = vmatprep.subr.mxu0 %v654
      %702 = vmatpush1.msra.mxu0 %v653
      %703 = vmatprep.subr.mxu0 %v658
      %704 = vmatpush1.msra.mxu0 %v657
      %705 = vmatprep.subr.mxu0 %v662
      %706 = vmatpush1.msra.mxu0 %v661
      %707 = vmatprep.subr.mxu0 %v666
      %708 = vmatpush1.msra.mxu0 %v665
      %709 = vmatprep.subr.mxu0 %v670
      %710 = vmatpush1.msra.mxu0 %v669
      %711 = vmatprep.subr.mxu0 %v674
      %712 = vmatpush1.msra.mxu0 %v673
      %713 = vmatprep.subr.mxu0 %v678
      %714 = vmatpush1.msra.mxu0 %v677
      %715 = vmatprep.subr.mxu0 %v682
      %716 = vmatpush1.msra.mxu0 %v681
      %717 = vmatprep.subr.mxu0 0.0
      %718 = vmatpush1.msra.mxu0 0.0
      %719 = vmatprep.subr.mxu0 0.0
      %720 = vmatpush1.msra.mxu0 0.0
      %721 = vmatprep.subr.mxu0 0.0
      %722 = vmatpush1.msra.mxu0 0.0
      %723 = vmatprep.subr.mxu0 0.0
      %724 = vmatpush1.msra.mxu0 0.0
      %725 = vmatprep.subr.mxu0 0.0
      %726 = vmatpush1.msra.mxu0 0.0
      %727 = vmatprep.subr.mxu0 0.0
      %728 = vmatpush1.msra.mxu0 0.0
      %729 = vmatprep.subr.mxu0 0.0
      %730 = vmatpush1.msra.mxu0 0.0
      %731 = vmatprep.subr.mxu0 0.0
      %732 = vmatpush1.msra.mxu0 0.0
      %733 = vmatprep.subr.mxu0 0.0
      %734 = vmatpush1.msra.mxu0 0.0
      %735 = vmatprep.subr.mxu0 0.0
      %736 = vmatpush1.msra.mxu0 0.0
      %737 = vmatprep.subr.mxu0 0.0
      %738 = vmatpush1.msra.mxu0 0.0
      %739 = vmatprep.subr.mxu0 0.0
      %740 = vmatpush1.msra.mxu0 0.0
      %741 = vmatprep.subr.mxu0 0.0
      %742 = vmatpush1.msra.mxu0 0.0
      %743 = vmatprep.subr.mxu0 0.0
      %744 = vmatpush1.msra.mxu0 0.0
      %745 = vmatprep.subr.mxu0 0.0
      %746 = vmatpush1.msra.mxu0 0.0
      %747 = vmatprep.subr.mxu0 0.0
      %748 = vmatpush1.msra.mxu0 0.0
      %749 = vmatprep.mubr.f32.mxu0 0.0
      %750 = vmatmul.mubr.f32.gmra.mrb[0].mxu0 %v511
      %v751 = vpop.f32.mrb[0].mxu0
      %v752 = vadd.f32 0.0, %v751
      %v753 = vpop.f32.mrb[0].mxu0
      %v754 = vadd.f32 0.0, %v753
      %755 = vmatprep.mubr.f32.mxu0 0.0
      %756 = vmatmul.mubr.f32.gmra.mrb[0].mxu0 %v516
      %v757 = vpop.f32.mrb[0].mxu0
      %v758 = vadd.f32 0.0, %v757
      %v759 = vpop.f32.mrb[0].mxu0
      %v760 = vadd.f32 0.0, %v759
      %761 = vmatprep.mubr.f32.mxu0 0.0
      %762 = vmatmul.mubr.f32.gmra.mrb[0].mxu0 %v521
      %v763 = vpop.f32.mrb[0].mxu0
      %v764 = vadd.f32 0.0, %v763
      %v765 = vpop.f32.mrb[0].mxu0
      %v766 = vadd.f32 0.0, %v765
      %767 = vmatprep.mubr.f32.mxu0 0.0
      %768 = vmatmul.mubr.f32.gmra.mrb[0].mxu0 %v526
      %v769 = vpop.f32.mrb[0].mxu0
      %v770 = vadd.f32 0.0, %v769
      %v771 = vpop.f32.mrb[0].mxu0
      %v772 = vadd.f32 0.0, %v771
      %773 = vmatprep.mubr.f32.mxu0 0.0
      %774 = vmatmul.mubr.f32.gmra.mrb[0].mxu0 %v531
      %v775 = vpop.f32.mrb[0].mxu0
      %v776 = vadd.f32 0.0, %v775
      %v777 = vpop.f32.mrb[0].mxu0
      %v778 = vadd.f32 0.0, %v777
      %779 = vmatprep.mubr.f32.mxu0 0.0
      %780 = vmatmul.mubr.f32.gmra.mrb[0].mxu0 %v536
      %v781 = vpop.f32.mrb[0].mxu0
      %v782 = vadd.f32 0.0, %v781
      %v783 = vpop.f32.mrb[0].mxu0
      %v784 = vadd.f32 0.0, %v783
      %785 = vmatprep.mubr.f32.mxu0 0.0
      %786 = vmatmul.mubr.f32.gmra.mrb[0].mxu0 %v541
      %v787 = vpop.f32.mrb[0].mxu0
      %v788 = vadd.f32 0.0, %v787
      %v789 = vpop.f32.mrb[0].mxu0
      %v790 = vadd.f32 0.0, %v789
      %791 = vmatprep.mubr.f32.mxu0 0.0
      %792 = vmatmul.mubr.f32.gmra.mrb[0].mxu0 %v546
      %v793 = vpop.f32.mrb[0].mxu0
      %v794 = vadd.f32 0.0, %v793
      %v795 = vpop.f32.mrb[0].mxu0
      %v796 = vadd.f32 0.0, %v795
      %797 = vdwg.mxu0
      %798 = vmatprep.subr.mxu0 %v624
      %799 = vmatpush1.msra.mxu0 %v623
      %800 = vmatprep.subr.mxu0 %v628
      %801 = vmatpush1.msra.mxu0 %v627
      %802 = vmatprep.subr.mxu0 %v632
      %803 = vmatpush1.msra.mxu0 %v631
      %804 = vmatprep.subr.mxu0 %v636
      %805 = vmatpush1.msra.mxu0 %v635
      %806 = vmatprep.subr.mxu0 %v640
      %807 = vmatpush1.msra.mxu0 %v639
      %808 = vmatprep.subr.mxu0 %v644
      %809 = vmatpush1.msra.mxu0 %v643
      %810 = vmatprep.subr.mxu0 %v648
      %811 = vmatpush1.msra.mxu0 %v647
      %812 = vmatprep.subr.mxu0 %v652
      %813 = vmatpush1.msra.mxu0 %v651
      %814 = vmatprep.subr.mxu0 %v656
      %815 = vmatpush1.msra.mxu0 %v655
      %816 = vmatprep.subr.mxu0 %v660
      %817 = vmatpush1.msra.mxu0 %v659
      %818 = vmatprep.subr.mxu0 %v664
      %819 = vmatpush1.msra.mxu0 %v663
      %820 = vmatprep.subr.mxu0 %v668
      %821 = vmatpush1.msra.mxu0 %v667
      %822 = vmatprep.subr.mxu0 %v672
      %823 = vmatpush1.msra.mxu0 %v671
      %824 = vmatprep.subr.mxu0 %v676
      %825 = vmatpush1.msra.mxu0 %v675
      %826 = vmatprep.subr.mxu0 %v680
      %827 = vmatpush1.msra.mxu0 %v679
      %828 = vmatprep.subr.mxu0 %v684
      %829 = vmatpush1.msra.mxu0 %v683
      %830 = vmatprep.subr.mxu0 0.0
      %831 = vmatpush1.msra.mxu0 0.0
      %832 = vmatprep.subr.mxu0 0.0
      %833 = vmatpush1.msra.mxu0 0.0
      %834 = vmatprep.subr.mxu0 0.0
      %835 = vmatpush1.msra.mxu0 0.0
      %836 = vmatprep.subr.mxu0 0.0
      %837 = vmatpush1.msra.mxu0 0.0
      %838 = vmatprep.subr.mxu0 0.0
      %839 = vmatpush1.msra.mxu0 0.0
      %840 = vmatprep.subr.mxu0 0.0
      %841 = vmatpush1.msra.mxu0 0.0
      %842 = vmatprep.subr.mxu0 0.0
      %843 = vmatpush1.msra.mxu0 0.0
      %844 = vmatprep.subr.mxu0 0.0
      %845 = vmatpush1.msra.mxu0 0.0
      %846 = vmatprep.subr.mxu0 0.0
      %847 = vmatpush1.msra.mxu0 0.0
      %848 = vmatprep.subr.mxu0 0.0
      %849 = vmatpush1.msra.mxu0 0.0
      %850 = vmatprep.subr.mxu0 0.0
      %851 = vmatpush1.msra.mxu0 0.0
      %852 = vmatprep.subr.mxu0 0.0
      %853 = vmatpush1.msra.mxu0 0.0
      %854 = vmatprep.subr.mxu0 0.0
      %855 = vmatpush1.msra.mxu0 0.0
      %856 = vmatprep.subr.mxu0 0.0
      %857 = vmatpush1.msra.mxu0 0.0
      %858 = vmatprep.subr.mxu0 0.0
      %859 = vmatpush1.msra.mxu0 0.0
      %860 = vmatprep.subr.mxu0 0.0
      %861 = vmatpush1.msra.mxu0 0.0
      %862 = vmatprep.mubr.f32.mxu0 0.0
      %863 = vmatmul.mubr.f32.gmra.mrb[0].mxu0 %v511
      %v864 = vpop.f32.mrb[0].mxu0
      %v865 = vadd.f32 0.0, %v864
      %v866 = vpop.f32.mrb[0].mxu0
      %v867 = vadd.f32 0.0, %v866
      %868 = vmatprep.mubr.f32.mxu0 0.0
      %869 = vmatmul.mubr.f32.gmra.mrb[0].mxu0 %v516
      %v870 = vpop.f32.mrb[0].mxu0
      %v871 = vadd.f32 0.0, %v870
      %v872 = vpop.f32.mrb[0].mxu0
      %v873 = vadd.f32 0.0, %v872
      %874 = vmatprep.mubr.f32.mxu0 0.0
      %875 = vmatmul.mubr.f32.gmra.mrb[0].mxu0 %v521
      %v876 = vpop.f32.mrb[0].mxu0
      %v877 = vadd.f32 0.0, %v876
      %v878 = vpop.f32.mrb[0].mxu0
      %v879 = vadd.f32 0.0, %v878
      %880 = vmatprep.mubr.f32.mxu0 0.0
      %881 = vmatmul.mubr.f32.gmra.mrb[0].mxu0 %v526
      %v882 = vpop.f32.mrb[0].mxu0
      %v883 = vadd.f32 0.0, %v882
      %v884 = vpop.f32.mrb[0].mxu0
      %v885 = vadd.f32 0.0, %v884
      %886 = vmatprep.mubr.f32.mxu0 0.0
      %887 = vmatmul.mubr.f32.gmra.mrb[0].mxu0 %v531
      %v888 = vpop.f32.mrb[0].mxu0
      %v889 = vadd.f32 0.0, %v888
      %v890 = vpop.f32.mrb[0].mxu0
      %v891 = vadd.f32 0.0, %v890
      %892 = vmatprep.mubr.f32.mxu0 0.0
      %893 = vmatmul.mubr.f32.gmra.mrb[0].mxu0 %v536
      %v894 = vpop.f32.mrb[0].mxu0
      %v895 = vadd.f32 0.0, %v894
      %v896 = vpop.f32.mrb[0].mxu0
      %v897 = vadd.f32 0.0, %v896
      %898 = vmatprep.mubr.f32.mxu0 0.0
      %899 = vmatmul.mubr.f32.gmra.mrb[0].mxu0 %v541
      %v900 = vpop.f32.mrb[0].mxu0
      %v901 = vadd.f32 0.0, %v900
      %v902 = vpop.f32.mrb[0].mxu0
      %v903 = vadd.f32 0.0, %v902
      %904 = vmatprep.mubr.f32.mxu0 0.0
      %905 = vmatmul.mubr.f32.gmra.mrb[0].mxu0 %v546
      %v906 = vpop.f32.mrb[0].mxu0
      %v907 = vadd.f32 0.0, %v906
      %v908 = vpop.f32.mrb[0].mxu0
      %v909 = vadd.f32 0.0, %v908
      %910 = vdwg.mxu0
      %911 = vmatprep.subr.mxu0 %v558
      %912 = vmatpush1.msra.mxu0 %v557
      %913 = vmatprep.subr.mxu0 %v562
      %914 = vmatpush1.msra.mxu0 %v561
      %915 = vmatprep.subr.mxu0 %v566
      %916 = vmatpush1.msra.mxu0 %v565
      %917 = vmatprep.subr.mxu0 %v570
      %918 = vmatpush1.msra.mxu0 %v569
      %919 = vmatprep.subr.mxu0 %v574
      %920 = vmatpush1.msra.mxu0 %v573
      %921 = vmatprep.subr.mxu0 %v578
      %922 = vmatpush1.msra.mxu0 %v577
      %923 = vmatprep.subr.mxu0 %v582
      %924 = vmatpush1.msra.mxu0 %v581
      %925 = vmatprep.subr.mxu0 %v586
      %926 = vmatpush1.msra.mxu0 %v585
      %927 = vmatprep.subr.mxu0 %v590
      %928 = vmatpush1.msra.mxu0 %v589
      %929 = vmatprep.subr.mxu0 %v594
      %930 = vmatpush1.msra.mxu0 %v593
      %931 = vmatprep.subr.mxu0 %v598
      %932 = vmatpush1.msra.mxu0 %v597
      %933 = vmatprep.subr.mxu0 %v602
      %934 = vmatpush1.msra.mxu0 %v601
      %935 = vmatprep.subr.mxu0 %v606
      %936 = vmatpush1.msra.mxu0 %v605
      %937 = vmatprep.subr.mxu0 %v610
      %938 = vmatpush1.msra.mxu0 %v609
      %939 = vmatprep.subr.mxu0 %v614
      %940 = vmatpush1.msra.mxu0 %v613
      %941 = vmatprep.subr.mxu0 %v618
      %942 = vmatpush1.msra.mxu0 %v617
      %943 = vmatprep.subr.mxu0 0.0
      %944 = vmatpush1.msra.mxu0 0.0
      %945 = vmatprep.subr.mxu0 0.0
      %946 = vmatpush1.msra.mxu0 0.0
      %947 = vmatprep.subr.mxu0 0.0
      %948 = vmatpush1.msra.mxu0 0.0
      %949 = vmatprep.subr.mxu0 0.0
      %950 = vmatpush1.msra.mxu0 0.0
      %951 = vmatprep.subr.mxu0 0.0
      %952 = vmatpush1.msra.mxu0 0.0
      %953 = vmatprep.subr.mxu0 0.0
      %954 = vmatpush1.msra.mxu0 0.0
      %955 = vmatprep.subr.mxu0 0.0
      %956 = vmatpush1.msra.mxu0 0.0
      %957 = vmatprep.subr.mxu0 0.0
      %958 = vmatpush1.msra.mxu0 0.0
      %959 = vmatprep.subr.mxu0 0.0
      %960 = vmatpush1.msra.mxu0 0.0
      %961 = vmatprep.subr.mxu0 0.0
      %962 = vmatpush1.msra.mxu0 0.0
      %963 = vmatprep.subr.mxu0 0.0
      %964 = vmatpush1.msra.mxu0 0.0
      %965 = vmatprep.subr.mxu0 0.0
      %966 = vmatpush1.msra.mxu0 0.0
      %967 = vmatprep.subr.mxu0 0.0
      %968 = vmatpush1.msra.mxu0 0.0
      %969 = vmatprep.subr.mxu0 0.0
      %970 = vmatpush1.msra.mxu0 0.0
      %971 = vmatprep.subr.mxu0 0.0
      %972 = vmatpush1.msra.mxu0 0.0
      %973 = vmatprep.subr.mxu0 0.0
      %974 = vmatpush1.msra.mxu0 0.0
      %975 = vmatprep.mubr.f32.mxu0 0.0
      %976 = vmatmul.mubr.f32.gmra.mrb[0].mxu0 %v549
      %v977 = vpop.f32.mrb[0].mxu0
      %v978 = vadd.f32 %v752, %v977
      %v979 = vpop.f32.mrb[0].mxu0
      %v980 = vadd.f32 %v754, %v979
      %981 = vmatprep.mubr.f32.mxu0 0.0
      %982 = vmatmul.mubr.f32.gmra.mrb[0].mxu0 %v550
      %v983 = vpop.f32.mrb[0].mxu0
      %v984 = vadd.f32 %v758, %v983
      %v985 = vpop.f32.mrb[0].mxu0
      %v986 = vadd.f32 %v760, %v985
      %987 = vmatprep.mubr.f32.mxu0 0.0
      %988 = vmatmul.mubr.f32.gmra.mrb[0].mxu0 %v551
      %v989 = vpop.f32.mrb[0].mxu0
      %v990 = vadd.f32 %v764, %v989
      %v991 = vpop.f32.mrb[0].mxu0
      %v992 = vadd.f32 %v766, %v991
      %993 = vmatprep.mubr.f32.mxu0 0.0
      %994 = vmatmul.mubr.f32.gmra.mrb[0].mxu0 %v552
      %v995 = vpop.f32.mrb[0].mxu0
      %v996 = vadd.f32 %v770, %v995
      %v997 = vpop.f32.mrb[0].mxu0
      %v998 = vadd.f32 %v772, %v997
      %999 = vmatprep.mubr.f32.mxu0 0.0
      %1000 = vmatmul.mubr.f32.gmra.mrb[0].mxu0 %v553
      %v1001 = vpop.f32.mrb[0].mxu0
      %v1002 = vadd.f32 %v776, %v1001
      %v1003 = vpop.f32.mrb[0].mxu0
      %v1004 = vadd.f32 %v778, %v1003
      %1005 = vmatprep.mubr.f32.mxu0 0.0
      %1006 = vmatmul.mubr.f32.gmra.mrb[0].mxu0 %v554
      %v1007 = vpop.f32.mrb[0].mxu0
      %v1008 = vadd.f32 %v782, %v1007
      %v1009 = vpop.f32.mrb[0].mxu0
      %v1010 = vadd.f32 %v784, %v1009
      %1011 = vmatprep.mubr.f32.mxu0 0.0
      %1012 = vmatmul.mubr.f32.gmra.mrb[0].mxu0 %v555
      %v1013 = vpop.f32.mrb[0].mxu0
      %v1014 = vadd.f32 %v788, %v1013
      %v1015 = vpop.f32.mrb[0].mxu0
      %v1016 = vadd.f32 %v790, %v1015
      %1017 = vmatprep.mubr.f32.mxu0 0.0
      %1018 = vmatmul.mubr.f32.gmra.mrb[0].mxu0 %v556
      %v1019 = vpop.f32.mrb[0].mxu0
      %v1020 = vadd.f32 %v794, %v1019
      %v1021 = vpop.f32.mrb[0].mxu0
      %v1022 = vadd.f32 %v796, %v1021
      %1023 = vdwg.mxu0
      %1024 = vmatprep.subr.mxu0 %v560
      %1025 = vmatpush1.msra.mxu0 %v559
      %1026 = vmatprep.subr.mxu0 %v564
      %1027 = vmatpush1.msra.mxu0 %v563
      %1028 = vmatprep.subr.mxu0 %v568
      %1029 = vmatpush1.msra.mxu0 %v567
      %1030 = vmatprep.subr.mxu0 %v572
      %1031 = vmatpush1.msra.mxu0 %v571
      %1032 = vmatprep.subr.mxu0 %v576
      %1033 = vmatpush1.msra.mxu0 %v575
      %1034 = vmatprep.subr.mxu0 %v580
      %1035 = vmatpush1.msra.mxu0 %v579
      %1036 = vmatprep.subr.mxu0 %v584
      %1037 = vmatpush1.msra.mxu0 %v583
      %1038 = vmatprep.subr.mxu0 %v588
      %1039 = vmatpush1.msra.mxu0 %v587
      %1040 = vmatprep.subr.mxu0 %v592
      %1041 = vmatpush1.msra.mxu0 %v591
      %1042 = vmatprep.subr.mxu0 %v596
      %1043 = vmatpush1.msra.mxu0 %v595
      %1044 = vmatprep.subr.mxu0 %v600
      %1045 = vmatpush1.msra.mxu0 %v599
      %1046 = vmatprep.subr.mxu0 %v604
      %1047 = vmatpush1.msra.mxu0 %v603
      %1048 = vmatprep.subr.mxu0 %v608
      %1049 = vmatpush1.msra.mxu0 %v607
      %1050 = vmatprep.subr.mxu0 %v612
      %1051 = vmatpush1.msra.mxu0 %v611
      %1052 = vmatprep.subr.mxu0 %v616
      %1053 = vmatpush1.msra.mxu0 %v615
      %1054 = vmatprep.subr.mxu0 %v620
      %1055 = vmatpush1.msra.mxu0 %v619
      %1056 = vmatprep.subr.mxu0 0.0
      %1057 = vmatpush1.msra.mxu0 0.0
      %1058 = vmatprep.subr.mxu0 0.0
      %1059 = vmatpush1.msra.mxu0 0.0
      %1060 = vmatprep.subr.mxu0 0.0
      %1061 = vmatpush1.msra.mxu0 0.0
      %1062 = vmatprep.subr.mxu0 0.0
      %1063 = vmatpush1.msra.mxu0 0.0
      %1064 = vmatprep.subr.mxu0 0.0
      %1065 = vmatpush1.msra.mxu0 0.0
      %1066 = vmatprep.subr.mxu0 0.0
      %1067 = vmatpush1.msra.mxu0 0.0
      %1068 = vmatprep.subr.mxu0 0.0
      %1069 = vmatpush1.msra.mxu0 0.0
      %1070 = vmatprep.subr.mxu0 0.0
      %1071 = vmatpush1.msra.mxu0 0.0
      %1072 = vmatprep.subr.mxu0 0.0
      %1073 = vmatpush1.msra.mxu0 0.0
      %1074 = vmatprep.subr.mxu0 0.0
      %1075 = vmatpush1.msra.mxu0 0.0
      %1076 = vmatprep.subr.mxu0 0.0
      %1077 = vmatpush1.msra.mxu0 0.0
      %1078 = vmatprep.subr.mxu0 0.0
      %1079 = vmatpush1.msra.mxu0 0.0
      %1080 = vmatprep.subr.mxu0 0.0
      %1081 = vmatpush1.msra.mxu0 0.0
      %1082 = vmatprep.subr.mxu0 0.0
      %1083 = vmatpush1.msra.mxu0 0.0
      %1084 = vmatprep.subr.mxu0 0.0
      %1085 = vmatpush1.msra.mxu0 0.0
      %1086 = vmatprep.subr.mxu0 0.0
      %1087 = vmatpush1.msra.mxu0 0.0
      %1088 = vmatprep.mubr.f32.mxu0 0.0
      %1089 = vmatmul.mubr.f32.gmra.mrb[0].mxu0 %v549
      %v1090 = vpop.f32.mrb[0].mxu0
      %v1091 = vadd.f32 %v865, %v1090
      %v1092 = vpop.f32.mrb[0].mxu0
      %v1093 = vadd.f32 %v867, %v1092
      %1094 = vmatprep.mubr.f32.mxu0 0.0
      %1095 = vmatmul.mubr.f32.gmra.mrb[0].mxu0 %v550
      %v1096 = vpop.f32.mrb[0].mxu0
      %v1097 = vadd.f32 %v871, %v1096
      %v1098 = vpop.f32.mrb[0].mxu0
      %v1099 = vadd.f32 %v873, %v1098
      %1100 = vmatprep.mubr.f32.mxu0 0.0
      %1101 = vmatmul.mubr.f32.gmra.mrb[0].mxu0 %v551
      %v1102 = vpop.f32.mrb[0].mxu0
      %v1103 = vadd.f32 %v877, %v1102
      %v1104 = vpop.f32.mrb[0].mxu0
      %v1105 = vadd.f32 %v879, %v1104
      %1106 = vmatprep.mubr.f32.mxu0 0.0
      %1107 = vmatmul.mubr.f32.gmra.mrb[0].mxu0 %v552
      %v1108 = vpop.f32.mrb[0].mxu0
      %v1109 = vadd.f32 %v883, %v1108
      %v1110 = vpop.f32.mrb[0].mxu0
      %v1111 = vadd.f32 %v885, %v1110
      %1112 = vmatprep.mubr.f32.mxu0 0.0
      %1113 = vmatmul.mubr.f32.gmra.mrb[0].mxu0 %v553
      %v1114 = vpop.f32.mrb[0].mxu0
      %v1115 = vadd.f32 %v889, %v1114
      %v1116 = vpop.f32.mrb[0].mxu0
      %v1117 = vadd.f32 %v891, %v1116
      %1118 = vmatprep.mubr.f32.mxu0 0.0
      %1119 = vmatmul.mubr.f32.gmra.mrb[0].mxu0 %v554
      %v1120 = vpop.f32.mrb[0].mxu0
      %v1121 = vadd.f32 %v895, %v1120
      %v1122 = vpop.f32.mrb[0].mxu0
      %v1123 = vadd.f32 %v897, %v1122
      %1124 = vmatprep.mubr.f32.mxu0 0.0
      %1125 = vmatmul.mubr.f32.gmra.mrb[0].mxu0 %v555
      %v1126 = vpop.f32.mrb[0].mxu0
      %v1127 = vadd.f32 %v901, %v1126
      %v1128 = vpop.f32.mrb[0].mxu0
      %v1129 = vadd.f32 %v903, %v1128
      %1130 = vmatprep.mubr.f32.mxu0 0.0
      %1131 = vmatmul.mubr.f32.gmra.mrb[0].mxu0 %v556
      %v1132 = vpop.f32.mrb[0].mxu0
      %v1133 = vadd.f32 %v907, %v1132
      %v1134 = vpop.f32.mrb[0].mxu0
      %v1135 = vadd.f32 %v909, %v1134
      %1136 = vdwg.mxu0
      %v1137 = vadd.f32 %v978, %v984
      %v1138 = vadd.f32 %v1137, %v990
      %v1139 = vadd.f32 %v1138, %v996
      %v1140 = vadd.f32 %v1139, %v1002
      %v1141 = vadd.f32 %v1140, %v1008
      %v1142 = vadd.f32 %v1141, %v1014
      %v1143 = vadd.f32 %v1142, %v1020
      %v1144 = vrot.slane %v1143, 4
      %v1145 = vadd.f32 %v1143, %v1144
      %v1146 = vrot.slane %v1145, 2
      %v1147 = vadd.f32 %v1145, %v1146
      %v1148 = vrot.slane %v1147, 1
      %v1149 = vadd.f32 %v1147, %v1148
      %v1150 = vadd.f32 %v980, %v986
      %v1151 = vadd.f32 %v1150, %v992
      %v1152 = vadd.f32 %v1151, %v998
      %v1153 = vadd.f32 %v1152, %v1004
      %v1154 = vadd.f32 %v1153, %v1010
      %v1155 = vadd.f32 %v1154, %v1016
      %v1156 = vadd.f32 %v1155, %v1022
      %v1157 = vrot.slane %v1156, 4
      %v1158 = vadd.f32 %v1156, %v1157
      %v1159 = vrot.slane %v1158, 2
      %v1160 = vadd.f32 %v1158, %v1159
      %v1161 = vrot.slane %v1160, 1
      %v1162 = vadd.f32 %v1160, %v1161
      %v1163 = vadd.f32 %v1091, %v1097
      %v1164 = vadd.f32 %v1163, %v1103
      %v1165 = vadd.f32 %v1164, %v1109
      %v1166 = vadd.f32 %v1165, %v1115
      %v1167 = vadd.f32 %v1166, %v1121
      %v1168 = vadd.f32 %v1167, %v1127
      %v1169 = vadd.f32 %v1168, %v1133
      %v1170 = vrot.slane %v1169, 4
      %v1171 = vadd.f32 %v1169, %v1170
      %v1172 = vrot.slane %v1171, 2
      %v1173 = vadd.f32 %v1171, %v1172
      %v1174 = vrot.slane %v1173, 1
      %v1175 = vadd.f32 %v1173, %v1174
      %vm1176 = vcmask 392192
      %v1177 = vsel %vm1176, %v1093, 0.0
      %v1178 = vsel %vm1176, %v1099, 0.0
      %v1179 = vadd.f32 %v1177, %v1178
      %v1180 = vsel %vm1176, %v1105, 0.0
      %v1181 = vadd.f32 %v1179, %v1180
      %v1182 = vsel %vm1176, %v1111, 0.0
      %v1183 = vadd.f32 %v1181, %v1182
      %v1184 = vsel %vm1176, %v1117, 0.0
      %v1185 = vadd.f32 %v1183, %v1184
      %v1186 = vsel %vm1176, %v1123, 0.0
      %v1187 = vadd.f32 %v1185, %v1186
      %v1188 = vsel %vm1176, %v1129, 0.0
      %v1189 = vadd.f32 %v1187, %v1188
      %v1190 = vsel %vm1176, %v1135, 0.0
      %v1191 = vadd.f32 %v1189, %v1190
      %v1192 = vrot.slane %v1191, 4
      %v1193 = vadd.f32 %v1191, %v1192
      %v1194 = vrot.slane %v1193, 2
      %v1195 = vadd.f32 %v1193, %v1194
      %v1196 = vrot.slane %v1195, 1
      %v1197 = vadd.f32 %v1195, %v1196
      %v1198 = vrcp.pop 64.0
      %v1199 = vmul.f32 %v1149, %v1198
      %v1200 = vmul.f32 %v1162, %v1198
      %v1201 = vmul.f32 %v1175, %v1198
      %v1202 = vmul.f32 %v1197, %v1198
      %v1203 = vld [vmem:[%s5] sm:$0xff]
      %v1204 = vld [vmem:[%s5 + $0x8] sm:$0xff]
      %v1205 = vld [vmem:[%s5 + $0x10] sm:$0xff]
      %v1206 = vld [vmem:[%s5 + $0x18] sm:$0xff]
      %v1207 = vld [vmem:[%s5 + $0x20] sm:$0xff]
      %v1208 = vld [vmem:[%s5 + $0x28] sm:$0xff]
      %v1209 = vld [vmem:[%s5 + $0x30] sm:$0xff]
      %v1210 = vld [vmem:[%s5 + $0x38] sm:$0xff]
      %v1211 = vld [vmem:[%s5 + $0x40] sm:$0xff]
      %v1212 = vld [vmem:[%s5 + $0x48] sm:$0xff]
      %v1213 = vld [vmem:[%s5 + $0x50] sm:$0xff]
      %v1214 = vld [vmem:[%s5 + $0x58] sm:$0xff]
      %v1215 = vld [vmem:[%s5 + $0x60] sm:$0xff]
      %v1216 = vld [vmem:[%s5 + $0x68] sm:$0xff]
      %v1217 = vld [vmem:[%s5 + $0x70] sm:$0xff]
      %v1218 = vld [vmem:[%s5 + $0x78] sm:$0xff]
      %v1219 = vld [vmem:[%s5 + $0x80] sm:$0xff]
      %v1220 = vld [vmem:[%s5 + $0x88] sm:$0xff]
      %v1221 = vld [vmem:[%s5 + $0x90] sm:$0xff]
      %v1222 = vld [vmem:[%s5 + $0x98] sm:$0xff]
      %v1223 = vld [vmem:[%s5 + $0xa0] sm:$0xff]
      %v1224 = vld [vmem:[%s5 + $0xa8] sm:$0xff]
      %v1225 = vld [vmem:[%s5 + $0xb0] sm:$0xff]
      %v1226 = vld [vmem:[%s5 + $0xb8] sm:$0xff]
      %v1227 = vld [vmem:[%s5 + $0xc0] sm:$0xff]
      %v1228 = vld [vmem:[%s5 + $0xc8] sm:$0xff]
      %v1229 = vld [vmem:[%s5 + $0xd0] sm:$0xff]
      %v1230 = vld [vmem:[%s5 + $0xd8] sm:$0xff]
      %v1231 = vld [vmem:[%s5 + $0xe0] sm:$0xff]
      %v1232 = vld [vmem:[%s5 + $0xe8] sm:$0xff]
      %v1233 = vld [vmem:[%s5 + $0xf0] sm:$0xff]
      %v1234 = vld [vmem:[%s5 + $0xf8] sm:$0xff]
      %v1235 = vld [vmem:[%s5 + $0x100] sm:$0xff]
      %v1236 = vld [vmem:[%s5 + $0x108] sm:$0xff]
      %v1237 = vld [vmem:[%s5 + $0x110] sm:$0xff]
      %v1238 = vld [vmem:[%s5 + $0x118] sm:$0xff]
      %v1239 = vld [vmem:[%s5 + $0x120] sm:$0xff]
      %v1240 = vld [vmem:[%s5 + $0x128] sm:$0xff]
      %v1241 = vld [vmem:[%s5 + $0x130] sm:$0xff]
      %v1242 = vld [vmem:[%s5 + $0x138] sm:$0xff]
      %v1243 = vld [vmem:[%s5 + $0x140] sm:$0xff]
      %v1244 = vld [vmem:[%s5 + $0x148] sm:$0xff]
      %v1245 = vld [vmem:[%s5 + $0x150] sm:$0xff]
      %v1246 = vld [vmem:[%s5 + $0x158] sm:$0xff]
      %v1247 = vld [vmem:[%s5 + $0x160] sm:$0xff]
      %v1248 = vld [vmem:[%s5 + $0x168] sm:$0xff]
      %v1249 = vld [vmem:[%s5 + $0x170] sm:$0xff]
      %v1250 = vld [vmem:[%s5 + $0x178] sm:$0xff]
      %v1251 = vld [vmem:[%s5 + $0x180] sm:$0xff]
      %v1252 = vld [vmem:[%s5 + $0x188] sm:$0xff]
      %v1253 = vld [vmem:[%s5 + $0x190] sm:$0xff]
      %v1254 = vld [vmem:[%s5 + $0x198] sm:$0xff]
      %v1255 = vld [vmem:[%s5 + $0x1a0] sm:$0xff]
      %v1256 = vld [vmem:[%s5 + $0x1a8] sm:$0xff]
      %v1258 = vsel %vm1176, %v1202, 0
      %1260 = vmatprep.subr.mxu0 0.0
      %1261 = vmatpush1.msra.mxu0 %v1203
      %1262 = vmatprep.subr.mxu0 0.0
      %1263 = vmatpush1.msra.mxu0 %v1204
      %1264 = vmatprep.subr.mxu0 0.0
      %1265 = vmatpush1.msra.mxu0 %v1205
      %1266 = vmatprep.subr.mxu0 0.0
      %1267 = vmatpush1.msra.mxu0 %v1206
      %1268 = vmatprep.subr.mxu0 0.0
      %1269 = vmatpush1.msra.mxu0 %v1207
      %1270 = vmatprep.subr.mxu0 0.0
      %1271 = vmatpush1.msra.mxu0 %v1208
      %1272 = vmatprep.subr.mxu0 0.0
      %1273 = vmatpush1.msra.mxu0 %v1209
      %1274 = vmatprep.subr.mxu0 0.0
      %1275 = vmatpush1.msra.mxu0 %v1210
      %1276 = vmatprep.subr.mxu0 0.0
      %1277 = vmatpush1.msra.mxu0 %v1211
      %1278 = vmatprep.subr.mxu0 0.0
      %1279 = vmatpush1.msra.mxu0 %v1212
      %1280 = vmatprep.subr.mxu0 0.0
      %1281 = vmatpush1.msra.mxu0 %v1213
      %1282 = vmatprep.subr.mxu0 0.0
      %1283 = vmatpush1.msra.mxu0 %v1214
      %1284 = vmatprep.subr.mxu0 0.0
      %1285 = vmatpush1.msra.mxu0 %v1215
      %1286 = vmatprep.subr.mxu0 0.0
      %1287 = vmatpush1.msra.mxu0 %v1216
      %1288 = vmatprep.subr.mxu0 0.0
      %1289 = vmatpush1.msra.mxu0 %v1217
      %1290 = vmatprep.subr.mxu0 0.0
      %1291 = vmatpush1.msra.mxu0 %v1218
      %1292 = vmatprep.subr.mxu0 0.0
      %1293 = vmatpush1.msra.mxu0 %v1219
      %1294 = vmatprep.subr.mxu0 0.0
      %1295 = vmatpush1.msra.mxu0 %v1220
      %1296 = vmatprep.subr.mxu0 0.0
      %1297 = vmatpush1.msra.mxu0 %v1221
      %1298 = vmatprep.subr.mxu0 0.0
      %1299 = vmatpush1.msra.mxu0 %v1222
      %1300 = vmatprep.subr.mxu0 0.0
      %1301 = vmatpush1.msra.mxu0 %v1223
      %1302 = vmatprep.subr.mxu0 0.0
      %1303 = vmatpush1.msra.mxu0 %v1224
      %1304 = vmatprep.subr.mxu0 0.0
      %1305 = vmatpush1.msra.mxu0 %v1225
      %1306 = vmatprep.subr.mxu0 0.0
      %1307 = vmatpush1.msra.mxu0 %v1226
      %1308 = vmatprep.subr.mxu0 0.0
      %1309 = vmatpush1.msra.mxu0 %v1227
      %1310 = vmatprep.subr.mxu0 0.0
      %1311 = vmatpush1.msra.mxu0 %v1228
      %1312 = vmatprep.subr.mxu0 0.0
      %1313 = vmatpush1.msra.mxu0 %v1229
      %1314 = vmatprep.subr.mxu0 0.0
      %1315 = vmatpush1.msra.mxu0 %v1230
      %1316 = vmatprep.subr.mxu0 0.0
      %1317 = vmatpush1.msra.mxu0 %v1231
      %1318 = vmatprep.subr.mxu0 0.0
      %1319 = vmatpush1.msra.mxu0 %v1232
      %1320 = vmatprep.subr.mxu0 0.0
      %1321 = vmatpush1.msra.mxu0 %v1233
      %1322 = vmatprep.subr.mxu0 0.0
      %1323 = vmatpush1.msra.mxu0 %v1234
      %1324 = vmatprep.mubr.f32.mxu0 %v1200
      %1325 = vmatmul.mubr.f32.gmra.mrb[0].mxu0 %v1199
      %v1326 = vpop.f32.mrb[0].mxu0
      %v1327 = vadd.f32 0.0, %v1326
      %v1328 = vpop.f32.mrb[0].mxu0
      %1329 = vdwg.mxu0
      %1330 = vmatprep.subr.mxu0 0.0
      %1331 = vmatpush1.msra.mxu0 %v1235
      %1332 = vmatprep.subr.mxu0 0.0
      %1333 = vmatpush1.msra.mxu0 %v1236
      %1334 = vmatprep.subr.mxu0 0.0
      %1335 = vmatpush1.msra.mxu0 %v1237
      %1336 = vmatprep.subr.mxu0 0.0
      %1337 = vmatpush1.msra.mxu0 %v1238
      %1338 = vmatprep.subr.mxu0 0.0
      %1339 = vmatpush1.msra.mxu0 %v1239
      %1340 = vmatprep.subr.mxu0 0.0
      %1341 = vmatpush1.msra.mxu0 %v1240
      %1342 = vmatprep.subr.mxu0 0.0
      %1343 = vmatpush1.msra.mxu0 %v1241
      %1344 = vmatprep.subr.mxu0 0.0
      %1345 = vmatpush1.msra.mxu0 %v1242
      %1346 = vmatprep.subr.mxu0 0.0
      %1347 = vmatpush1.msra.mxu0 %v1243
      %1348 = vmatprep.subr.mxu0 0.0
      %1349 = vmatpush1.msra.mxu0 %v1244
      %1350 = vmatprep.subr.mxu0 0.0
      %1351 = vmatpush1.msra.mxu0 %v1245
      %1352 = vmatprep.subr.mxu0 0.0
      %1353 = vmatpush1.msra.mxu0 %v1246
      %1354 = vmatprep.subr.mxu0 0.0
      %1355 = vmatpush1.msra.mxu0 %v1247
      %1356 = vmatprep.subr.mxu0 0.0
      %1357 = vmatpush1.msra.mxu0 %v1248
      %1358 = vmatprep.subr.mxu0 0.0
      %1359 = vmatpush1.msra.mxu0 %v1249
      %1360 = vmatprep.subr.mxu0 0.0
      %1361 = vmatpush1.msra.mxu0 %v1250
      %1362 = vmatprep.subr.mxu0 0.0
      %1363 = vmatpush1.msra.mxu0 %v1251
      %1364 = vmatprep.subr.mxu0 0.0
      %1365 = vmatpush1.msra.mxu0 %v1252
      %1366 = vmatprep.subr.mxu0 0.0
      %1367 = vmatpush1.msra.mxu0 %v1253
      %1368 = vmatprep.subr.mxu0 0.0
      %1369 = vmatpush1.msra.mxu0 %v1254
      %1370 = vmatprep.subr.mxu0 0.0
      %1371 = vmatpush1.msra.mxu0 %v1255
      %1372 = vmatprep.subr.mxu0 0.0
      %1373 = vmatpush1.msra.mxu0 %v1256
      %1374 = vmatprep.subr.mxu0 0.0
      %1375 = vmatpush1.msra.mxu0 0.0
      %1376 = vmatprep.subr.mxu0 0.0
      %1377 = vmatpush1.msra.mxu0 0.0
      %1378 = vmatprep.subr.mxu0 0.0
      %1379 = vmatpush1.msra.mxu0 0.0
      %1380 = vmatprep.subr.mxu0 0.0
      %1381 = vmatpush1.msra.mxu0 0.0
      %1382 = vmatprep.subr.mxu0 0.0
      %1383 = vmatpush1.msra.mxu0 0.0
      %1384 = vmatprep.subr.mxu0 0.0
      %1385 = vmatpush1.msra.mxu0 0.0
      %1386 = vmatprep.subr.mxu0 0.0
      %1387 = vmatpush1.msra.mxu0 0.0
      %1388 = vmatprep.subr.mxu0 0.0
      %1389 = vmatpush1.msra.mxu0 0.0
      %1390 = vmatprep.subr.mxu0 0.0
      %1391 = vmatpush1.msra.mxu0 0.0
      %1392 = vmatprep.subr.mxu0 0.0
      %1393 = vmatpush1.msra.mxu0 0.0
      %1394 = vmatprep.mubr.f32.mxu0 %v1258
      %1395 = vmatmul.mubr.f32.gmra.mrb[0].mxu0 %v1201
      %v1396 = vpop.f32.mrb[0].mxu0
      %v1397 = vadd.f32 %v1327, %v1396
      %v1398 = vpop.f32.mrb[0].mxu0
      %1399 = vdwg.mxu0
      %v1400 = vmax.f32 %v1397, 0.0
      %v1401 = vld [vmem:[%s6] sm:$0xff]
      %v1402 = vld [vmem:[%s6 + $0x8] sm:$0xff]
      %v1405 = vcombine.high %v1401, %v1401
      %v1406 = vcombine.high %v1402, %v1402
      %vm1407 = vcmask 31744
      %v1409 = vsel %vm1407, %v1400, 0
      %vm1411 = vcmask 1043456
      %v1412 = vsel %vm1411, %v1401, 0
      %v1414 = vsel %vm1411, %v1405, 0
      %v1416 = vsel %vm1411, %v1402, 0
      %v1418 = vsel %vm1411, %v1406, 0
      %1420 = vmatprep.subr.mxu0 %v1414
      %1421 = vmatpush1.msra.mxu0 %v1412
      %1422 = vmatprep.subr.mxu0 0.0
      %1423 = vmatpush1.msra.mxu0 0.0
      %1424 = vmatprep.subr.mxu0 0.0
      %1425 = vmatpush1.msra.mxu0 0.0
      %1426 = vmatprep.subr.mxu0 0.0
      %1427 = vmatpush1.msra.mxu0 0.0
      %1428 = vmatprep.subr.mxu0 0.0
      %1429 = vmatpush1.msra.mxu0 0.0
      %1430 = vmatprep.subr.mxu0 0.0
      %1431 = vmatpush1.msra.mxu0 0.0
      %1432 = vmatprep.subr.mxu0 0.0
      %1433 = vmatpush1.msra.mxu0 0.0
      %1434 = vmatprep.subr.mxu0 0.0
      %1435 = vmatpush1.msra.mxu0 0.0
      %1436 = vmatprep.subr.mxu0 0.0
      %1437 = vmatpush1.msra.mxu0 0.0
      %1438 = vmatprep.subr.mxu0 0.0
      %1439 = vmatpush1.msra.mxu0 0.0
      %1440 = vmatprep.subr.mxu0 0.0
      %1441 = vmatpush1.msra.mxu0 0.0
      %1442 = vmatprep.subr.mxu0 0.0
      %1443 = vmatpush1.msra.mxu0 0.0
      %1444 = vmatprep.subr.mxu0 0.0
      %1445 = vmatpush1.msra.mxu0 0.0
      %1446 = vmatprep.subr.mxu0 0.0
      %1447 = vmatpush1.msra.mxu0 0.0
      %1448 = vmatprep.subr.mxu0 0.0
      %1449 = vmatpush1.msra.mxu0 0.0
      %1450 = vmatprep.subr.mxu0 0.0
      %1451 = vmatpush1.msra.mxu0 0.0
      %1452 = vmatprep.subr.mxu0 0.0
      %1453 = vmatpush1.msra.mxu0 0.0
      %1454 = vmatprep.subr.mxu0 0.0
      %1455 = vmatpush1.msra.mxu0 0.0
      %1456 = vmatprep.subr.mxu0 0.0
      %1457 = vmatpush1.msra.mxu0 0.0
      %1458 = vmatprep.subr.mxu0 0.0
      %1459 = vmatpush1.msra.mxu0 0.0
      %1460 = vmatprep.subr.mxu0 0.0
      %1461 = vmatpush1.msra.mxu0 0.0
      %1462 = vmatprep.subr.mxu0 0.0
      %1463 = vmatpush1.msra.mxu0 0.0
      %1464 = vmatprep.subr.mxu0 0.0
      %1465 = vmatpush1.msra.mxu0 0.0
      %1466 = vmatprep.subr.mxu0 0.0
      %1467 = vmatpush1.msra.mxu0 0.0
      %1468 = vmatprep.subr.mxu0 0.0
      %1469 = vmatpush1.msra.mxu0 0.0
      %1470 = vmatprep.subr.mxu0 0.0
      %1471 = vmatpush1.msra.mxu0 0.0
      %1472 = vmatprep.subr.mxu0 0.0
      %1473 = vmatpush1.msra.mxu0 0.0
      %1474 = vmatprep.subr.mxu0 0.0
      %1475 = vmatpush1.msra.mxu0 0.0
      %1476 = vmatprep.subr.mxu0 0.0
      %1477 = vmatpush1.msra.mxu0 0.0
      %1478 = vmatprep.subr.mxu0 0.0
      %1479 = vmatpush1.msra.mxu0 0.0
      %1480 = vmatprep.subr.mxu0 0.0
      %1481 = vmatpush1.msra.mxu0 0.0
      %1482 = vmatprep.subr.mxu0 0.0
      %1483 = vmatpush1.msra.mxu0 0.0
      %1484 = vmatprep.mubr.f32.mxu0 0.0
      %1485 = vmatmul.mubr.f32.gmra.mrb[0].mxu0 %v1409
      %v1486 = vpop.f32.mrb[0].mxu0
      %v1487 = vadd.f32 0.0, %v1486
      %v1488 = vpop.f32.mrb[0].mxu0
      %v1489 = vadd.f32 0.0, %v1488
      %1490 = vdwg.mxu0
      %1491 = vmatprep.subr.mxu0 %v1418
      %1492 = vmatpush1.msra.mxu0 %v1416
      %1493 = vmatprep.subr.mxu0 0.0
      %1494 = vmatpush1.msra.mxu0 0.0
      %1495 = vmatprep.subr.mxu0 0.0
      %1496 = vmatpush1.msra.mxu0 0.0
      %1497 = vmatprep.subr.mxu0 0.0
      %1498 = vmatpush1.msra.mxu0 0.0
      %1499 = vmatprep.subr.mxu0 0.0
      %1500 = vmatpush1.msra.mxu0 0.0
      %1501 = vmatprep.subr.mxu0 0.0
      %1502 = vmatpush1.msra.mxu0 0.0
      %1503 = vmatprep.subr.mxu0 0.0
      %1504 = vmatpush1.msra.mxu0 0.0
      %1505 = vmatprep.subr.mxu0 0.0
      %1506 = vmatpush1.msra.mxu0 0.0
      %1507 = vmatprep.subr.mxu0 0.0
      %1508 = vmatpush1.msra.mxu0 0.0
      %1509 = vmatprep.subr.mxu0 0.0
      %1510 = vmatpush1.msra.mxu0 0.0
      %1511 = vmatprep.subr.mxu0 0.0
      %1512 = vmatpush1.msra.mxu0 0.0
      %1513 = vmatprep.subr.mxu0 0.0
      %1514 = vmatpush1.msra.mxu0 0.0
      %1515 = vmatprep.subr.mxu0 0.0
      %1516 = vmatpush1.msra.mxu0 0.0
      %1517 = vmatprep.subr.mxu0 0.0
      %1518 = vmatpush1.msra.mxu0 0.0
      %1519 = vmatprep.subr.mxu0 0.0
      %1520 = vmatpush1.msra.mxu0 0.0
      %1521 = vmatprep.subr.mxu0 0.0
      %1522 = vmatpush1.msra.mxu0 0.0
      %1523 = vmatprep.subr.mxu0 0.0
      %1524 = vmatpush1.msra.mxu0 0.0
      %1525 = vmatprep.subr.mxu0 0.0
      %1526 = vmatpush1.msra.mxu0 0.0
      %1527 = vmatprep.subr.mxu0 0.0
      %1528 = vmatpush1.msra.mxu0 0.0
      %1529 = vmatprep.subr.mxu0 0.0
      %1530 = vmatpush1.msra.mxu0 0.0
      %1531 = vmatprep.subr.mxu0 0.0
      %1532 = vmatpush1.msra.mxu0 0.0
      %1533 = vmatprep.subr.mxu0 0.0
      %1534 = vmatpush1.msra.mxu0 0.0
      %1535 = vmatprep.subr.mxu0 0.0
      %1536 = vmatpush1.msra.mxu0 0.0
      %1537 = vmatprep.subr.mxu0 0.0
      %1538 = vmatpush1.msra.mxu0 0.0
      %1539 = vmatprep.subr.mxu0 0.0
      %1540 = vmatpush1.msra.mxu0 0.0
      %1541 = vmatprep.subr.mxu0 0.0
      %1542 = vmatpush1.msra.mxu0 0.0
      %1543 = vmatprep.subr.mxu0 0.0
      %1544 = vmatpush1.msra.mxu0 0.0
      %1545 = vmatprep.subr.mxu0 0.0
      %1546 = vmatpush1.msra.mxu0 0.0
      %1547 = vmatprep.subr.mxu0 0.0
      %1548 = vmatpush1.msra.mxu0 0.0
      %1549 = vmatprep.subr.mxu0 0.0
      %1550 = vmatpush1.msra.mxu0 0.0
      %1551 = vmatprep.subr.mxu0 0.0
      %1552 = vmatpush1.msra.mxu0 0.0
      %1553 = vmatprep.subr.mxu0 0.0
      %1554 = vmatpush1.msra.mxu0 0.0
      %1555 = vmatprep.mubr.f32.mxu0 0.0
      %1556 = vmatmul.mubr.f32.gmra.mrb[0].mxu0 %v1409
      %v1557 = vpop.f32.mrb[0].mxu0
      %v1558 = vadd.f32 0.0, %v1557
      %v1559 = vpop.f32.mrb[0].mxu0
      %v1560 = vadd.f32 0.0, %v1559
      %1561 = vdwg.mxu0
      %v1562 = vsub.f32 0.0, %v1487
      %v1563 = vsub.f32 0.0, %v1489
      %v1564 = vsub.f32 0.0, %v1558
      %v1565 = vsub.f32 0.0, %v1560
      %v1566 = vmul.f32 %v1562, 1.442695
      %v1567 = vpow.pop %v1566
      %v1568 = vmul.f32 %v1563, 1.442695
      %v1569 = vpow.pop %v1568
      %v1570 = vmul.f32 %v1564, 1.442695
      %v1571 = vpow.pop %v1570
      %v1572 = vmul.f32 %v1565, 1.442695
      %v1573 = vpow.pop %v1572
      %v1574 = vadd.f32 %v1567, 1.0
      %v1575 = vadd.f32 %v1569, 1.0
      %v1576 = vadd.f32 %v1571, 1.0
      %v1577 = vadd.f32 %v1573, 1.0
      %v1578 = vrcp.pop %v1574
      %v1579 = vmul.f32 1.0, %v1578
      %v1580 = vrcp.pop %v1575
      %v1581 = vmul.f32 1.0, %v1580
      %v1582 = vrcp.pop %v1576
      %v1583 = vmul.f32 1.0, %v1582
      %v1584 = vrcp.pop %v1577
      %v1585 = vmul.f32 1.0, %v1584
      %v1586 = vlaneseq
      %v1587 = vshrl.u32 %v1586, 7
      %v1588 = vsub.s32 0, %v1587
      %v1589 = vrot.slane %v1579, %v1588
      %v1590 = vlaneseq
      %v1591 = vshrl.u32 %v1590, 7
      %v1592 = vsub.s32 0, %v1591
      %v1593 = vrot.slane %v1581, %v1592
      %v1594 = vlaneseq
      %v1595 = vshrl.u32 %v1594, 7
      %v1596 = vsub.s32 0, %v1595
      %v1597 = vrot.slane %v1583, %v1596
      %v1598 = vlaneseq
      %v1599 = vshrl.u32 %v1598, 7
      %v1600 = vsub.s32 0, %v1599
      %v1601 = vrot.slane %v1585, %v1600
      %v1602 = vmul.f32 %v978, %v1589
      %v1603 = vmul.f32 %v980, %v1593
      %v1604 = vmul.f32 %v1091, %v1597
      %v1605 = vmul.f32 %v1093, %v1601
      %v1606 = vmul.f32 %v984, %v1589
      %v1607 = vmul.f32 %v986, %v1593
      %v1608 = vmul.f32 %v1097, %v1597
      %v1609 = vmul.f32 %v1099, %v1601
      %v1610 = vmul.f32 %v990, %v1589
      %v1611 = vmul.f32 %v992, %v1593
      %v1612 = vmul.f32 %v1103, %v1597
      %v1613 = vmul.f32 %v1105, %v1601
      %v1614 = vmul.f32 %v996, %v1589
      %v1615 = vmul.f32 %v998, %v1593
      %v1616 = vmul.f32 %v1109, %v1597
      %v1617 = vmul.f32 %v1111, %v1601
      %v1618 = vmul.f32 %v1002, %v1589
      %v1619 = vmul.f32 %v1004, %v1593
      %v1620 = vmul.f32 %v1115, %v1597
      %v1621 = vmul.f32 %v1117, %v1601
      %v1622 = vmul.f32 %v1008, %v1589
      %v1623 = vmul.f32 %v1010, %v1593
      %v1624 = vmul.f32 %v1121, %v1597
      %v1625 = vmul.f32 %v1123, %v1601
      %v1626 = vmul.f32 %v1014, %v1589
      %v1627 = vmul.f32 %v1016, %v1593
      %v1628 = vmul.f32 %v1127, %v1597
      %v1629 = vmul.f32 %v1129, %v1601
      %v1630 = vmul.f32 %v1020, %v1589
      %v1631 = vmul.f32 %v1022, %v1593
      %v1632 = vmul.f32 %v1133, %v1597
      %v1633 = vmul.f32 %v1135, %v1601
      %v1634 = vlaneseq
      %vm1635 = vcmp.ge.s32.totalorder %v1634, 0
      %vm1636 = vcmp.lt.s32.totalorder %v1634, 432
      %vm1637 = vmand %vm1635, %vm1636
      %1638 = vst.msk [vmem:[#allocation2] ss:$8 sm:$0xf] %vm1637, 0.0
      %1639 = vst.msk [vmem:[#allocation2] ss:$8 sm:$0x0] %vm1637, 0.0
      %s1640 = scalar_lea.vmem [#allocation2], 96
      %1641 = vst.msk [vmem:[%s1640] ss:$8 sm:$0xf] %vm1637, 0.0
      %1642 = vst.msk [vmem:[%s1640] ss:$8 sm:$0x0] %vm1637, 0.0
      %s1643 = scalar_lea.vmem [#allocation2], 192
      %1644 = vst.msk [vmem:[%s1643] ss:$8 sm:$0xf] %vm1637, 0.0
      %1645 = vst.msk [vmem:[%s1643] ss:$8 sm:$0x0] %vm1637, 0.0
      %s1646 = scalar_lea.vmem [#allocation2], 288
      %1647 = vst.msk [vmem:[%s1646] ss:$8 sm:$0xf] %vm1637, 0.0
      %1648 = vst.msk [vmem:[%s1646] ss:$8 sm:$0x0] %vm1637, 0.0
      %s1649 = scalar_lea.vmem [#allocation2], 65
      %1650 = vst.msk [vmem:[%s1649] ss:$8 sm:$0xf] %vm1637, 0.0
      %1651 = vst.msk [vmem:[%s1649] ss:$8 sm:$0x0] %vm1637, 0.0
      %s1652 = scalar_lea.vmem [#allocation2], 161
      %1653 = vst.msk [vmem:[%s1652] ss:$8 sm:$0xf] %vm1637, 0.0
      %1654 = vst.msk [vmem:[%s1652] ss:$8 sm:$0x0] %vm1637, 0.0
      %s1655 = scalar_lea.vmem [#allocation2], 257
      %1656 = vst.msk [vmem:[%s1655] ss:$8 sm:$0xf] %vm1637, 0.0
      %1657 = vst.msk [vmem:[%s1655] ss:$8 sm:$0x0] %vm1637, 0.0
      %s1658 = scalar_lea.vmem [#allocation2], 353
      %1659 = vst.msk [vmem:[%s1658] ss:$8 sm:$0xf] %vm1637, 0.0
      %1660 = vst.msk [vmem:[%s1658] ss:$8 sm:$0x0] %vm1637, 0.0
      %vm1693 = vcmask 1040384
      %v1694 = vrot.slane %v1602, 7
      %v1695 = vrot.slane %v1603, 7
      %v1696 = vrot.slane %v1604, 7
      %v1697 = vrot.slane %v1605, 7
      %v1698 = vrot.slane %v1606, 7
      %v1699 = vsel %vm1693, %v1694, %v1698
      %v1700 = vrot.slane %v1607, 7
      %v1701 = vsel %vm1693, %v1695, %v1700
      %v1702 = vrot.slane %v1608, 7
      %v1703 = vsel %vm1693, %v1696, %v1702
      %v1704 = vrot.slane %v1609, 7
      %v1705 = vsel %vm1693, %v1697, %v1704
      %v1706 = vrot.slane %v1610, 7
      %v1707 = vrot.slane %v1611, 7
      %v1708 = vrot.slane %v1612, 7
      %v1709 = vrot.slane %v1613, 7
      %v1710 = vrot.slane %v1614, 7
      %v1711 = vsel %vm1693, %v1706, %v1710
      %v1712 = vrot.slane %v1615, 7
      %v1713 = vsel %vm1693, %v1707, %v1712
      %v1714 = vrot.slane %v1616, 7
      %v1715 = vsel %vm1693, %v1708, %v1714
      %v1716 = vrot.slane %v1617, 7
      %v1717 = vsel %vm1693, %v1709, %v1716
      %v1718 = vrot.slane %v1618, 7
      %v1719 = vrot.slane %v1619, 7
      %v1720 = vrot.slane %v1620, 7
      %v1721 = vrot.slane %v1621, 7
      %v1722 = vrot.slane %v1622, 7
      %v1723 = vsel %vm1693, %v1718, %v1722
      %v1724 = vrot.slane %v1623, 7
      %v1725 = vsel %vm1693, %v1719, %v1724
      %v1726 = vrot.slane %v1624, 7
      %v1727 = vsel %vm1693, %v1720, %v1726
      %v1728 = vrot.slane %v1625, 7
      %v1729 = vsel %vm1693, %v1721, %v1728
      %v1730 = vrot.slane %v1626, 7
      %v1731 = vrot.slane %v1627, 7
      %v1732 = vrot.slane %v1628, 7
      %v1733 = vrot.slane %v1629, 7
      %v1734 = vrot.slane %v1630, 7
      %v1735 = vsel %vm1693, %v1730, %v1734
      %v1736 = vrot.slane %v1631, 7
      %v1737 = vsel %vm1693, %v1731, %v1736
      %v1738 = vrot.slane %v1632, 7
      %v1739 = vsel %vm1693, %v1732, %v1738
      %v1740 = vrot.slane %v1633, 7
      %v1741 = vsel %vm1693, %v1733, %v1740
      %1790 = vst [vmem:[#allocation2] sm:$0xfe] %v1694
      %1791 = vst [vmem:[#allocation2 + $0x8] sm:$0xfe] %v1695
      %1792 = vst [vmem:[#allocation2 + $0x10] sm:$0xfe] %v1696
      %vm1793 = vcmask 392193
      %1794 = vst.msk [vmem:[#allocation2 + $0x18] sm:$0xfe] %vm1793, %v1697
      %1795 = vst [vmem:[#allocation2 + $0x20] sm:$0xff] %v1699
      %1796 = vst [vmem:[#allocation2 + $0x28] sm:$0xff] %v1701
      %1797 = vst [vmem:[#allocation2 + $0x30] sm:$0xff] %v1703
      %1798 = vst.msk [vmem:[#allocation2 + $0x38] sm:$0xff] %vm1176, %v1705
      %1799 = vst [vmem:[#allocation2 + $0x40] sm:$0x1] %v1698
      %1800 = vst [vmem:[#allocation2 + $0x48] sm:$0x1] %v1700
      %1801 = vst [vmem:[#allocation2 + $0x50] sm:$0x1] %v1702
      %vm1802 = vcmask 385024
      %1803 = vst.msk [vmem:[#allocation2 + $0x58] sm:$0x1] %vm1802, %v1704
      %1804 = vst [vmem:[#allocation2 + $0x60] sm:$0xfe] %v1706
      %1805 = vst [vmem:[#allocation2 + $0x68] sm:$0xfe] %v1707
      %1806 = vst [vmem:[#allocation2 + $0x70] sm:$0xfe] %v1708
      %1807 = vst.msk [vmem:[#allocation2 + $0x78] sm:$0xfe] %vm1793, %v1709
      %1808 = vst [vmem:[#allocation2 + $0x80] sm:$0xff] %v1711
      %1809 = vst [vmem:[#allocation2 + $0x88] sm:$0xff] %v1713
      %1810 = vst [vmem:[#allocation2 + $0x90] sm:$0xff] %v1715
      %1811 = vst.msk [vmem:[#allocation2 + $0x98] sm:$0xff] %vm1176, %v1717
      %1812 = vst [vmem:[#allocation2 + $0xa0] sm:$0x1] %v1710
      %1813 = vst [vmem:[#allocation2 + $0xa8] sm:$0x1] %v1712
      %1814 = vst [vmem:[#allocation2 + $0xb0] sm:$0x1] %v1714
      %1815 = vst.msk [vmem:[#allocation2 + $0xb8] sm:$0x1] %vm1802, %v1716
      %1816 = vst [vmem:[#allocation2 + $0xc0] sm:$0xfe] %v1718
      %1817 = vst [vmem:[#allocation2 + $0xc8] sm:$0xfe] %v1719
      %1818 = vst [vmem:[#allocation2 + $0xd0] sm:$0xfe] %v1720
      %1819 = vst.msk [vmem:[#allocation2 + $0xd8] sm:$0xfe] %vm1793, %v1721
      %1820 = vst [vmem:[#allocation2 + $0xe0] sm:$0xff] %v1723
      %1821 = vst [vmem:[#allocation2 + $0xe8] sm:$0xff] %v1725
      %1822 = vst [vmem:[#allocation2 + $0xf0] sm:$0xff] %v1727
      %1823 = vst.msk [vmem:[#allocation2 + $0xf8] sm:$0xff] %vm1176, %v1729
      %1824 = vst [vmem:[#allocation2 + $0x100] sm:$0x1] %v1722
      %1825 = vst [vmem:[#allocation2 + $0x108] sm:$0x1] %v1724
      %1826 = vst [vmem:[#allocation2 + $0x110] sm:$0x1] %v1726
      %1827 = vst.msk [vmem:[#allocation2 + $0x118] sm:$0x1] %vm1802, %v1728
      %1828 = vst [vmem:[#allocation2 + $0x120] sm:$0xfe] %v1730
      %1829 = vst [vmem:[#allocation2 + $0x128] sm:$0xfe] %v1731
      %1830 = vst [vmem:[#allocation2 + $0x130] sm:$0xfe] %v1732
      %1831 = vst.msk [vmem:[#allocation2 + $0x138] sm:$0xfe] %vm1793, %v1733
      %1832 = vst [vmem:[#allocation2 + $0x140] sm:$0xff] %v1735
      %1833 = vst [vmem:[#allocation2 + $0x148] sm:$0xff] %v1737
      %1834 = vst [vmem:[#allocation2 + $0x150] sm:$0xff] %v1739
      %1835 = vst.msk [vmem:[#allocation2 + $0x158] sm:$0xff] %vm1176, %v1741
      %1836 = vst [vmem:[#allocation2 + $0x160] sm:$0x1] %v1734
      %1837 = vst [vmem:[#allocation2 + $0x168] sm:$0x1] %v1736
      %1838 = vst [vmem:[#allocation2 + $0x170] sm:$0x1] %v1738
      %1839 = vst.msk [vmem:[#allocation2 + $0x178] sm:$0x1] %vm1802, %v1740
      %v1840 = vld [vmem:[#allocation2] sm:$0xff]
      %v1841 = vld [vmem:[#allocation2 + $0x8] sm:$0xff]
      %v1842 = vld [vmem:[#allocation2 + $0x10] sm:$0xff]
      %v1843 = vld [vmem:[#allocation2 + $0x18] sm:$0xff]
      %v1844 = vld [vmem:[#allocation2 + $0x20] sm:$0xff]
      %v1845 = vld [vmem:[#allocation2 + $0x28] sm:$0xff]
      %v1846 = vld [vmem:[#allocation2 + $0x30] sm:$0xff]
      %v1847 = vld [vmem:[#allocation2 + $0x38] sm:$0xff]
      %v1848 = vld [vmem:[#allocation2 + $0x60] sm:$0xff]
      %v1849 = vld [vmem:[#allocation2 + $0x68] sm:$0xff]
      %v1850 = vld [vmem:[#allocation2 + $0x70] sm:$0xff]
      %v1851 = vld [vmem:[#allocation2 + $0x78] sm:$0xff]
      %v1852 = vld [vmem:[#allocation2 + $0x80] sm:$0xff]
      %v1853 = vld [vmem:[#allocation2 + $0x88] sm:$0xff]
      %v1854 = vld [vmem:[#allocation2 + $0x90] sm:$0xff]
      %v1855 = vld [vmem:[#allocation2 + $0x98] sm:$0xff]
      %v1856 = vld [vmem:[#allocation2 + $0xc0] sm:$0xff]
      %v1857 = vld [vmem:[#allocation2 + $0xc8] sm:$0xff]
      %v1858 = vld [vmem:[#allocation2 + $0xd0] sm:$0xff]
      %v1859 = vld [vmem:[#allocation2 + $0xd8] sm:$0xff]
      %v1860 = vld [vmem:[#allocation2 + $0xe0] sm:$0xff]
      %v1861 = vld [vmem:[#allocation2 + $0xe8] sm:$0xff]
      %v1862 = vld [vmem:[#allocation2 + $0xf0] sm:$0xff]
      %v1863 = vld [vmem:[#allocation2 + $0xf8] sm:$0xff]
      %v1864 = vld [vmem:[#allocation2 + $0x120] sm:$0xff]
      %v1865 = vld [vmem:[#allocation2 + $0x128] sm:$0xff]
      %v1866 = vld [vmem:[#allocation2 + $0x130] sm:$0xff]
      %v1867 = vld [vmem:[#allocation2 + $0x138] sm:$0xff]
      %v1868 = vld [vmem:[#allocation2 + $0x140] sm:$0xff]
      %v1869 = vld [vmem:[#allocation2 + $0x148] sm:$0xff]
      %v1870 = vld [vmem:[#allocation2 + $0x150] sm:$0xff]
      %v1871 = vld [vmem:[#allocation2 + $0x158] sm:$0xff]
      %v1872 = vld [vmem:[%s7] sm:$0xff]
      %v1873 = vld [vmem:[%s7 + $0x8] sm:$0xff]
      %v1874 = vld [vmem:[%s7 + $0x10] sm:$0xff]
      %v1875 = vld [vmem:[%s7 + $0x18] sm:$0xff]
      %v1876 = vld [vmem:[%s7 + $0x20] sm:$0xff]
      %v1877 = vld [vmem:[%s7 + $0x28] sm:$0xff]
      %v1878 = vld [vmem:[%s7 + $0x30] sm:$0xff]
      %v1879 = vld [vmem:[%s7 + $0x38] sm:$0xff]
      %v1880 = vld [vmem:[%s7 + $0x40] sm:$0xff]
      %v1881 = vld [vmem:[%s7 + $0x48] sm:$0xff]
      %v1882 = vld [vmem:[%s7 + $0x50] sm:$0xff]
      %v1883 = vld [vmem:[%s7 + $0x58] sm:$0xff]
      %v1884 = vld [vmem:[%s7 + $0x60] sm:$0xff]
      %v1885 = vld [vmem:[%s7 + $0x68] sm:$0xff]
      %v1886 = vld [vmem:[%s7 + $0x70] sm:$0xff]
      %v1887 = vld [vmem:[%s7 + $0x78] sm:$0xff]
      %v1888 = vld [vmem:[%s7 + $0x80] sm:$0xff]
      %v1889 = vld [vmem:[%s7 + $0x88] sm:$0xff]
      %v1890 = vld [vmem:[%s7 + $0x90] sm:$0xff]
      %v1891 = vld [vmem:[%s7 + $0x98] sm:$0xff]
      %v1892 = vld [vmem:[%s7 + $0xa0] sm:$0xff]
      %v1893 = vld [vmem:[%s7 + $0xa8] sm:$0xff]
      %v1894 = vld [vmem:[%s7 + $0xb0] sm:$0xff]
      %v1895 = vld [vmem:[%s7 + $0xb8] sm:$0xff]
      %v1896 = vld [vmem:[%s7 + $0xc0] sm:$0xff]
      %v1897 = vld [vmem:[%s7 + $0xc8] sm:$0xff]
      %v1898 = vld [vmem:[%s7 + $0xd0] sm:$0xff]
      %v1899 = vld [vmem:[%s7 + $0xd8] sm:$0xff]
      %v1900 = vld [vmem:[%s7 + $0xe0] sm:$0xff]
      %v1901 = vld [vmem:[%s7 + $0xe8] sm:$0xff]
      %v1902 = vld [vmem:[%s7 + $0xf0] sm:$0xff]
      %v1903 = vld [vmem:[%s7 + $0xf8] sm:$0xff]
      %v1904 = vld [vmem:[%s7 + $0x100] sm:$0xff]
      %v1905 = vld [vmem:[%s7 + $0x108] sm:$0xff]
      %v1906 = vld [vmem:[%s7 + $0x110] sm:$0xff]
      %v1907 = vld [vmem:[%s7 + $0x118] sm:$0xff]
      %v1908 = vld [vmem:[%s7 + $0x120] sm:$0xff]
      %v1909 = vld [vmem:[%s7 + $0x128] sm:$0xff]
      %v1910 = vld [vmem:[%s7 + $0x130] sm:$0xff]
      %v1911 = vld [vmem:[%s7 + $0x138] sm:$0xff]
      %v1912 = vld [vmem:[%s7 + $0x140] sm:$0xff]
      %v1913 = vld [vmem:[%s7 + $0x148] sm:$0xff]
      %v1914 = vld [vmem:[%s7 + $0x150] sm:$0xff]
      %v1915 = vld [vmem:[%s7 + $0x158] sm:$0xff]
      %v1916 = vld [vmem:[%s7 + $0x160] sm:$0xff]
      %v1917 = vld [vmem:[%s7 + $0x168] sm:$0xff]
      %v1918 = vld [vmem:[%s7 + $0x170] sm:$0xff]
      %v1919 = vld [vmem:[%s7 + $0x178] sm:$0xff]
      %v1920 = vld [vmem:[%s7 + $0x180] sm:$0xff]
      %v1921 = vld [vmem:[%s7 + $0x188] sm:$0xff]
      %v1922 = vld [vmem:[%s7 + $0x190] sm:$0xff]
      %v1923 = vld [vmem:[%s7 + $0x198] sm:$0xff]
      %v1924 = vld [vmem:[%s7 + $0x1a0] sm:$0xff]
      %v1925 = vld [vmem:[%s7 + $0x1a8] sm:$0xff]
      %v1926 = vld [vmem:[%s7 + $0x1b0] sm:$0xff]
      %v1927 = vld [vmem:[%s7 + $0x1b8] sm:$0xff]
      %v1928 = vld [vmem:[%s7 + $0x1c0] sm:$0xff]
      %v1929 = vld [vmem:[%s7 + $0x1c8] sm:$0xff]
      %v1930 = vld [vmem:[%s7 + $0x1d0] sm:$0xff]
      %v1931 = vld [vmem:[%s7 + $0x1d8] sm:$0xff]
      %v1932 = vld [vmem:[%s7 + $0x1e0] sm:$0xff]
      %v1933 = vld [vmem:[%s7 + $0x1e8] sm:$0xff]
      %v1934 = vld [vmem:[%s7 + $0x1f0] sm:$0xff]
      %v1935 = vld [vmem:[%s7 + $0x1f8] sm:$0xff]
      %v1936 = vld [vmem:[%s7 + $0x200] sm:$0xff]
      %v1937 = vld [vmem:[%s7 + $0x208] sm:$0xff]
      %v1938 = vld [vmem:[%s7 + $0x210] sm:$0xff]
      %v1939 = vld [vmem:[%s7 + $0x218] sm:$0xff]
      %v1940 = vld [vmem:[%s7 + $0x220] sm:$0xff]
      %v1941 = vld [vmem:[%s7 + $0x228] sm:$0xff]
      %v1942 = vld [vmem:[%s7 + $0x230] sm:$0xff]
      %v1943 = vld [vmem:[%s7 + $0x238] sm:$0xff]
      %v1944 = vld [vmem:[%s7 + $0x240] sm:$0xff]
      %v1945 = vld [vmem:[%s7 + $0x248] sm:$0xff]
      %v1946 = vld [vmem:[%s7 + $0x250] sm:$0xff]
      %v1947 = vld [vmem:[%s7 + $0x258] sm:$0xff]
      %v1948 = vld [vmem:[%s7 + $0x260] sm:$0xff]
      %v1949 = vld [vmem:[%s7 + $0x268] sm:$0xff]
      %v1950 = vld [vmem:[%s7 + $0x270] sm:$0xff]
      %v1951 = vld [vmem:[%s7 + $0x278] sm:$0xff]
      %v1952 = vld [vmem:[%s7 + $0x280] sm:$0xff]
      %v1953 = vld [vmem:[%s7 + $0x288] sm:$0xff]
      %v1954 = vld [vmem:[%s7 + $0x290] sm:$0xff]
      %v1955 = vld [vmem:[%s7 + $0x298] sm:$0xff]
      %v1956 = vld [vmem:[%s7 + $0x2a0] sm:$0xff]
      %v1957 = vld [vmem:[%s7 + $0x2a8] sm:$0xff]
      %v1958 = vld [vmem:[%s7 + $0x2b0] sm:$0xff]
      %v1959 = vld [vmem:[%s7 + $0x2b8] sm:$0xff]
      %v1960 = vld [vmem:[%s7 + $0x2c0] sm:$0xff]
      %v1961 = vld [vmem:[%s7 + $0x2c8] sm:$0xff]
      %v1962 = vld [vmem:[%s7 + $0x2d0] sm:$0xff]
      %v1963 = vld [vmem:[%s7 + $0x2d8] sm:$0xff]
      %v1964 = vld [vmem:[%s7 + $0x2e0] sm:$0xff]
      %v1965 = vld [vmem:[%s7 + $0x2e8] sm:$0xff]
      %v1966 = vld [vmem:[%s7 + $0x2f0] sm:$0xff]
      %v1967 = vld [vmem:[%s7 + $0x2f8] sm:$0xff]
      %v1968 = vld [vmem:[%s7 + $0x300] sm:$0xff]
      %v1969 = vld [vmem:[%s7 + $0x308] sm:$0xff]
      %v1970 = vld [vmem:[%s7 + $0x310] sm:$0xff]
      %v1971 = vld [vmem:[%s7 + $0x318] sm:$0xff]
      %v1972 = vld [vmem:[%s7 + $0x320] sm:$0xff]
      %v1973 = vld [vmem:[%s7 + $0x328] sm:$0xff]
      %v1974 = vld [vmem:[%s7 + $0x330] sm:$0xff]
      %v1975 = vld [vmem:[%s7 + $0x338] sm:$0xff]
      %v1976 = vld [vmem:[%s7 + $0x340] sm:$0xff]
      %v1977 = vld [vmem:[%s7 + $0x348] sm:$0xff]
      %v1978 = vld [vmem:[%s7 + $0x350] sm:$0xff]
      %v1979 = vld [vmem:[%s7 + $0x358] sm:$0xff]
      %v1980 = vld [vmem:[%s8] sm:$0x3]
      %v1982 = vlaneseq
      %v1983 = vshrl.u32 %v1982, 7
      %v1984 = vsub.s32 0, %v1983
      %v1985 = vrot.slane %v1980, %v1984
      %v1986 = vlaneseq
      %v1987 = vshrl.u32 %v1986, 7
      %v1988 = vsub.s32 1, %v1987
      %v1989 = vrot.slane %v1980, %v1988
      %v1993 = vsel %vm1176, %v1843, 0
      %v1996 = vsel %vm1176, %v1847, 0
      %v1999 = vsel %vm1176, %v1851, 0
      %v2002 = vsel %vm1176, %v1855, 0
      %v2005 = vsel %vm1176, %v1859, 0
      %v2008 = vsel %vm1176, %v1863, 0
      %v2011 = vsel %vm1176, %v1867, 0
      %v2014 = vsel %vm1176, %v1871, 0
      %2016 = vmatprep.subr.mxu0 %v1873
      %2017 = vmatpush1.msra.mxu0 %v1872
      %2018 = vmatprep.subr.mxu0 %v1875
      %2019 = vmatpush1.msra.mxu0 %v1874
      %2020 = vmatprep.subr.mxu0 %v1877
      %2021 = vmatpush1.msra.mxu0 %v1876
      %2022 = vmatprep.subr.mxu0 %v1879
      %2023 = vmatpush1.msra.mxu0 %v1878
      %2024 = vmatprep.subr.mxu0 %v1881
      %2025 = vmatpush1.msra.mxu0 %v1880
      %2026 = vmatprep.subr.mxu0 %v1883
      %2027 = vmatpush1.msra.mxu0 %v1882
      %2028 = vmatprep.subr.mxu0 %v1885
      %2029 = vmatpush1.msra.mxu0 %v1884
      %2030 = vmatprep.subr.mxu0 %v1887
      %2031 = vmatpush1.msra.mxu0 %v1886
      %2032 = vmatprep.subr.mxu0 %v1889
      %2033 = vmatpush1.msra.mxu0 %v1888
      %2034 = vmatprep.subr.mxu0 %v1891
      %2035 = vmatpush1.msra.mxu0 %v1890
      %2036 = vmatprep.subr.mxu0 %v1893
      %2037 = vmatpush1.msra.mxu0 %v1892
      %2038 = vmatprep.subr.mxu0 %v1895
      %2039 = vmatpush1.msra.mxu0 %v1894
      %2040 = vmatprep.subr.mxu0 %v1897
      %2041 = vmatpush1.msra.mxu0 %v1896
      %2042 = vmatprep.subr.mxu0 %v1899
      %2043 = vmatpush1.msra.mxu0 %v1898
      %2044 = vmatprep.subr.mxu0 %v1901
      %2045 = vmatpush1.msra.mxu0 %v1900
      %2046 = vmatprep.subr.mxu0 %v1903
      %2047 = vmatpush1.msra.mxu0 %v1902
      %2048 = vmatprep.subr.mxu0 %v1905
      %2049 = vmatpush1.msra.mxu0 %v1904
      %2050 = vmatprep.subr.mxu0 %v1907
      %2051 = vmatpush1.msra.mxu0 %v1906
      %2052 = vmatprep.subr.mxu0 %v1909
      %2053 = vmatpush1.msra.mxu0 %v1908
      %2054 = vmatprep.subr.mxu0 %v1911
      %2055 = vmatpush1.msra.mxu0 %v1910
      %2056 = vmatprep.subr.mxu0 %v1913
      %2057 = vmatpush1.msra.mxu0 %v1912
      %2058 = vmatprep.subr.mxu0 %v1915
      %2059 = vmatpush1.msra.mxu0 %v1914
      %2060 = vmatprep.subr.mxu0 %v1917
      %2061 = vmatpush1.msra.mxu0 %v1916
      %2062 = vmatprep.subr.mxu0 %v1919
      %2063 = vmatpush1.msra.mxu0 %v1918
      %2064 = vmatprep.subr.mxu0 %v1921
      %2065 = vmatpush1.msra.mxu0 %v1920
      %2066 = vmatprep.subr.mxu0 %v1923
      %2067 = vmatpush1.msra.mxu0 %v1922
      %2068 = vmatprep.subr.mxu0 %v1925
      %2069 = vmatpush1.msra.mxu0 %v1924
      %2070 = vmatprep.subr.mxu0 %v1927
      %2071 = vmatpush1.msra.mxu0 %v1926
      %2072 = vmatprep.subr.mxu0 %v1929
      %2073 = vmatpush1.msra.mxu0 %v1928
      %2074 = vmatprep.subr.mxu0 %v1931
      %2075 = vmatpush1.msra.mxu0 %v1930
      %2076 = vmatprep.subr.mxu0 %v1933
      %2077 = vmatpush1.msra.mxu0 %v1932
      %2078 = vmatprep.subr.mxu0 %v1935
      %2079 = vmatpush1.msra.mxu0 %v1934
      %2080 = vmatprep.mubr.f32.mxu0 %v1841
      %2081 = vmatmul.mubr.f32.gmra.mrb[0].mxu0 %v1840
      %v2082 = vpop.f32.mrb[0].mxu0
      %v2083 = vadd.f32 %v1985, %v2082
      %v2084 = vpop.f32.mrb[0].mxu0
      %v2085 = vadd.f32 %v1989, %v2084
      %2086 = vmatprep.mubr.f32.mxu0 %v1845
      %2087 = vmatmul.mubr.f32.gmra.mrb[0].mxu0 %v1844
      %v2088 = vpop.f32.mrb[0].mxu0
      %v2089 = vadd.f32 %v1985, %v2088
      %v2090 = vpop.f32.mrb[0].mxu0
      %v2091 = vadd.f32 %v1989, %v2090
      %2092 = vmatprep.mubr.f32.mxu0 %v1849
      %2093 = vmatmul.mubr.f32.gmra.mrb[0].mxu0 %v1848
      %v2094 = vpop.f32.mrb[0].mxu0
      %v2095 = vadd.f32 %v1985, %v2094
      %v2096 = vpop.f32.mrb[0].mxu0
      %v2097 = vadd.f32 %v1989, %v2096
      %2098 = vmatprep.mubr.f32.mxu0 %v1853
      %2099 = vmatmul.mubr.f32.gmra.mrb[0].mxu0 %v1852
      %v2100 = vpop.f32.mrb[0].mxu0
      %v2101 = vadd.f32 %v1985, %v2100
      %v2102 = vpop.f32.mrb[0].mxu0
      %v2103 = vadd.f32 %v1989, %v2102
      %2104 = vmatprep.mubr.f32.mxu0 %v1857
      %2105 = vmatmul.mubr.f32.gmra.mrb[0].mxu0 %v1856
      %v2106 = vpop.f32.mrb[0].mxu0
      %v2107 = vadd.f32 %v1985, %v2106
      %v2108 = vpop.f32.mrb[0].mxu0
      %v2109 = vadd.f32 %v1989, %v2108
      %2110 = vmatprep.mubr.f32.mxu0 %v1861
      %2111 = vmatmul.mubr.f32.gmra.mrb[0].mxu0 %v1860
      %v2112 = vpop.f32.mrb[0].mxu0
      %v2113 = vadd.f32 %v1985, %v2112
      %v2114 = vpop.f32.mrb[0].mxu0
      %v2115 = vadd.f32 %v1989, %v2114
      %2116 = vmatprep.mubr.f32.mxu0 %v1865
      %2117 = vmatmul.mubr.f32.gmra.mrb[0].mxu0 %v1864
      %v2118 = vpop.f32.mrb[0].mxu0
      %v2119 = vadd.f32 %v1985, %v2118
      %v2120 = vpop.f32.mrb[0].mxu0
      %v2121 = vadd.f32 %v1989, %v2120
      %2122 = vmatprep.mubr.f32.mxu0 %v1869
      %2123 = vmatmul.mubr.f32.gmra.mrb[0].mxu0 %v1868
      %v2124 = vpop.f32.mrb[0].mxu0
      %v2125 = vadd.f32 %v1985, %v2124
      %v2126 = vpop.f32.mrb[0].mxu0
      %v2127 = vadd.f32 %v1989, %v2126
      %2128 = vdwg.mxu0
      %2129 = vmatprep.subr.mxu0 %v1937
      %2130 = vmatpush1.msra.mxu0 %v1936
      %2131 = vmatprep.subr.mxu0 %v1939
      %2132 = vmatpush1.msra.mxu0 %v1938
      %2133 = vmatprep.subr.mxu0 %v1941
      %2134 = vmatpush1.msra.mxu0 %v1940
      %2135 = vmatprep.subr.mxu0 %v1943
      %2136 = vmatpush1.msra.mxu0 %v1942
      %2137 = vmatprep.subr.mxu0 %v1945
      %2138 = vmatpush1.msra.mxu0 %v1944
      %2139 = vmatprep.subr.mxu0 %v1947
      %2140 = vmatpush1.msra.mxu0 %v1946
      %2141 = vmatprep.subr.mxu0 %v1949
      %2142 = vmatpush1.msra.mxu0 %v1948
      %2143 = vmatprep.subr.mxu0 %v1951
      %2144 = vmatpush1.msra.mxu0 %v1950
      %2145 = vmatprep.subr.mxu0 %v1953
      %2146 = vmatpush1.msra.mxu0 %v1952
      %2147 = vmatprep.subr.mxu0 %v1955
      %2148 = vmatpush1.msra.mxu0 %v1954
      %2149 = vmatprep.subr.mxu0 %v1957
      %2150 = vmatpush1.msra.mxu0 %v1956
      %2151 = vmatprep.subr.mxu0 %v1959
      %2152 = vmatpush1.msra.mxu0 %v1958
      %2153 = vmatprep.subr.mxu0 %v1961
      %2154 = vmatpush1.msra.mxu0 %v1960
      %2155 = vmatprep.subr.mxu0 %v1963
      %2156 = vmatpush1.msra.mxu0 %v1962
      %2157 = vmatprep.subr.mxu0 %v1965
      %2158 = vmatpush1.msra.mxu0 %v1964
      %2159 = vmatprep.subr.mxu0 %v1967
      %2160 = vmatpush1.msra.mxu0 %v1966
      %2161 = vmatprep.subr.mxu0 %v1969
      %2162 = vmatpush1.msra.mxu0 %v1968
      %2163 = vmatprep.subr.mxu0 %v1971
      %2164 = vmatpush1.msra.mxu0 %v1970
      %2165 = vmatprep.subr.mxu0 %v1973
      %2166 = vmatpush1.msra.mxu0 %v1972
      %2167 = vmatprep.subr.mxu0 %v1975
      %2168 = vmatpush1.msra.mxu0 %v1974
      %2169 = vmatprep.subr.mxu0 %v1977
      %2170 = vmatpush1.msra.mxu0 %v1976
      %2171 = vmatprep.subr.mxu0 %v1979
      %2172 = vmatpush1.msra.mxu0 %v1978
      %2173 = vmatprep.subr.mxu0 0.0
      %2174 = vmatpush1.msra.mxu0 0.0
      %2175 = vmatprep.subr.mxu0 0.0
      %2176 = vmatpush1.msra.mxu0 0.0
      %2177 = vmatprep.subr.mxu0 0.0
      %2178 = vmatpush1.msra.mxu0 0.0
      %2179 = vmatprep.subr.mxu0 0.0
      %2180 = vmatpush1.msra.mxu0 0.0
      %2181 = vmatprep.subr.mxu0 0.0
      %2182 = vmatpush1.msra.mxu0 0.0
      %2183 = vmatprep.subr.mxu0 0.0
      %2184 = vmatpush1.msra.mxu0 0.0
      %2185 = vmatprep.subr.mxu0 0.0
      %2186 = vmatpush1.msra.mxu0 0.0
      %2187 = vmatprep.subr.mxu0 0.0
      %2188 = vmatpush1.msra.mxu0 0.0
      %2189 = vmatprep.subr.mxu0 0.0
      %2190 = vmatpush1.msra.mxu0 0.0
      %2191 = vmatprep.subr.mxu0 0.0
      %2192 = vmatpush1.msra.mxu0 0.0
      %2193 = vmatprep.mubr.f32.mxu0 %v1993
      %2194 = vmatmul.mubr.f32.gmra.mrb[0].mxu0 %v1842
      %v2195 = vpop.f32.mrb[0].mxu0
      %v2196 = vadd.f32 %v2083, %v2195
      %v2197 = vpop.f32.mrb[0].mxu0
      %v2198 = vadd.f32 %v2085, %v2197
      %2199 = vmatprep.mubr.f32.mxu0 %v1996
      %2200 = vmatmul.mubr.f32.gmra.mrb[0].mxu0 %v1846
      %v2201 = vpop.f32.mrb[0].mxu0
      %v2202 = vadd.f32 %v2089, %v2201
      %v2203 = vpop.f32.mrb[0].mxu0
      %v2204 = vadd.f32 %v2091, %v2203
      %2205 = vmatprep.mubr.f32.mxu0 %v1999
      %2206 = vmatmul.mubr.f32.gmra.mrb[0].mxu0 %v1850
      %v2207 = vpop.f32.mrb[0].mxu0
      %v2208 = vadd.f32 %v2095, %v2207
      %v2209 = vpop.f32.mrb[0].mxu0
      %v2210 = vadd.f32 %v2097, %v2209
      %2211 = vmatprep.mubr.f32.mxu0 %v2002
      %2212 = vmatmul.mubr.f32.gmra.mrb[0].mxu0 %v1854
      %v2213 = vpop.f32.mrb[0].mxu0
      %v2214 = vadd.f32 %v2101, %v2213
      %v2215 = vpop.f32.mrb[0].mxu0
      %v2216 = vadd.f32 %v2103, %v2215
      %2217 = vmatprep.mubr.f32.mxu0 %v2005
      %2218 = vmatmul.mubr.f32.gmra.mrb[0].mxu0 %v1858
      %v2219 = vpop.f32.mrb[0].mxu0
      %v2220 = vadd.f32 %v2107, %v2219
      %v2221 = vpop.f32.mrb[0].mxu0
      %v2222 = vadd.f32 %v2109, %v2221
      %2223 = vmatprep.mubr.f32.mxu0 %v2008
      %2224 = vmatmul.mubr.f32.gmra.mrb[0].mxu0 %v1862
      %v2225 = vpop.f32.mrb[0].mxu0
      %v2226 = vadd.f32 %v2113, %v2225
      %v2227 = vpop.f32.mrb[0].mxu0
      %v2228 = vadd.f32 %v2115, %v2227
      %2229 = vmatprep.mubr.f32.mxu0 %v2011
      %2230 = vmatmul.mubr.f32.gmra.mrb[0].mxu0 %v1866
      %v2231 = vpop.f32.mrb[0].mxu0
      %v2232 = vadd.f32 %v2119, %v2231
      %v2233 = vpop.f32.mrb[0].mxu0
      %v2234 = vadd.f32 %v2121, %v2233
      %2235 = vmatprep.mubr.f32.mxu0 %v2014
      %2236 = vmatmul.mubr.f32.gmra.mrb[0].mxu0 %v1870
      %v2237 = vpop.f32.mrb[0].mxu0
      %v2238 = vadd.f32 %v2125, %v2237
      %v2239 = vpop.f32.mrb[0].mxu0
      %v2240 = vadd.f32 %v2127, %v2239
      %2241 = vdwg.mxu0
      %v2242 = vld [vmem:[#allocation2] sm:$0xfe]
      %v2243 = vld [vmem:[#allocation2 + $0x8] sm:$0xfe]
      %v2244 = vld [vmem:[#allocation2 + $0x10] sm:$0xfe]
      %v2245 = vld [vmem:[#allocation2 + $0x18] sm:$0xfe]
      %v2246 = vld [vmem:[#allocation2 + $0x20] sm:$0xff]
      %v2247 = vld [vmem:[#allocation2 + $0x28] sm:$0xff]
      %v2248 = vld [vmem:[#allocation2 + $0x30] sm:$0xff]
      %v2249 = vld [vmem:[#allocation2 + $0x38] sm:$0xff]
      %v2250 = vld [vmem:[#allocation2 + $0x40] sm:$0x1]
      %v2251 = vld [vmem:[#allocation2 + $0x48] sm:$0x1]
      %v2252 = vld [vmem:[#allocation2 + $0x50] sm:$0x1]
      %v2253 = vld [vmem:[#allocation2 + $0x58] sm:$0x1]
      %v2254 = vld [vmem:[#allocation2 + $0x60] sm:$0xfe]
      %v2255 = vld [vmem:[#allocation2 + $0x68] sm:$0xfe]
      %v2256 = vld [vmem:[#allocation2 + $0x70] sm:$0xfe]
      %v2257 = vld [vmem:[#allocation2 + $0x78] sm:$0xfe]
      %v2258 = vld [vmem:[#allocation2 + $0x80] sm:$0xff]
      %v2259 = vld [vmem:[#allocation2 + $0x88] sm:$0xff]
      %v2260 = vld [vmem:[#allocation2 + $0x90] sm:$0xff]
      %v2261 = vld [vmem:[#allocation2 + $0x98] sm:$0xff]
      %v2262 = vld [vmem:[#allocation2 + $0xa0] sm:$0x1]
      %v2263 = vld [vmem:[#allocation2 + $0xa8] sm:$0x1]
      %v2264 = vld [vmem:[#allocation2 + $0xb0] sm:$0x1]
      %v2265 = vld [vmem:[#allocation2 + $0xb8] sm:$0x1]
      %v2266 = vld [vmem:[#allocation2 + $0xc0] sm:$0xfe]
      %v2267 = vld [vmem:[#allocation2 + $0xc8] sm:$0xfe]
      %v2268 = vld [vmem:[#allocation2 + $0xd0] sm:$0xfe]
      %v2269 = vld [vmem:[#allocation2 + $0xd8] sm:$0xfe]
      %v2270 = vld [vmem:[#allocation2 + $0xe0] sm:$0xff]
      %v2271 = vld [vmem:[#allocation2 + $0xe8] sm:$0xff]
      %v2272 = vld [vmem:[#allocation2 + $0xf0] sm:$0xff]
      %v2273 = vld [vmem:[#allocation2 + $0xf8] sm:$0xff]
      %v2274 = vld [vmem:[#allocation2 + $0x100] sm:$0x1]
      %v2275 = vld [vmem:[#allocation2 + $0x108] sm:$0x1]
      %v2276 = vld [vmem:[#allocation2 + $0x110] sm:$0x1]
      %v2277 = vld [vmem:[#allocation2 + $0x118] sm:$0x1]
      %v2278 = vld [vmem:[#allocation2 + $0x120] sm:$0xfe]
      %v2279 = vld [vmem:[#allocation2 + $0x128] sm:$0xfe]
      %v2280 = vld [vmem:[#allocation2 + $0x130] sm:$0xfe]
      %v2281 = vld [vmem:[#allocation2 + $0x138] sm:$0xfe]
      %v2282 = vld [vmem:[#allocation2 + $0x140] sm:$0xff]
      %v2283 = vld [vmem:[#allocation2 + $0x148] sm:$0xff]
      %v2284 = vld [vmem:[#allocation2 + $0x150] sm:$0xff]
      %v2285 = vld [vmem:[#allocation2 + $0x158] sm:$0xff]
      %v2286 = vld [vmem:[#allocation2 + $0x160] sm:$0x1]
      %v2287 = vld [vmem:[#allocation2 + $0x168] sm:$0x1]
      %v2288 = vld [vmem:[#allocation2 + $0x170] sm:$0x1]
      %v2289 = vld [vmem:[#allocation2 + $0x178] sm:$0x1]
      %vm2338 = vcmask 1046528
      %v2339 = vrot.slane %v2242, 1
      %v2340 = vrot.slane %v2246, 1
      %v2341 = vsel %vm2338, %v2339, %v2340
      %v2342 = vrot.slane %v2243, 1
      %v2343 = vrot.slane %v2247, 1
      %v2344 = vsel %vm2338, %v2342, %v2343
      %v2345 = vrot.slane %v2244, 1
      %v2346 = vrot.slane %v2248, 1
      %v2347 = vsel %vm2338, %v2345, %v2346
      %v2348 = vrot.slane %v2245, 1
      %v2349 = vrot.slane %v2249, 1
      %v2350 = vsel %vm2338, %v2348, %v2349
      %v2351 = vrot.slane %v2250, 1
      %v2352 = vsel %vm2338, %v2340, %v2351
      %v2353 = vrot.slane %v2251, 1
      %v2354 = vsel %vm2338, %v2343, %v2353
      %v2355 = vrot.slane %v2252, 1
      %v2356 = vsel %vm2338, %v2346, %v2355
      %v2357 = vrot.slane %v2253, 1
      %v2358 = vsel %vm2338, %v2349, %v2357
      %v2359 = vrot.slane %v2254, 1
      %v2360 = vrot.slane %v2258, 1
      %v2361 = vsel %vm2338, %v2359, %v2360
      %v2362 = vrot.slane %v2255, 1
      %v2363 = vrot.slane %v2259, 1
      %v2364 = vsel %vm2338, %v2362, %v2363
      %v2365 = vrot.slane %v2256, 1
      %v2366 = vrot.slane %v2260, 1
      %v2367 = vsel %vm2338, %v2365, %v2366
      %v2368 = vrot.slane %v2257, 1
      %v2369 = vrot.slane %v2261, 1
      %v2370 = vsel %vm2338, %v2368, %v2369
      %v2371 = vrot.slane %v2262, 1
      %v2372 = vsel %vm2338, %v2360, %v2371
      %v2373 = vrot.slane %v2263, 1
      %v2374 = vsel %vm2338, %v2363, %v2373
      %v2375 = vrot.slane %v2264, 1
      %v2376 = vsel %vm2338, %v2366, %v2375
      %v2377 = vrot.slane %v2265, 1
      %v2378 = vsel %vm2338, %v2369, %v2377
      %v2379 = vrot.slane %v2266, 1
      %v2380 = vrot.slane %v2270, 1
      %v2381 = vsel %vm2338, %v2379, %v2380
      %v2382 = vrot.slane %v2267, 1
      %v2383 = vrot.slane %v2271, 1
      %v2384 = vsel %vm2338, %v2382, %v2383
      %v2385 = vrot.slane %v2268, 1
      %v2386 = vrot.slane %v2272, 1
      %v2387 = vsel %vm2338, %v2385, %v2386
      %v2388 = vrot.slane %v2269, 1
      %v2389 = vrot.slane %v2273, 1
      %v2390 = vsel %vm2338, %v2388, %v2389
      %v2391 = vrot.slane %v2274, 1
      %v2392 = vsel %vm2338, %v2380, %v2391
      %v2393 = vrot.slane %v2275, 1
      %v2394 = vsel %vm2338, %v2383, %v2393
      %v2395 = vrot.slane %v2276, 1
      %v2396 = vsel %vm2338, %v2386, %v2395
      %v2397 = vrot.slane %v2277, 1
      %v2398 = vsel %vm2338, %v2389, %v2397
      %v2399 = vrot.slane %v2278, 1
      %v2400 = vrot.slane %v2282, 1
      %v2401 = vsel %vm2338, %v2399, %v2400
      %v2402 = vrot.slane %v2279, 1
      %v2403 = vrot.slane %v2283, 1
      %v2404 = vsel %vm2338, %v2402, %v2403
      %v2405 = vrot.slane %v2280, 1
      %v2406 = vrot.slane %v2284, 1
      %v2407 = vsel %vm2338, %v2405, %v2406
      %v2408 = vrot.slane %v2281, 1
      %v2409 = vrot.slane %v2285, 1
      %v2410 = vsel %vm2338, %v2408, %v2409
      %v2411 = vrot.slane %v2286, 1
      %v2412 = vsel %vm2338, %v2400, %v2411
      %v2413 = vrot.slane %v2287, 1
      %v2414 = vsel %vm2338, %v2403, %v2413
      %v2415 = vrot.slane %v2288, 1
      %v2416 = vsel %vm2338, %v2406, %v2415
      %v2417 = vrot.slane %v2289, 1
      %v2418 = vsel %vm2338, %v2409, %v2417
      %s2443 = scalar_lea.vmem %s7, 864
      %v2444 = vld [vmem:[%s2443] sm:$0xff]
      %v2445 = vld [vmem:[%s2443 + $0x8] sm:$0xff]
      %v2446 = vld [vmem:[%s2443 + $0x10] sm:$0xff]
      %v2447 = vld [vmem:[%s2443 + $0x18] sm:$0xff]
      %v2448 = vld [vmem:[%s2443 + $0x20] sm:$0xff]
      %v2449 = vld [vmem:[%s2443 + $0x28] sm:$0xff]
      %v2450 = vld [vmem:[%s2443 + $0x30] sm:$0xff]
      %v2451 = vld [vmem:[%s2443 + $0x38] sm:$0xff]
      %v2452 = vld [vmem:[%s2443 + $0x40] sm:$0xff]
      %v2453 = vld [vmem:[%s2443 + $0x48] sm:$0xff]
      %v2454 = vld [vmem:[%s2443 + $0x50] sm:$0xff]
      %v2455 = vld [vmem:[%s2443 + $0x58] sm:$0xff]
      %v2456 = vld [vmem:[%s2443 + $0x60] sm:$0xff]
      %v2457 = vld [vmem:[%s2443 + $0x68] sm:$0xff]
      %v2458 = vld [vmem:[%s2443 + $0x70] sm:$0xff]
      %v2459 = vld [vmem:[%s2443 + $0x78] sm:$0xff]
      %v2460 = vld [vmem:[%s2443 + $0x80] sm:$0xff]
      %v2461 = vld [vmem:[%s2443 + $0x88] sm:$0xff]
      %v2462 = vld [vmem:[%s2443 + $0x90] sm:$0xff]
      %v2463 = vld [vmem:[%s2443 + $0x98] sm:$0xff]
      %v2464 = vld [vmem:[%s2443 + $0xa0] sm:$0xff]
      %v2465 = vld [vmem:[%s2443 + $0xa8] sm:$0xff]
      %v2466 = vld [vmem:[%s2443 + $0xb0] sm:$0xff]
      %v2467 = vld [vmem:[%s2443 + $0xb8] sm:$0xff]
      %v2468 = vld [vmem:[%s2443 + $0xc0] sm:$0xff]
      %v2469 = vld [vmem:[%s2443 + $0xc8] sm:$0xff]
      %v2470 = vld [vmem:[%s2443 + $0xd0] sm:$0xff]
      %v2471 = vld [vmem:[%s2443 + $0xd8] sm:$0xff]
      %v2472 = vld [vmem:[%s2443 + $0xe0] sm:$0xff]
      %v2473 = vld [vmem:[%s2443 + $0xe8] sm:$0xff]
      %v2474 = vld [vmem:[%s2443 + $0xf0] sm:$0xff]
      %v2475 = vld [vmem:[%s2443 + $0xf8] sm:$0xff]
      %v2476 = vld [vmem:[%s2443 + $0x100] sm:$0xff]
      %v2477 = vld [vmem:[%s2443 + $0x108] sm:$0xff]
      %v2478 = vld [vmem:[%s2443 + $0x110] sm:$0xff]
      %v2479 = vld [vmem:[%s2443 + $0x118] sm:$0xff]
      %v2480 = vld [vmem:[%s2443 + $0x120] sm:$0xff]
      %v2481 = vld [vmem:[%s2443 + $0x128] sm:$0xff]
      %v2482 = vld [vmem:[%s2443 + $0x130] sm:$0xff]
      %v2483 = vld [vmem:[%s2443 + $0x138] sm:$0xff]
      %v2484 = vld [vmem:[%s2443 + $0x140] sm:$0xff]
      %v2485 = vld [vmem:[%s2443 + $0x148] sm:$0xff]
      %v2486 = vld [vmem:[%s2443 + $0x150] sm:$0xff]
      %v2487 = vld [vmem:[%s2443 + $0x158] sm:$0xff]
      %v2488 = vld [vmem:[%s2443 + $0x160] sm:$0xff]
      %v2489 = vld [vmem:[%s2443 + $0x168] sm:$0xff]
      %v2490 = vld [vmem:[%s2443 + $0x170] sm:$0xff]
      %v2491 = vld [vmem:[%s2443 + $0x178] sm:$0xff]
      %v2492 = vld [vmem:[%s2443 + $0x180] sm:$0xff]
      %v2493 = vld [vmem:[%s2443 + $0x188] sm:$0xff]
      %v2494 = vld [vmem:[%s2443 + $0x190] sm:$0xff]
      %v2495 = vld [vmem:[%s2443 + $0x198] sm:$0xff]
      %v2496 = vld [vmem:[%s2443 + $0x1a0] sm:$0xff]
      %v2497 = vld [vmem:[%s2443 + $0x1a8] sm:$0xff]
      %v2498 = vld [vmem:[%s2443 + $0x1b0] sm:$0xff]
      %v2499 = vld [vmem:[%s2443 + $0x1b8] sm:$0xff]
      %v2500 = vld [vmem:[%s2443 + $0x1c0] sm:$0xff]
      %v2501 = vld [vmem:[%s2443 + $0x1c8] sm:$0xff]
      %v2502 = vld [vmem:[%s2443 + $0x1d0] sm:$0xff]
      %v2503 = vld [vmem:[%s2443 + $0x1d8] sm:$0xff]
      %v2504 = vld [vmem:[%s2443 + $0x1e0] sm:$0xff]
      %v2505 = vld [vmem:[%s2443 + $0x1e8] sm:$0xff]
      %v2506 = vld [vmem:[%s2443 + $0x1f0] sm:$0xff]
      %v2507 = vld [vmem:[%s2443 + $0x1f8] sm:$0xff]
      %v2508 = vld [vmem:[%s2443 + $0x200] sm:$0xff]
      %v2509 = vld [vmem:[%s2443 + $0x208] sm:$0xff]
      %v2510 = vld [vmem:[%s2443 + $0x210] sm:$0xff]
      %v2511 = vld [vmem:[%s2443 + $0x218] sm:$0xff]
      %v2512 = vld [vmem:[%s2443 + $0x220] sm:$0xff]
      %v2513 = vld [vmem:[%s2443 + $0x228] sm:$0xff]
      %v2514 = vld [vmem:[%s2443 + $0x230] sm:$0xff]
      %v2515 = vld [vmem:[%s2443 + $0x238] sm:$0xff]
      %v2516 = vld [vmem:[%s2443 + $0x240] sm:$0xff]
      %v2517 = vld [vmem:[%s2443 + $0x248] sm:$0xff]
      %v2518 = vld [vmem:[%s2443 + $0x250] sm:$0xff]
      %v2519 = vld [vmem:[%s2443 + $0x258] sm:$0xff]
      %v2520 = vld [vmem:[%s2443 + $0x260] sm:$0xff]
      %v2521 = vld [vmem:[%s2443 + $0x268] sm:$0xff]
      %v2522 = vld [vmem:[%s2443 + $0x270] sm:$0xff]
      %v2523 = vld [vmem:[%s2443 + $0x278] sm:$0xff]
      %v2524 = vld [vmem:[%s2443 + $0x280] sm:$0xff]
      %v2525 = vld [vmem:[%s2443 + $0x288] sm:$0xff]
      %v2526 = vld [vmem:[%s2443 + $0x290] sm:$0xff]
      %v2527 = vld [vmem:[%s2443 + $0x298] sm:$0xff]
      %v2528 = vld [vmem:[%s2443 + $0x2a0] sm:$0xff]
      %v2529 = vld [vmem:[%s2443 + $0x2a8] sm:$0xff]
      %v2530 = vld [vmem:[%s2443 + $0x2b0] sm:$0xff]
      %v2531 = vld [vmem:[%s2443 + $0x2b8] sm:$0xff]
      %v2532 = vld [vmem:[%s2443 + $0x2c0] sm:$0xff]
      %v2533 = vld [vmem:[%s2443 + $0x2c8] sm:$0xff]
      %v2534 = vld [vmem:[%s2443 + $0x2d0] sm:$0xff]
      %v2535 = vld [vmem:[%s2443 + $0x2d8] sm:$0xff]
      %v2536 = vld [vmem:[%s2443 + $0x2e0] sm:$0xff]
      %v2537 = vld [vmem:[%s2443 + $0x2e8] sm:$0xff]
      %v2538 = vld [vmem:[%s2443 + $0x2f0] sm:$0xff]
      %v2539 = vld [vmem:[%s2443 + $0x2f8] sm:$0xff]
      %v2540 = vld [vmem:[%s2443 + $0x300] sm:$0xff]
      %v2541 = vld [vmem:[%s2443 + $0x308] sm:$0xff]
      %v2542 = vld [vmem:[%s2443 + $0x310] sm:$0xff]
      %v2543 = vld [vmem:[%s2443 + $0x318] sm:$0xff]
      %v2544 = vld [vmem:[%s2443 + $0x320] sm:$0xff]
      %v2545 = vld [vmem:[%s2443 + $0x328] sm:$0xff]
      %v2546 = vld [vmem:[%s2443 + $0x330] sm:$0xff]
      %v2547 = vld [vmem:[%s2443 + $0x338] sm:$0xff]
      %v2548 = vld [vmem:[%s2443 + $0x340] sm:$0xff]
      %v2549 = vld [vmem:[%s2443 + $0x348] sm:$0xff]
      %v2550 = vld [vmem:[%s2443 + $0x350] sm:$0xff]
      %v2551 = vld [vmem:[%s2443 + $0x358] sm:$0xff]
      %v2552 = vsel %vm1176, %v2350, 0
      %v2554 = vsel %vm1176, %v2358, 0
      %v2556 = vsel %vm1176, %v2370, 0
      %v2558 = vsel %vm1176, %v2378, 0
      %v2560 = vsel %vm1176, %v2390, 0
      %v2562 = vsel %vm1176, %v2398, 0
      %v2564 = vsel %vm1176, %v2410, 0
      %v2566 = vsel %vm1176, %v2418, 0
      %2568 = vmatprep.subr.mxu0 %v2445
      %2569 = vmatpush1.msra.mxu0 %v2444
      %2570 = vmatprep.subr.mxu0 %v2447
      %2571 = vmatpush1.msra.mxu0 %v2446
      %2572 = vmatprep.subr.mxu0 %v2449
      %2573 = vmatpush1.msra.mxu0 %v2448
      %2574 = vmatprep.subr.mxu0 %v2451
      %2575 = vmatpush1.msra.mxu0 %v2450
      %2576 = vmatprep.subr.mxu0 %v2453
      %2577 = vmatpush1.msra.mxu0 %v2452
      %2578 = vmatprep.subr.mxu0 %v2455
      %2579 = vmatpush1.msra.mxu0 %v2454
      %2580 = vmatprep.subr.mxu0 %v2457
      %2581 = vmatpush1.msra.mxu0 %v2456
      %2582 = vmatprep.subr.mxu0 %v2459
      %2583 = vmatpush1.msra.mxu0 %v2458
      %2584 = vmatprep.subr.mxu0 %v2461
      %2585 = vmatpush1.msra.mxu0 %v2460
      %2586 = vmatprep.subr.mxu0 %v2463
      %2587 = vmatpush1.msra.mxu0 %v2462
      %2588 = vmatprep.subr.mxu0 %v2465
      %2589 = vmatpush1.msra.mxu0 %v2464
      %2590 = vmatprep.subr.mxu0 %v2467
      %2591 = vmatpush1.msra.mxu0 %v2466
      %2592 = vmatprep.subr.mxu0 %v2469
      %2593 = vmatpush1.msra.mxu0 %v2468
      %2594 = vmatprep.subr.mxu0 %v2471
      %2595 = vmatpush1.msra.mxu0 %v2470
      %2596 = vmatprep.subr.mxu0 %v2473
      %2597 = vmatpush1.msra.mxu0 %v2472
      %2598 = vmatprep.subr.mxu0 %v2475
      %2599 = vmatpush1.msra.mxu0 %v2474
      %2600 = vmatprep.subr.mxu0 %v2477
      %2601 = vmatpush1.msra.mxu0 %v2476
      %2602 = vmatprep.subr.mxu0 %v2479
      %2603 = vmatpush1.msra.mxu0 %v2478
      %2604 = vmatprep.subr.mxu0 %v2481
      %2605 = vmatpush1.msra.mxu0 %v2480
      %2606 = vmatprep.subr.mxu0 %v2483
      %2607 = vmatpush1.msra.mxu0 %v2482
      %2608 = vmatprep.subr.mxu0 %v2485
      %2609 = vmatpush1.msra.mxu0 %v2484
      %2610 = vmatprep.subr.mxu0 %v2487
      %2611 = vmatpush1.msra.mxu0 %v2486
      %2612 = vmatprep.subr.mxu0 %v2489
      %2613 = vmatpush1.msra.mxu0 %v2488
      %2614 = vmatprep.subr.mxu0 %v2491
      %2615 = vmatpush1.msra.mxu0 %v2490
      %2616 = vmatprep.subr.mxu0 %v2493
      %2617 = vmatpush1.msra.mxu0 %v2492
      %2618 = vmatprep.subr.mxu0 %v2495
      %2619 = vmatpush1.msra.mxu0 %v2494
      %2620 = vmatprep.subr.mxu0 %v2497
      %2621 = vmatpush1.msra.mxu0 %v2496
      %2622 = vmatprep.subr.mxu0 %v2499
      %2623 = vmatpush1.msra.mxu0 %v2498
      %2624 = vmatprep.subr.mxu0 %v2501
      %2625 = vmatpush1.msra.mxu0 %v2500
      %2626 = vmatprep.subr.mxu0 %v2503
      %2627 = vmatpush1.msra.mxu0 %v2502
      %2628 = vmatprep.subr.mxu0 %v2505
      %2629 = vmatpush1.msra.mxu0 %v2504
      %2630 = vmatprep.subr.mxu0 %v2507
      %2631 = vmatpush1.msra.mxu0 %v2506
      %2632 = vmatprep.mubr.f32.mxu0 %v2344
      %2633 = vmatmul.mubr.f32.gmra.mrb[0].mxu0 %v2341
      %v2634 = vpop.f32.mrb[0].mxu0
      %v2635 = vadd.f32 0.0, %v2634
      %v2636 = vpop.f32.mrb[0].mxu0
      %v2637 = vadd.f32 0.0, %v2636
      %2638 = vmatprep.mubr.f32.mxu0 %v2354
      %2639 = vmatmul.mubr.f32.gmra.mrb[0].mxu0 %v2352
      %v2640 = vpop.f32.mrb[0].mxu0
      %v2641 = vadd.f32 0.0, %v2640
      %v2642 = vpop.f32.mrb[0].mxu0
      %v2643 = vadd.f32 0.0, %v2642
      %2644 = vmatprep.mubr.f32.mxu0 %v2364
      %2645 = vmatmul.mubr.f32.gmra.mrb[0].mxu0 %v2361
      %v2646 = vpop.f32.mrb[0].mxu0
      %v2647 = vadd.f32 0.0, %v2646
      %v2648 = vpop.f32.mrb[0].mxu0
      %v2649 = vadd.f32 0.0, %v2648
      %2650 = vmatprep.mubr.f32.mxu0 %v2374
      %2651 = vmatmul.mubr.f32.gmra.mrb[0].mxu0 %v2372
      %v2652 = vpop.f32.mrb[0].mxu0
      %v2653 = vadd.f32 0.0, %v2652
      %v2654 = vpop.f32.mrb[0].mxu0
      %v2655 = vadd.f32 0.0, %v2654
      %2656 = vmatprep.mubr.f32.mxu0 %v2384
      %2657 = vmatmul.mubr.f32.gmra.mrb[0].mxu0 %v2381
      %v2658 = vpop.f32.mrb[0].mxu0
      %v2659 = vadd.f32 0.0, %v2658
      %v2660 = vpop.f32.mrb[0].mxu0
      %v2661 = vadd.f32 0.0, %v2660
      %2662 = vmatprep.mubr.f32.mxu0 %v2394
      %2663 = vmatmul.mubr.f32.gmra.mrb[0].mxu0 %v2392
      %v2664 = vpop.f32.mrb[0].mxu0
      %v2665 = vadd.f32 0.0, %v2664
      %v2666 = vpop.f32.mrb[0].mxu0
      %v2667 = vadd.f32 0.0, %v2666
      %2668 = vmatprep.mubr.f32.mxu0 %v2404
      %2669 = vmatmul.mubr.f32.gmra.mrb[0].mxu0 %v2401
      %v2670 = vpop.f32.mrb[0].mxu0
      %v2671 = vadd.f32 0.0, %v2670
      %v2672 = vpop.f32.mrb[0].mxu0
      %v2673 = vadd.f32 0.0, %v2672
      %2674 = vmatprep.mubr.f32.mxu0 %v2414
      %2675 = vmatmul.mubr.f32.gmra.mrb[0].mxu0 %v2412
      %v2676 = vpop.f32.mrb[0].mxu0
      %v2677 = vadd.f32 0.0, %v2676
      %v2678 = vpop.f32.mrb[0].mxu0
      %v2679 = vadd.f32 0.0, %v2678
      %2680 = vdwg.mxu0
      %2681 = vmatprep.subr.mxu0 %v2509
      %2682 = vmatpush1.msra.mxu0 %v2508
      %2683 = vmatprep.subr.mxu0 %v2511
      %2684 = vmatpush1.msra.mxu0 %v2510
      %2685 = vmatprep.subr.mxu0 %v2513
      %2686 = vmatpush1.msra.mxu0 %v2512
      %2687 = vmatprep.subr.mxu0 %v2515
      %2688 = vmatpush1.msra.mxu0 %v2514
      %2689 = vmatprep.subr.mxu0 %v2517
      %2690 = vmatpush1.msra.mxu0 %v2516
      %2691 = vmatprep.subr.mxu0 %v2519
      %2692 = vmatpush1.msra.mxu0 %v2518
      %2693 = vmatprep.subr.mxu0 %v2521
      %2694 = vmatpush1.msra.mxu0 %v2520
      %2695 = vmatprep.subr.mxu0 %v2523
      %2696 = vmatpush1.msra.mxu0 %v2522
      %2697 = vmatprep.subr.mxu0 %v2525
      %2698 = vmatpush1.msra.mxu0 %v2524
      %2699 = vmatprep.subr.mxu0 %v2527
      %2700 = vmatpush1.msra.mxu0 %v2526
      %2701 = vmatprep.subr.mxu0 %v2529
      %2702 = vmatpush1.msra.mxu0 %v2528
      %2703 = vmatprep.subr.mxu0 %v2531
      %2704 = vmatpush1.msra.mxu0 %v2530
      %2705 = vmatprep.subr.mxu0 %v2533
      %2706 = vmatpush1.msra.mxu0 %v2532
      %2707 = vmatprep.subr.mxu0 %v2535
      %2708 = vmatpush1.msra.mxu0 %v2534
      %2709 = vmatprep.subr.mxu0 %v2537
      %2710 = vmatpush1.msra.mxu0 %v2536
      %2711 = vmatprep.subr.mxu0 %v2539
      %2712 = vmatpush1.msra.mxu0 %v2538
      %2713 = vmatprep.subr.mxu0 %v2541
      %2714 = vmatpush1.msra.mxu0 %v2540
      %2715 = vmatprep.subr.mxu0 %v2543
      %2716 = vmatpush1.msra.mxu0 %v2542
      %2717 = vmatprep.subr.mxu0 %v2545
      %2718 = vmatpush1.msra.mxu0 %v2544
      %2719 = vmatprep.subr.mxu0 %v2547
      %2720 = vmatpush1.msra.mxu0 %v2546
      %2721 = vmatprep.subr.mxu0 %v2549
      %2722 = vmatpush1.msra.mxu0 %v2548
      %2723 = vmatprep.subr.mxu0 %v2551
      %2724 = vmatpush1.msra.mxu0 %v2550
      %2725 = vmatprep.subr.mxu0 0.0
      %2726 = vmatpush1.msra.mxu0 0.0
      %2727 = vmatprep.subr.mxu0 0.0
      %2728 = vmatpush1.msra.mxu0 0.0
      %2729 = vmatprep.subr.mxu0 0.0
      %2730 = vmatpush1.msra.mxu0 0.0
      %2731 = vmatprep.subr.mxu0 0.0
      %2732 = vmatpush1.msra.mxu0 0.0
      %2733 = vmatprep.subr.mxu0 0.0
      %2734 = vmatpush1.msra.mxu0 0.0
      %2735 = vmatprep.subr.mxu0 0.0
      %2736 = vmatpush1.msra.mxu0 0.0
      %2737 = vmatprep.subr.mxu0 0.0
      %2738 = vmatpush1.msra.mxu0 0.0
      %2739 = vmatprep.subr.mxu0 0.0
      %2740 = vmatpush1.msra.mxu0 0.0
      %2741 = vmatprep.subr.mxu0 0.0
      %2742 = vmatpush1.msra.mxu0 0.0
      %2743 = vmatprep.subr.mxu0 0.0
      %2744 = vmatpush1.msra.mxu0 0.0
      %2745 = vmatprep.mubr.f32.mxu0 %v2552
      %2746 = vmatmul.mubr.f32.gmra.mrb[0].mxu0 %v2347
      %v2747 = vpop.f32.mrb[0].mxu0
      %v2748 = vadd.f32 %v2635, %v2747
      %v2749 = vpop.f32.mrb[0].mxu0
      %v2750 = vadd.f32 %v2637, %v2749
      %2751 = vmatprep.mubr.f32.mxu0 %v2554
      %2752 = vmatmul.mubr.f32.gmra.mrb[0].mxu0 %v2356
      %v2753 = vpop.f32.mrb[0].mxu0
      %v2754 = vadd.f32 %v2641, %v2753
      %v2755 = vpop.f32.mrb[0].mxu0
      %v2756 = vadd.f32 %v2643, %v2755
      %2757 = vmatprep.mubr.f32.mxu0 %v2556
      %2758 = vmatmul.mubr.f32.gmra.mrb[0].mxu0 %v2367
      %v2759 = vpop.f32.mrb[0].mxu0
      %v2760 = vadd.f32 %v2647, %v2759
      %v2761 = vpop.f32.mrb[0].mxu0
      %v2762 = vadd.f32 %v2649, %v2761
      %2763 = vmatprep.mubr.f32.mxu0 %v2558
      %2764 = vmatmul.mubr.f32.gmra.mrb[0].mxu0 %v2376
      %v2765 = vpop.f32.mrb[0].mxu0
      %v2766 = vadd.f32 %v2653, %v2765
      %v2767 = vpop.f32.mrb[0].mxu0
      %v2768 = vadd.f32 %v2655, %v2767
      %2769 = vmatprep.mubr.f32.mxu0 %v2560
      %2770 = vmatmul.mubr.f32.gmra.mrb[0].mxu0 %v2387
      %v2771 = vpop.f32.mrb[0].mxu0
      %v2772 = vadd.f32 %v2659, %v2771
      %v2773 = vpop.f32.mrb[0].mxu0
      %v2774 = vadd.f32 %v2661, %v2773
      %2775 = vmatprep.mubr.f32.mxu0 %v2562
      %2776 = vmatmul.mubr.f32.gmra.mrb[0].mxu0 %v2396
      %v2777 = vpop.f32.mrb[0].mxu0
      %v2778 = vadd.f32 %v2665, %v2777
      %v2779 = vpop.f32.mrb[0].mxu0
      %v2780 = vadd.f32 %v2667, %v2779
      %2781 = vmatprep.mubr.f32.mxu0 %v2564
      %2782 = vmatmul.mubr.f32.gmra.mrb[0].mxu0 %v2407
      %v2783 = vpop.f32.mrb[0].mxu0
      %v2784 = vadd.f32 %v2671, %v2783
      %v2785 = vpop.f32.mrb[0].mxu0
      %v2786 = vadd.f32 %v2673, %v2785
      %2787 = vmatprep.mubr.f32.mxu0 %v2566
      %2788 = vmatmul.mubr.f32.gmra.mrb[0].mxu0 %v2416
      %v2789 = vpop.f32.mrb[0].mxu0
      %v2790 = vadd.f32 %v2677, %v2789
      %v2791 = vpop.f32.mrb[0].mxu0
      %v2792 = vadd.f32 %v2679, %v2791
      %2793 = vdwg.mxu0
      %v2794 = vadd.f32 %v2196, %v2748
      %v2795 = vadd.f32 %v2198, %v2750
      %v2796 = vadd.f32 %v2202, %v2754
      %v2797 = vadd.f32 %v2204, %v2756
      %v2798 = vadd.f32 %v2208, %v2760
      %v2799 = vadd.f32 %v2210, %v2762
      %v2800 = vadd.f32 %v2214, %v2766
      %v2801 = vadd.f32 %v2216, %v2768
      %v2802 = vadd.f32 %v2220, %v2772
      %v2803 = vadd.f32 %v2222, %v2774
      %v2804 = vadd.f32 %v2226, %v2778
      %v2805 = vadd.f32 %v2228, %v2780
      %v2806 = vadd.f32 %v2232, %v2784
      %v2807 = vadd.f32 %v2234, %v2786
      %v2808 = vadd.f32 %v2238, %v2790
      %v2809 = vadd.f32 %v2240, %v2792
      %v2810 = vld [vmem:[#allocation2] sm:$0xfc]
      %v2811 = vld [vmem:[#allocation2 + $0x8] sm:$0xfc]
      %v2812 = vld [vmem:[#allocation2 + $0x10] sm:$0xfc]
      %v2813 = vld [vmem:[#allocation2 + $0x18] sm:$0xfc]
      %v2814 = vld [vmem:[#allocation2 + $0x40] sm:$0x3]
      %v2815 = vld [vmem:[#allocation2 + $0x48] sm:$0x3]
      %v2816 = vld [vmem:[#allocation2 + $0x50] sm:$0x3]
      %v2817 = vld [vmem:[#allocation2 + $0x58] sm:$0x3]
      %v2818 = vld [vmem:[#allocation2 + $0x60] sm:$0xfc]
      %v2819 = vld [vmem:[#allocation2 + $0x68] sm:$0xfc]
      %v2820 = vld [vmem:[#allocation2 + $0x70] sm:$0xfc]
      %v2821 = vld [vmem:[#allocation2 + $0x78] sm:$0xfc]
      %v2822 = vld [vmem:[#allocation2 + $0xa0] sm:$0x3]
      %v2823 = vld [vmem:[#allocation2 + $0xa8] sm:$0x3]
      %v2824 = vld [vmem:[#allocation2 + $0xb0] sm:$0x3]
      %v2825 = vld [vmem:[#allocation2 + $0xb8] sm:$0x3]
      %v2826 = vld [vmem:[#allocation2 + $0xc0] sm:$0xfc]
      %v2827 = vld [vmem:[#allocation2 + $0xc8] sm:$0xfc]
      %v2828 = vld [vmem:[#allocation2 + $0xd0] sm:$0xfc]
      %v2829 = vld [vmem:[#allocation2 + $0xd8] sm:$0xfc]
      %v2830 = vld [vmem:[#allocation2 + $0x100] sm:$0x3]
      %v2831 = vld [vmem:[#allocation2 + $0x108] sm:$0x3]
      %v2832 = vld [vmem:[#allocation2 + $0x110] sm:$0x3]
      %v2833 = vld [vmem:[#allocation2 + $0x118] sm:$0x3]
      %v2834 = vld [vmem:[#allocation2 + $0x120] sm:$0xfc]
      %v2835 = vld [vmem:[#allocation2 + $0x128] sm:$0xfc]
      %v2836 = vld [vmem:[#allocation2 + $0x130] sm:$0xfc]
      %v2837 = vld [vmem:[#allocation2 + $0x138] sm:$0xfc]
      %v2838 = vld [vmem:[#allocation2 + $0x160] sm:$0x3]
      %v2839 = vld [vmem:[#allocation2 + $0x168] sm:$0x3]
      %v2840 = vld [vmem:[#allocation2 + $0x170] sm:$0x3]
      %v2841 = vld [vmem:[#allocation2 + $0x178] sm:$0x3]
      %vm2874 = vcmask 1045504
      %v2875 = vrot.slane %v2810, 2
      %v2876 = vrot.slane %v2246, 2
      %v2877 = vsel %vm2874, %v2875, %v2876
      %v2878 = vrot.slane %v2811, 2
      %v2879 = vrot.slane %v2247, 2
      %v2880 = vsel %vm2874, %v2878, %v2879
      %v2881 = vrot.slane %v2812, 2
      %v2882 = vrot.slane %v2248, 2
      %v2883 = vsel %vm2874, %v2881, %v2882
      %v2884 = vrot.slane %v2813, 2
      %v2885 = vrot.slane %v2249, 2
      %v2886 = vsel %vm2874, %v2884, %v2885
      %v2887 = vrot.slane %v2814, 2
      %v2888 = vsel %vm2874, %v2876, %v2887
      %v2889 = vrot.slane %v2815, 2
      %v2890 = vsel %vm2874, %v2879, %v2889
      %v2891 = vrot.slane %v2816, 2
      %v2892 = vsel %vm2874, %v2882, %v2891
      %v2893 = vrot.slane %v2817, 2
      %v2894 = vsel %vm2874, %v2885, %v2893
      %v2895 = vrot.slane %v2818, 2
      %v2896 = vrot.slane %v2258, 2
      %v2897 = vsel %vm2874, %v2895, %v2896
      %v2898 = vrot.slane %v2819, 2
      %v2899 = vrot.slane %v2259, 2
      %v2900 = vsel %vm2874, %v2898, %v2899
      %v2901 = vrot.slane %v2820, 2
      %v2902 = vrot.slane %v2260, 2
      %v2903 = vsel %vm2874, %v2901, %v2902
      %v2904 = vrot.slane %v2821, 2
      %v2905 = vrot.slane %v2261, 2
      %v2906 = vsel %vm2874, %v2904, %v2905
      %v2907 = vrot.slane %v2822, 2
      %v2908 = vsel %vm2874, %v2896, %v2907
      %v2909 = vrot.slane %v2823, 2
      %v2910 = vsel %vm2874, %v2899, %v2909
      %v2911 = vrot.slane %v2824, 2
      %v2912 = vsel %vm2874, %v2902, %v2911
      %v2913 = vrot.slane %v2825, 2
      %v2914 = vsel %vm2874, %v2905, %v2913
      %v2915 = vrot.slane %v2826, 2
      %v2916 = vrot.slane %v2270, 2
      %v2917 = vsel %vm2874, %v2915, %v2916
      %v2918 = vrot.slane %v2827, 2
      %v2919 = vrot.slane %v2271, 2
      %v2920 = vsel %vm2874, %v2918, %v2919
      %v2921 = vrot.slane %v2828, 2
      %v2922 = vrot.slane %v2272, 2
      %v2923 = vsel %vm2874, %v2921, %v2922
      %v2924 = vrot.slane %v2829, 2
      %v2925 = vrot.slane %v2273, 2
      %v2926 = vsel %vm2874, %v2924, %v2925
      %v2927 = vrot.slane %v2830, 2
      %v2928 = vsel %vm2874, %v2916, %v2927
      %v2929 = vrot.slane %v2831, 2
      %v2930 = vsel %vm2874, %v2919, %v2929
      %v2931 = vrot.slane %v2832, 2
      %v2932 = vsel %vm2874, %v2922, %v2931
      %v2933 = vrot.slane %v2833, 2
      %v2934 = vsel %vm2874, %v2925, %v2933
      %v2935 = vrot.slane %v2834, 2
      %v2936 = vrot.slane %v2282, 2
      %v2937 = vsel %vm2874, %v2935, %v2936
      %v2938 = vrot.slane %v2835, 2
      %v2939 = vrot.slane %v2283, 2
      %v2940 = vsel %vm2874, %v2938, %v2939
      %v2941 = vrot.slane %v2836, 2
      %v2942 = vrot.slane %v2284, 2
      %v2943 = vsel %vm2874, %v2941, %v2942
      %v2944 = vrot.slane %v2837, 2
      %v2945 = vrot.slane %v2285, 2
      %v2946 = vsel %vm2874, %v2944, %v2945
      %v2947 = vrot.slane %v2838, 2
      %v2948 = vsel %vm2874, %v2936, %v2947
      %v2949 = vrot.slane %v2839, 2
      %v2950 = vsel %vm2874, %v2939, %v2949
      %v2951 = vrot.slane %v2840, 2
      %v2952 = vsel %vm2874, %v2942, %v2951
      %v2953 = vrot.slane %v2841, 2
      %v2954 = vsel %vm2874, %v2945, %v2953
      %s2979 = scalar_lea.vmem %s7, 1728
      %v2980 = vld [vmem:[%s2979] sm:$0xff]
      %v2981 = vld [vmem:[%s2979 + $0x8] sm:$0xff]
      %v2982 = vld [vmem:[%s2979 + $0x10] sm:$0xff]
      %v2983 = vld [vmem:[%s2979 + $0x18] sm:$0xff]
      %v2984 = vld [vmem:[%s2979 + $0x20] sm:$0xff]
      %v2985 = vld [vmem:[%s2979 + $0x28] sm:$0xff]
      %v2986 = vld [vmem:[%s2979 + $0x30] sm:$0xff]
      %v2987 = vld [vmem:[%s2979 + $0x38] sm:$0xff]
      %v2988 = vld [vmem:[%s2979 + $0x40] sm:$0xff]
      %v2989 = vld [vmem:[%s2979 + $0x48] sm:$0xff]
      %v2990 = vld [vmem:[%s2979 + $0x50] sm:$0xff]
      %v2991 = vld [vmem:[%s2979 + $0x58] sm:$0xff]
      %v2992 = vld [vmem:[%s2979 + $0x60] sm:$0xff]
      %v2993 = vld [vmem:[%s2979 + $0x68] sm:$0xff]
      %v2994 = vld [vmem:[%s2979 + $0x70] sm:$0xff]
      %v2995 = vld [vmem:[%s2979 + $0x78] sm:$0xff]
      %v2996 = vld [vmem:[%s2979 + $0x80] sm:$0xff]
      %v2997 = vld [vmem:[%s2979 + $0x88] sm:$0xff]
      %v2998 = vld [vmem:[%s2979 + $0x90] sm:$0xff]
      %v2999 = vld [vmem:[%s2979 + $0x98] sm:$0xff]
      %v3000 = vld [vmem:[%s2979 + $0xa0] sm:$0xff]
      %v3001 = vld [vmem:[%s2979 + $0xa8] sm:$0xff]
      %v3002 = vld [vmem:[%s2979 + $0xb0] sm:$0xff]
      %v3003 = vld [vmem:[%s2979 + $0xb8] sm:$0xff]
      %v3004 = vld [vmem:[%s2979 + $0xc0] sm:$0xff]
      %v3005 = vld [vmem:[%s2979 + $0xc8] sm:$0xff]
      %v3006 = vld [vmem:[%s2979 + $0xd0] sm:$0xff]
      %v3007 = vld [vmem:[%s2979 + $0xd8] sm:$0xff]
      %v3008 = vld [vmem:[%s2979 + $0xe0] sm:$0xff]
      %v3009 = vld [vmem:[%s2979 + $0xe8] sm:$0xff]
      %v3010 = vld [vmem:[%s2979 + $0xf0] sm:$0xff]
      %v3011 = vld [vmem:[%s2979 + $0xf8] sm:$0xff]
      %v3012 = vld [vmem:[%s2979 + $0x100] sm:$0xff]
      %v3013 = vld [vmem:[%s2979 + $0x108] sm:$0xff]
      %v3014 = vld [vmem:[%s2979 + $0x110] sm:$0xff]
      %v3015 = vld [vmem:[%s2979 + $0x118] sm:$0xff]
      %v3016 = vld [vmem:[%s2979 + $0x120] sm:$0xff]
      %v3017 = vld [vmem:[%s2979 + $0x128] sm:$0xff]
      %v3018 = vld [vmem:[%s2979 + $0x130] sm:$0xff]
      %v3019 = vld [vmem:[%s2979 + $0x138] sm:$0xff]
      %v3020 = vld [vmem:[%s2979 + $0x140] sm:$0xff]
      %v3021 = vld [vmem:[%s2979 + $0x148] sm:$0xff]
      %v3022 = vld [vmem:[%s2979 + $0x150] sm:$0xff]
      %v3023 = vld [vmem:[%s2979 + $0x158] sm:$0xff]
      %v3024 = vld [vmem:[%s2979 + $0x160] sm:$0xff]
      %v3025 = vld [vmem:[%s2979 + $0x168] sm:$0xff]
      %v3026 = vld [vmem:[%s2979 + $0x170] sm:$0xff]
      %v3027 = vld [vmem:[%s2979 + $0x178] sm:$0xff]
      %v3028 = vld [vmem:[%s2979 + $0x180] sm:$0xff]
      %v3029 = vld [vmem:[%s2979 + $0x188] sm:$0xff]
      %v3030 = vld [vmem:[%s2979 + $0x190] sm:$0xff]
      %v3031 = vld [vmem:[%s2979 + $0x198] sm:$0xff]
      %v3032 = vld [vmem:[%s2979 + $0x1a0] sm:$0xff]
      %v3033 = vld [vmem:[%s2979 + $0x1a8] sm:$0xff]
      %v3034 = vld [vmem:[%s2979 + $0x1b0] sm:$0xff]
      %v3035 = vld [vmem:[%s2979 + $0x1b8] sm:$0xff]
      %v3036 = vld [vmem:[%s2979 + $0x1c0] sm:$0xff]
      %v3037 = vld [vmem:[%s2979 + $0x1c8] sm:$0xff]
      %v3038 = vld [vmem:[%s2979 + $0x1d0] sm:$0xff]
      %v3039 = vld [vmem:[%s2979 + $0x1d8] sm:$0xff]
      %v3040 = vld [vmem:[%s2979 + $0x1e0] sm:$0xff]
      %v3041 = vld [vmem:[%s2979 + $0x1e8] sm:$0xff]
      %v3042 = vld [vmem:[%s2979 + $0x1f0] sm:$0xff]
      %v3043 = vld [vmem:[%s2979 + $0x1f8] sm:$0xff]
      %v3044 = vld [vmem:[%s2979 + $0x200] sm:$0xff]
      %v3045 = vld [vmem:[%s2979 + $0x208] sm:$0xff]
      %v3046 = vld [vmem:[%s2979 + $0x210] sm:$0xff]
      %v3047 = vld [vmem:[%s2979 + $0x218] sm:$0xff]
      %v3048 = vld [vmem:[%s2979 + $0x220] sm:$0xff]
      %v3049 = vld [vmem:[%s2979 + $0x228] sm:$0xff]
      %v3050 = vld [vmem:[%s2979 + $0x230] sm:$0xff]
      %v3051 = vld [vmem:[%s2979 + $0x238] sm:$0xff]
      %v3052 = vld [vmem:[%s2979 + $0x240] sm:$0xff]
      %v3053 = vld [vmem:[%s2979 + $0x248] sm:$0xff]
      %v3054 = vld [vmem:[%s2979 + $0x250] sm:$0xff]
      %v3055 = vld [vmem:[%s2979 + $0x258] sm:$0xff]
      %v3056 = vld [vmem:[%s2979 + $0x260] sm:$0xff]
      %v3057 = vld [vmem:[%s2979 + $0x268] sm:$0xff]
      %v3058 = vld [vmem:[%s2979 + $0x270] sm:$0xff]
      %v3059 = vld [vmem:[%s2979 + $0x278] sm:$0xff]
      %v3060 = vld [vmem:[%s2979 + $0x280] sm:$0xff]
      %v3061 = vld [vmem:[%s2979 + $0x288] sm:$0xff]
      %v3062 = vld [vmem:[%s2979 + $0x290] sm:$0xff]
      %v3063 = vld [vmem:[%s2979 + $0x298] sm:$0xff]
      %v3064 = vld [vmem:[%s2979 + $0x2a0] sm:$0xff]
      %v3065 = vld [vmem:[%s2979 + $0x2a8] sm:$0xff]
      %v3066 = vld [vmem:[%s2979 + $0x2b0] sm:$0xff]
      %v3067 = vld [vmem:[%s2979 + $0x2b8] sm:$0xff]
      %v3068 = vld [vmem:[%s2979 + $0x2c0] sm:$0xff]
      %v3069 = vld [vmem:[%s2979 + $0x2c8] sm:$0xff]
      %v3070 = vld [vmem:[%s2979 + $0x2d0] sm:$0xff]
      %v3071 = vld [vmem:[%s2979 + $0x2d8] sm:$0xff]
      %v3072 = vld [vmem:[%s2979 + $0x2e0] sm:$0xff]
      %v3073 = vld [vmem:[%s2979 + $0x2e8] sm:$0xff]
      %v3074 = vld [vmem:[%s2979 + $0x2f0] sm:$0xff]
      %v3075 = vld [vmem:[%s2979 + $0x2f8] sm:$0xff]
      %v3076 = vld [vmem:[%s2979 + $0x300] sm:$0xff]
      %v3077 = vld [vmem:[%s2979 + $0x308] sm:$0xff]
      %v3078 = vld [vmem:[%s2979 + $0x310] sm:$0xff]
      %v3079 = vld [vmem:[%s2979 + $0x318] sm:$0xff]
      %v3080 = vld [vmem:[%s2979 + $0x320] sm:$0xff]
      %v3081 = vld [vmem:[%s2979 + $0x328] sm:$0xff]
      %v3082 = vld [vmem:[%s2979 + $0x330] sm:$0xff]
      %v3083 = vld [vmem:[%s2979 + $0x338] sm:$0xff]
      %v3084 = vld [vmem:[%s2979 + $0x340] sm:$0xff]
      %v3085 = vld [vmem:[%s2979 + $0x348] sm:$0xff]
      %v3086 = vld [vmem:[%s2979 + $0x350] sm:$0xff]
      %v3087 = vld [vmem:[%s2979 + $0x358] sm:$0xff]
      %v3088 = vsel %vm1176, %v2886, 0
      %v3090 = vsel %vm1176, %v2894, 0
      %v3092 = vsel %vm1176, %v2906, 0
      %v3094 = vsel %vm1176, %v2914, 0
      %v3096 = vsel %vm1176, %v2926, 0
      %v3098 = vsel %vm1176, %v2934, 0
      %v3100 = vsel %vm1176, %v2946, 0
      %v3102 = vsel %vm1176, %v2954, 0
      %3104 = vmatprep.subr.mxu0 %v2981
      %3105 = vmatpush1.msra.mxu0 %v2980
      %3106 = vmatprep.subr.mxu0 %v2983
      %3107 = vmatpush1.msra.mxu0 %v2982
      %3108 = vmatprep.subr.mxu0 %v2985
      %3109 = vmatpush1.msra.mxu0 %v2984
      %3110 = vmatprep.subr.mxu0 %v2987
      %3111 = vmatpush1.msra.mxu0 %v2986
      %3112 = vmatprep.subr.mxu0 %v2989
      %3113 = vmatpush1.msra.mxu0 %v2988
      %3114 = vmatprep.subr.mxu0 %v2991
      %3115 = vmatpush1.msra.mxu0 %v2990
      %3116 = vmatprep.subr.mxu0 %v2993
      %3117 = vmatpush1.msra.mxu0 %v2992
      %3118 = vmatprep.subr.mxu0 %v2995
      %3119 = vmatpush1.msra.mxu0 %v2994
      %3120 = vmatprep.subr.mxu0 %v2997
      %3121 = vmatpush1.msra.mxu0 %v2996
      %3122 = vmatprep.subr.mxu0 %v2999
      %3123 = vmatpush1.msra.mxu0 %v2998
      %3124 = vmatprep.subr.mxu0 %v3001
      %3125 = vmatpush1.msra.mxu0 %v3000
      %3126 = vmatprep.subr.mxu0 %v3003
      %3127 = vmatpush1.msra.mxu0 %v3002
      %3128 = vmatprep.subr.mxu0 %v3005
      %3129 = vmatpush1.msra.mxu0 %v3004
      %3130 = vmatprep.subr.mxu0 %v3007
      %3131 = vmatpush1.msra.mxu0 %v3006
      %3132 = vmatprep.subr.mxu0 %v3009
      %3133 = vmatpush1.msra.mxu0 %v3008
      %3134 = vmatprep.subr.mxu0 %v3011
      %3135 = vmatpush1.msra.mxu0 %v3010
      %3136 = vmatprep.subr.mxu0 %v3013
      %3137 = vmatpush1.msra.mxu0 %v3012
      %3138 = vmatprep.subr.mxu0 %v3015
      %3139 = vmatpush1.msra.mxu0 %v3014
      %3140 = vmatprep.subr.mxu0 %v3017
      %3141 = vmatpush1.msra.mxu0 %v3016
      %3142 = vmatprep.subr.mxu0 %v3019
      %3143 = vmatpush1.msra.mxu0 %v3018
      %3144 = vmatprep.subr.mxu0 %v3021
      %3145 = vmatpush1.msra.mxu0 %v3020
      %3146 = vmatprep.subr.mxu0 %v3023
      %3147 = vmatpush1.msra.mxu0 %v3022
      %3148 = vmatprep.subr.mxu0 %v3025
      %3149 = vmatpush1.msra.mxu0 %v3024
      %3150 = vmatprep.subr.mxu0 %v3027
      %3151 = vmatpush1.msra.mxu0 %v3026
      %3152 = vmatprep.subr.mxu0 %v3029
      %3153 = vmatpush1.msra.mxu0 %v3028
      %3154 = vmatprep.subr.mxu0 %v3031
      %3155 = vmatpush1.msra.mxu0 %v3030
      %3156 = vmatprep.subr.mxu0 %v3033
      %3157 = vmatpush1.msra.mxu0 %v3032
      %3158 = vmatprep.subr.mxu0 %v3035
      %3159 = vmatpush1.msra.mxu0 %v3034
      %3160 = vmatprep.subr.mxu0 %v3037
      %3161 = vmatpush1.msra.mxu0 %v3036
      %3162 = vmatprep.subr.mxu0 %v3039
      %3163 = vmatpush1.msra.mxu0 %v3038
      %3164 = vmatprep.subr.mxu0 %v3041
      %3165 = vmatpush1.msra.mxu0 %v3040
      %3166 = vmatprep.subr.mxu0 %v3043
      %3167 = vmatpush1.msra.mxu0 %v3042
      %3168 = vmatprep.mubr.f32.mxu0 %v2880
      %3169 = vmatmul.mubr.f32.gmra.mrb[0].mxu0 %v2877
      %v3170 = vpop.f32.mrb[0].mxu0
      %v3171 = vadd.f32 0.0, %v3170
      %v3172 = vpop.f32.mrb[0].mxu0
      %v3173 = vadd.f32 0.0, %v3172
      %3174 = vmatprep.mubr.f32.mxu0 %v2890
      %3175 = vmatmul.mubr.f32.gmra.mrb[0].mxu0 %v2888
      %v3176 = vpop.f32.mrb[0].mxu0
      %v3177 = vadd.f32 0.0, %v3176
      %v3178 = vpop.f32.mrb[0].mxu0
      %v3179 = vadd.f32 0.0, %v3178
      %3180 = vmatprep.mubr.f32.mxu0 %v2900
      %3181 = vmatmul.mubr.f32.gmra.mrb[0].mxu0 %v2897
      %v3182 = vpop.f32.mrb[0].mxu0
      %v3183 = vadd.f32 0.0, %v3182
      %v3184 = vpop.f32.mrb[0].mxu0
      %v3185 = vadd.f32 0.0, %v3184
      %3186 = vmatprep.mubr.f32.mxu0 %v2910
      %3187 = vmatmul.mubr.f32.gmra.mrb[0].mxu0 %v2908
      %v3188 = vpop.f32.mrb[0].mxu0
      %v3189 = vadd.f32 0.0, %v3188
      %v3190 = vpop.f32.mrb[0].mxu0
      %v3191 = vadd.f32 0.0, %v3190
      %3192 = vmatprep.mubr.f32.mxu0 %v2920
      %3193 = vmatmul.mubr.f32.gmra.mrb[0].mxu0 %v2917
      %v3194 = vpop.f32.mrb[0].mxu0
      %v3195 = vadd.f32 0.0, %v3194
      %v3196 = vpop.f32.mrb[0].mxu0
      %v3197 = vadd.f32 0.0, %v3196
      %3198 = vmatprep.mubr.f32.mxu0 %v2930
      %3199 = vmatmul.mubr.f32.gmra.mrb[0].mxu0 %v2928
      %v3200 = vpop.f32.mrb[0].mxu0
      %v3201 = vadd.f32 0.0, %v3200
      %v3202 = vpop.f32.mrb[0].mxu0
      %v3203 = vadd.f32 0.0, %v3202
      %3204 = vmatprep.mubr.f32.mxu0 %v2940
      %3205 = vmatmul.mubr.f32.gmra.mrb[0].mxu0 %v2937
      %v3206 = vpop.f32.mrb[0].mxu0
      %v3207 = vadd.f32 0.0, %v3206
      %v3208 = vpop.f32.mrb[0].mxu0
      %v3209 = vadd.f32 0.0, %v3208
      %3210 = vmatprep.mubr.f32.mxu0 %v2950
      %3211 = vmatmul.mubr.f32.gmra.mrb[0].mxu0 %v2948
      %v3212 = vpop.f32.mrb[0].mxu0
      %v3213 = vadd.f32 0.0, %v3212
      %v3214 = vpop.f32.mrb[0].mxu0
      %v3215 = vadd.f32 0.0, %v3214
      %3216 = vdwg.mxu0
      %3217 = vmatprep.subr.mxu0 %v3045
      %3218 = vmatpush1.msra.mxu0 %v3044
      %3219 = vmatprep.subr.mxu0 %v3047
      %3220 = vmatpush1.msra.mxu0 %v3046
      %3221 = vmatprep.subr.mxu0 %v3049
      %3222 = vmatpush1.msra.mxu0 %v3048
      %3223 = vmatprep.subr.mxu0 %v3051
      %3224 = vmatpush1.msra.mxu0 %v3050
      %3225 = vmatprep.subr.mxu0 %v3053
      %3226 = vmatpush1.msra.mxu0 %v3052
      %3227 = vmatprep.subr.mxu0 %v3055
      %3228 = vmatpush1.msra.mxu0 %v3054
      %3229 = vmatprep.subr.mxu0 %v3057
      %3230 = vmatpush1.msra.mxu0 %v3056
      %3231 = vmatprep.subr.mxu0 %v3059
      %3232 = vmatpush1.msra.mxu0 %v3058
      %3233 = vmatprep.subr.mxu0 %v3061
      %3234 = vmatpush1.msra.mxu0 %v3060
      %3235 = vmatprep.subr.mxu0 %v3063
      %3236 = vmatpush1.msra.mxu0 %v3062
      %3237 = vmatprep.subr.mxu0 %v3065
      %3238 = vmatpush1.msra.mxu0 %v3064
      %3239 = vmatprep.subr.mxu0 %v3067
      %3240 = vmatpush1.msra.mxu0 %v3066
      %3241 = vmatprep.subr.mxu0 %v3069
      %3242 = vmatpush1.msra.mxu0 %v3068
      %3243 = vmatprep.subr.mxu0 %v3071
      %3244 = vmatpush1.msra.mxu0 %v3070
      %3245 = vmatprep.subr.mxu0 %v3073
      %3246 = vmatpush1.msra.mxu0 %v3072
      %3247 = vmatprep.subr.mxu0 %v3075
      %3248 = vmatpush1.msra.mxu0 %v3074
      %3249 = vmatprep.subr.mxu0 %v3077
      %3250 = vmatpush1.msra.mxu0 %v3076
      %3251 = vmatprep.subr.mxu0 %v3079
      %3252 = vmatpush1.msra.mxu0 %v3078
      %3253 = vmatprep.subr.mxu0 %v3081
      %3254 = vmatpush1.msra.mxu0 %v3080
      %3255 = vmatprep.subr.mxu0 %v3083
      %3256 = vmatpush1.msra.mxu0 %v3082
      %3257 = vmatprep.subr.mxu0 %v3085
      %3258 = vmatpush1.msra.mxu0 %v3084
      %3259 = vmatprep.subr.mxu0 %v3087
      %3260 = vmatpush1.msra.mxu0 %v3086
      %3261 = vmatprep.subr.mxu0 0.0
      %3262 = vmatpush1.msra.mxu0 0.0
      %3263 = vmatprep.subr.mxu0 0.0
      %3264 = vmatpush1.msra.mxu0 0.0
      %3265 = vmatprep.subr.mxu0 0.0
      %3266 = vmatpush1.msra.mxu0 0.0
      %3267 = vmatprep.subr.mxu0 0.0
      %3268 = vmatpush1.msra.mxu0 0.0
      %3269 = vmatprep.subr.mxu0 0.0
      %3270 = vmatpush1.msra.mxu0 0.0
      %3271 = vmatprep.subr.mxu0 0.0
      %3272 = vmatpush1.msra.mxu0 0.0
      %3273 = vmatprep.subr.mxu0 0.0
      %3274 = vmatpush1.msra.mxu0 0.0
      %3275 = vmatprep.subr.mxu0 0.0
      %3276 = vmatpush1.msra.mxu0 0.0
      %3277 = vmatprep.subr.mxu0 0.0
      %3278 = vmatpush1.msra.mxu0 0.0
      %3279 = vmatprep.subr.mxu0 0.0
      %3280 = vmatpush1.msra.mxu0 0.0
      %3281 = vmatprep.mubr.f32.mxu0 %v3088
      %3282 = vmatmul.mubr.f32.gmra.mrb[0].mxu0 %v2883
      %v3283 = vpop.f32.mrb[0].mxu0
      %v3284 = vadd.f32 %v3171, %v3283
      %v3285 = vpop.f32.mrb[0].mxu0
      %v3286 = vadd.f32 %v3173, %v3285
      %3287 = vmatprep.mubr.f32.mxu0 %v3090
      %3288 = vmatmul.mubr.f32.gmra.mrb[0].mxu0 %v2892
      %v3289 = vpop.f32.mrb[0].mxu0
      %v3290 = vadd.f32 %v3177, %v3289
      %v3291 = vpop.f32.mrb[0].mxu0
      %v3292 = vadd.f32 %v3179, %v3291
      %3293 = vmatprep.mubr.f32.mxu0 %v3092
      %3294 = vmatmul.mubr.f32.gmra.mrb[0].mxu0 %v2903
      %v3295 = vpop.f32.mrb[0].mxu0
      %v3296 = vadd.f32 %v3183, %v3295
      %v3297 = vpop.f32.mrb[0].mxu0
      %v3298 = vadd.f32 %v3185, %v3297
      %3299 = vmatprep.mubr.f32.mxu0 %v3094
      %3300 = vmatmul.mubr.f32.gmra.mrb[0].mxu0 %v2912
      %v3301 = vpop.f32.mrb[0].mxu0
      %v3302 = vadd.f32 %v3189, %v3301
      %v3303 = vpop.f32.mrb[0].mxu0
      %v3304 = vadd.f32 %v3191, %v3303
      %3305 = vmatprep.mubr.f32.mxu0 %v3096
      %3306 = vmatmul.mubr.f32.gmra.mrb[0].mxu0 %v2923
      %v3307 = vpop.f32.mrb[0].mxu0
      %v3308 = vadd.f32 %v3195, %v3307
      %v3309 = vpop.f32.mrb[0].mxu0
      %v3310 = vadd.f32 %v3197, %v3309
      %3311 = vmatprep.mubr.f32.mxu0 %v3098
      %3312 = vmatmul.mubr.f32.gmra.mrb[0].mxu0 %v2932
      %v3313 = vpop.f32.mrb[0].mxu0
      %v3314 = vadd.f32 %v3201, %v3313
      %v3315 = vpop.f32.mrb[0].mxu0
      %v3316 = vadd.f32 %v3203, %v3315
      %3317 = vmatprep.mubr.f32.mxu0 %v3100
      %3318 = vmatmul.mubr.f32.gmra.mrb[0].mxu0 %v2943
      %v3319 = vpop.f32.mrb[0].mxu0
      %v3320 = vadd.f32 %v3207, %v3319
      %v3321 = vpop.f32.mrb[0].mxu0
      %v3322 = vadd.f32 %v3209, %v3321
      %3323 = vmatprep.mubr.f32.mxu0 %v3102
      %3324 = vmatmul.mubr.f32.gmra.mrb[0].mxu0 %v2952
      %v3325 = vpop.f32.mrb[0].mxu0
      %v3326 = vadd.f32 %v3213, %v3325
      %v3327 = vpop.f32.mrb[0].mxu0
      %v3328 = vadd.f32 %v3215, %v3327
      %3329 = vdwg.mxu0
      %v3330 = vadd.f32 %v2794, %v3284
      %v3331 = vadd.f32 %v2795, %v3286
      %v3332 = vadd.f32 %v2796, %v3290
      %v3333 = vadd.f32 %v2797, %v3292
      %v3334 = vadd.f32 %v2798, %v3296
      %v3335 = vadd.f32 %v2799, %v3298
      %v3336 = vadd.f32 %v2800, %v3302
      %v3337 = vadd.f32 %v2801, %v3304
      %v3338 = vadd.f32 %v2802, %v3308
      %v3339 = vadd.f32 %v2803, %v3310
      %v3340 = vadd.f32 %v2804, %v3314
      %v3341 = vadd.f32 %v2805, %v3316
      %v3342 = vadd.f32 %v2806, %v3320
      %v3343 = vadd.f32 %v2807, %v3322
      %v3344 = vadd.f32 %v2808, %v3326
      %v3345 = vadd.f32 %v2809, %v3328
      %v3346 = vmax.f32 %v3330, 0.0
      %v3347 = vmax.f32 %v3331, 0.0
      %v3348 = vmax.f32 %v3332, 0.0
      %v3349 = vmax.f32 %v3333, 0.0
      %v3350 = vmax.f32 %v3334, 0.0
      %v3351 = vmax.f32 %v3335, 0.0
      %v3352 = vmax.f32 %v3336, 0.0
      %v3353 = vmax.f32 %v3337, 0.0
      %v3354 = vmax.f32 %v3338, 0.0
      %v3355 = vmax.f32 %v3339, 0.0
      %v3356 = vmax.f32 %v3340, 0.0
      %v3357 = vmax.f32 %v3341, 0.0
      %v3358 = vmax.f32 %v3342, 0.0
      %v3359 = vmax.f32 %v3343, 0.0
      %v3360 = vmax.f32 %v3344, 0.0
      %v3361 = vmax.f32 %v3345, 0.0
      %vm3362 = vcmp.lt.s32.totalorder %v1634, 144
      %vm3363 = vmand %vm1635, %vm3362
      %3364 = vst.msk [vmem:[#allocation3] ss:$8 sm:$0x3] %vm3363, 0.0
      %3365 = vst.msk [vmem:[#allocation3] ss:$8 sm:$0x0] %vm3363, 0.0
      %s3366 = scalar_lea.vmem [#allocation3], 48
      %3367 = vst.msk [vmem:[%s3366] ss:$8 sm:$0x3] %vm3363, 0.0
      %3368 = vst.msk [vmem:[%s3366] ss:$8 sm:$0x0] %vm3363, 0.0
      %s3369 = scalar_lea.vmem [#allocation3], 96
      %3370 = vst.msk [vmem:[%s3369] ss:$8 sm:$0x3] %vm3363, 0.0
      %3371 = vst.msk [vmem:[%s3369] ss:$8 sm:$0x0] %vm3363, 0.0
      %s3372 = scalar_lea.vmem [#allocation3], 144
      %3373 = vst.msk [vmem:[%s3372] ss:$8 sm:$0x3] %vm3363, 0.0
      %3374 = vst.msk [vmem:[%s3372] ss:$8 sm:$0x0] %vm3363, 0.0
      %s3375 = scalar_lea.vmem [#allocation3], 33
      %3376 = vst.msk [vmem:[%s3375] ss:$8 sm:$0x3] %vm3363, 0.0
      %3377 = vst.msk [vmem:[%s3375] ss:$8 sm:$0x0] %vm3363, 0.0
      %s3378 = scalar_lea.vmem [#allocation3], 81
      %3379 = vst.msk [vmem:[%s3378] ss:$8 sm:$0x3] %vm3363, 0.0
      %3380 = vst.msk [vmem:[%s3378] ss:$8 sm:$0x0] %vm3363, 0.0
      %s3381 = scalar_lea.vmem [#allocation3], 129
      %3382 = vst.msk [vmem:[%s3381] ss:$8 sm:$0x3] %vm3363, 0.0
      %3383 = vst.msk [vmem:[%s3381] ss:$8 sm:$0x0] %vm3363, 0.0
      %s3384 = scalar_lea.vmem [#allocation3], 177
      %3385 = vst.msk [vmem:[%s3384] ss:$8 sm:$0x3] %vm3363, 0.0
      %3386 = vst.msk [vmem:[%s3384] ss:$8 sm:$0x0] %vm3363, 0.0
      %v3403 = vrot.slane %v3346, 7
      %v3404 = vrot.slane %v3347, 7
      %v3405 = vrot.slane %v3348, 7
      %v3406 = vsel %vm1693, %v3403, %v3405
      %v3407 = vrot.slane %v3349, 7
      %v3408 = vsel %vm1693, %v3404, %v3407
      %v3409 = vrot.slane %v3350, 7
      %v3410 = vrot.slane %v3351, 7
      %v3411 = vrot.slane %v3352, 7
      %v3412 = vsel %vm1693, %v3409, %v3411
      %v3413 = vrot.slane %v3353, 7
      %v3414 = vsel %vm1693, %v3410, %v3413
      %v3415 = vrot.slane %v3354, 7
      %v3416 = vrot.slane %v3355, 7
      %v3417 = vrot.slane %v3356, 7
      %v3418 = vsel %vm1693, %v3415, %v3417
      %v3419 = vrot.slane %v3357, 7
      %v3420 = vsel %vm1693, %v3416, %v3419
      %v3421 = vrot.slane %v3358, 7
      %v3422 = vrot.slane %v3359, 7
      %v3423 = vrot.slane %v3360, 7
      %v3424 = vsel %vm1693, %v3421, %v3423
      %v3425 = vrot.slane %v3361, 7
      %v3426 = vsel %vm1693, %v3422, %v3425
      %3451 = vst [vmem:[#allocation3] sm:$0xfe] %v3403
      %vm3452 = vcmask 130049
      %3453 = vst.msk [vmem:[#allocation3 + $0x8] sm:$0xfe] %vm3452, %v3404
      %3454 = vst [vmem:[#allocation3 + $0x10] sm:$0xff] %v3406
      %vm3455 = vcmask 130048
      %3456 = vst.msk [vmem:[#allocation3 + $0x18] sm:$0xff] %vm3455, %v3408
      %3457 = vst [vmem:[#allocation3 + $0x20] sm:$0x1] %v3405
      %vm3458 = vcmask 122880
      %3459 = vst.msk [vmem:[#allocation3 + $0x28] sm:$0x1] %vm3458, %v3407
      %3460 = vst [vmem:[#allocation3 + $0x30] sm:$0xfe] %v3409
      %3461 = vst.msk [vmem:[#allocation3 + $0x38] sm:$0xfe] %vm3452, %v3410
      %3462 = vst [vmem:[#allocation3 + $0x40] sm:$0xff] %v3412
      %3463 = vst.msk [vmem:[#allocation3 + $0x48] sm:$0xff] %vm3455, %v3414
      %3464 = vst [vmem:[#allocation3 + $0x50] sm:$0x1] %v3411
      %3465 = vst.msk [vmem:[#allocation3 + $0x58] sm:$0x1] %vm3458, %v3413
      %3466 = vst [vmem:[#allocation3 + $0x60] sm:$0xfe] %v3415
      %3467 = vst.msk [vmem:[#allocation3 + $0x68] sm:$0xfe] %vm3452, %v3416
      %3468 = vst [vmem:[#allocation3 + $0x70] sm:$0xff] %v3418
      %3469 = vst.msk [vmem:[#allocation3 + $0x78] sm:$0xff] %vm3455, %v3420
      %3470 = vst [vmem:[#allocation3 + $0x80] sm:$0x1] %v3417
      %3471 = vst.msk [vmem:[#allocation3 + $0x88] sm:$0x1] %vm3458, %v3419
      %3472 = vst [vmem:[#allocation3 + $0x90] sm:$0xfe] %v3421
      %3473 = vst.msk [vmem:[#allocation3 + $0x98] sm:$0xfe] %vm3452, %v3422
      %3474 = vst [vmem:[#allocation3 + $0xa0] sm:$0xff] %v3424
      %3475 = vst.msk [vmem:[#allocation3 + $0xa8] sm:$0xff] %vm3455, %v3426
      %3476 = vst [vmem:[#allocation3 + $0xb0] sm:$0x1] %v3423
      %3477 = vst.msk [vmem:[#allocation3 + $0xb8] sm:$0x1] %vm3458, %v3425
      %v3478 = vld [vmem:[#allocation3] sm:$0xff]
      %v3479 = vld [vmem:[#allocation3 + $0x8] sm:$0xff]
      %v3480 = vld [vmem:[#allocation3 + $0x10] sm:$0xff]
      %v3481 = vld [vmem:[#allocation3 + $0x18] sm:$0xff]
      %v3482 = vld [vmem:[#allocation3 + $0x30] sm:$0xff]
      %v3483 = vld [vmem:[#allocation3 + $0x38] sm:$0xff]
      %v3484 = vld [vmem:[#allocation3 + $0x40] sm:$0xff]
      %v3485 = vld [vmem:[#allocation3 + $0x48] sm:$0xff]
      %v3486 = vld [vmem:[#allocation3 + $0x60] sm:$0xff]
      %v3487 = vld [vmem:[#allocation3 + $0x68] sm:$0xff]
      %v3488 = vld [vmem:[#allocation3 + $0x70] sm:$0xff]
      %v3489 = vld [vmem:[#allocation3 + $0x78] sm:$0xff]
      %v3490 = vld [vmem:[#allocation3 + $0x90] sm:$0xff]
      %v3491 = vld [vmem:[#allocation3 + $0x98] sm:$0xff]
      %v3492 = vld [vmem:[#allocation3 + $0xa0] sm:$0xff]
      %v3493 = vld [vmem:[#allocation3 + $0xa8] sm:$0xff]
      %v3494 = vld [vmem:[%s9] sm:$0xff]
      %v3495 = vld [vmem:[%s9 + $0x8] sm:$0xff]
      %v3496 = vld [vmem:[%s9 + $0x10] sm:$0xff]
      %v3497 = vld [vmem:[%s9 + $0x18] sm:$0xff]
      %v3498 = vld [vmem:[%s9 + $0x20] sm:$0xff]
      %v3499 = vld [vmem:[%s9 + $0x28] sm:$0xff]
      %v3500 = vld [vmem:[%s9 + $0x30] sm:$0xff]
      %v3501 = vld [vmem:[%s9 + $0x38] sm:$0xff]
      %v3502 = vld [vmem:[%s9 + $0x40] sm:$0xff]
      %v3503 = vld [vmem:[%s9 + $0x48] sm:$0xff]
      %v3504 = vld [vmem:[%s9 + $0x50] sm:$0xff]
      %v3505 = vld [vmem:[%s9 + $0x58] sm:$0xff]
      %v3506 = vld [vmem:[%s9 + $0x60] sm:$0xff]
      %v3507 = vld [vmem:[%s9 + $0x68] sm:$0xff]
      %v3508 = vld [vmem:[%s9 + $0x70] sm:$0xff]
      %v3509 = vld [vmem:[%s9 + $0x78] sm:$0xff]
      %v3510 = vld [vmem:[%s9 + $0x80] sm:$0xff]
      %v3511 = vld [vmem:[%s9 + $0x88] sm:$0xff]
      %v3512 = vld [vmem:[%s10] sm:$0x1]
      %v3514 = vlaneseq
      %v3515 = vshrl.u32 %v3514, 7
      %v3516 = vsub.s32 0, %v3515
      %v3517 = vrot.slane %v3512, %v3516
      %v3520 = vsel %vm3455, %v3479, 0
      %v3523 = vsel %vm3455, %v3481, 0
      %v3526 = vsel %vm3455, %v3483, 0
      %v3529 = vsel %vm3455, %v3485, 0
      %v3532 = vsel %vm3455, %v3487, 0
      %v3535 = vsel %vm3455, %v3489, 0
      %v3538 = vsel %vm3455, %v3491, 0
      %v3541 = vsel %vm3455, %v3493, 0
      %3543 = vmatprep.subr.mxu0 0.0
      %3544 = vmatpush1.msra.mxu0 %v3494
      %3545 = vmatprep.subr.mxu0 0.0
      %3546 = vmatpush1.msra.mxu0 %v3495
      %3547 = vmatprep.subr.mxu0 0.0
      %3548 = vmatpush1.msra.mxu0 %v3496
      %3549 = vmatprep.subr.mxu0 0.0
      %3550 = vmatpush1.msra.mxu0 %v3497
      %3551 = vmatprep.subr.mxu0 0.0
      %3552 = vmatpush1.msra.mxu0 %v3498
      %3553 = vmatprep.subr.mxu0 0.0
      %3554 = vmatpush1.msra.mxu0 %v3499
      %3555 = vmatprep.subr.mxu0 0.0
      %3556 = vmatpush1.msra.mxu0 %v3500
      %3557 = vmatprep.subr.mxu0 0.0
      %3558 = vmatpush1.msra.mxu0 %v3501
      %3559 = vmatprep.subr.mxu0 0.0
      %3560 = vmatpush1.msra.mxu0 %v3502
      %3561 = vmatprep.subr.mxu0 0.0
      %3562 = vmatpush1.msra.mxu0 %v3503
      %3563 = vmatprep.subr.mxu0 0.0
      %3564 = vmatpush1.msra.mxu0 %v3504
      %3565 = vmatprep.subr.mxu0 0.0
      %3566 = vmatpush1.msra.mxu0 %v3505
      %3567 = vmatprep.subr.mxu0 0.0
      %3568 = vmatpush1.msra.mxu0 %v3506
      %3569 = vmatprep.subr.mxu0 0.0
      %3570 = vmatpush1.msra.mxu0 %v3507
      %3571 = vmatprep.subr.mxu0 0.0
      %3572 = vmatpush1.msra.mxu0 %v3508
      %3573 = vmatprep.subr.mxu0 0.0
      %3574 = vmatpush1.msra.mxu0 %v3509
      %3575 = vmatprep.subr.mxu0 0.0
      %3576 = vmatpush1.msra.mxu0 %v3510
      %3577 = vmatprep.subr.mxu0 0.0
      %3578 = vmatpush1.msra.mxu0 %v3511
      %3579 = vmatprep.subr.mxu0 0.0
      %3580 = vmatpush1.msra.mxu0 0.0
      %3581 = vmatprep.subr.mxu0 0.0
      %3582 = vmatpush1.msra.mxu0 0.0
      %3583 = vmatprep.subr.mxu0 0.0
      %3584 = vmatpush1.msra.mxu0 0.0
      %3585 = vmatprep.subr.mxu0 0.0
      %3586 = vmatpush1.msra.mxu0 0.0
      %3587 = vmatprep.subr.mxu0 0.0
      %3588 = vmatpush1.msra.mxu0 0.0
      %3589 = vmatprep.subr.mxu0 0.0
      %3590 = vmatpush1.msra.mxu0 0.0
      %3591 = vmatprep.subr.mxu0 0.0
      %3592 = vmatpush1.msra.mxu0 0.0
      %3593 = vmatprep.subr.mxu0 0.0
      %3594 = vmatpush1.msra.mxu0 0.0
      %3595 = vmatprep.subr.mxu0 0.0
      %3596 = vmatpush1.msra.mxu0 0.0
      %3597 = vmatprep.subr.mxu0 0.0
      %3598 = vmatpush1.msra.mxu0 0.0
      %3599 = vmatprep.subr.mxu0 0.0
      %3600 = vmatpush1.msra.mxu0 0.0
      %3601 = vmatprep.subr.mxu0 0.0
      %3602 = vmatpush1.msra.mxu0 0.0
      %3603 = vmatprep.subr.mxu0 0.0
      %3604 = vmatpush1.msra.mxu0 0.0
      %3605 = vmatprep.subr.mxu0 0.0
      %3606 = vmatpush1.msra.mxu0 0.0
      %3607 = vmatprep.mubr.f32.mxu0 %v3520
      %3608 = vmatmul.mubr.f32.gmra.mrb[0].mxu0 %v3478
      %v3609 = vpop.f32.mrb[0].mxu0
      %v3610 = vadd.f32 %v3517, %v3609
      %v3611 = vpop.f32.mrb[0].mxu0
      %3612 = vmatprep.mubr.f32.mxu0 %v3523
      %3613 = vmatmul.mubr.f32.gmra.mrb[0].mxu0 %v3480
      %v3614 = vpop.f32.mrb[0].mxu0
      %v3615 = vadd.f32 %v3517, %v3614
      %v3616 = vpop.f32.mrb[0].mxu0
      %3617 = vmatprep.mubr.f32.mxu0 %v3526
      %3618 = vmatmul.mubr.f32.gmra.mrb[0].mxu0 %v3482
      %v3619 = vpop.f32.mrb[0].mxu0
      %v3620 = vadd.f32 %v3517, %v3619
      %v3621 = vpop.f32.mrb[0].mxu0
      %3622 = vmatprep.mubr.f32.mxu0 %v3529
      %3623 = vmatmul.mubr.f32.gmra.mrb[0].mxu0 %v3484
      %v3624 = vpop.f32.mrb[0].mxu0
      %v3625 = vadd.f32 %v3517, %v3624
      %v3626 = vpop.f32.mrb[0].mxu0
      %3627 = vmatprep.mubr.f32.mxu0 %v3532
      %3628 = vmatmul.mubr.f32.gmra.mrb[0].mxu0 %v3486
      %v3629 = vpop.f32.mrb[0].mxu0
      %v3630 = vadd.f32 %v3517, %v3629
      %v3631 = vpop.f32.mrb[0].mxu0
      %3632 = vmatprep.mubr.f32.mxu0 %v3535
      %3633 = vmatmul.mubr.f32.gmra.mrb[0].mxu0 %v3488
      %v3634 = vpop.f32.mrb[0].mxu0
      %v3635 = vadd.f32 %v3517, %v3634
      %v3636 = vpop.f32.mrb[0].mxu0
      %3637 = vmatprep.mubr.f32.mxu0 %v3538
      %3638 = vmatmul.mubr.f32.gmra.mrb[0].mxu0 %v3490
      %v3639 = vpop.f32.mrb[0].mxu0
      %v3640 = vadd.f32 %v3517, %v3639
      %v3641 = vpop.f32.mrb[0].mxu0
      %3642 = vmatprep.mubr.f32.mxu0 %v3541
      %3643 = vmatmul.mubr.f32.gmra.mrb[0].mxu0 %v3492
      %v3644 = vpop.f32.mrb[0].mxu0
      %v3645 = vadd.f32 %v3517, %v3644
      %v3646 = vpop.f32.mrb[0].mxu0
      %3647 = vdwg.mxu0
      %v3648 = vld [vmem:[#allocation3] sm:$0xfe]
      %v3649 = vld [vmem:[#allocation3 + $0x8] sm:$0xfe]
      %v3650 = vld [vmem:[#allocation3 + $0x10] sm:$0xff]
      %v3651 = vld [vmem:[#allocation3 + $0x18] sm:$0xff]
      %v3652 = vld [vmem:[#allocation3 + $0x20] sm:$0x1]
      %v3653 = vld [vmem:[#allocation3 + $0x28] sm:$0x1]
      %v3654 = vld [vmem:[#allocation3 + $0x30] sm:$0xfe]
      %v3655 = vld [vmem:[#allocation3 + $0x38] sm:$0xfe]
      %v3656 = vld [vmem:[#allocation3 + $0x40] sm:$0xff]
      %v3657 = vld [vmem:[#allocation3 + $0x48] sm:$0xff]
      %v3658 = vld [vmem:[#allocation3 + $0x50] sm:$0x1]
      %v3659 = vld [vmem:[#allocation3 + $0x58] sm:$0x1]
      %v3660 = vld [vmem:[#allocation3 + $0x60] sm:$0xfe]
      %v3661 = vld [vmem:[#allocation3 + $0x68] sm:$0xfe]
      %v3662 = vld [vmem:[#allocation3 + $0x70] sm:$0xff]
      %v3663 = vld [vmem:[#allocation3 + $0x78] sm:$0xff]
      %v3664 = vld [vmem:[#allocation3 + $0x80] sm:$0x1]
      %v3665 = vld [vmem:[#allocation3 + $0x88] sm:$0x1]
      %v3666 = vld [vmem:[#allocation3 + $0x90] sm:$0xfe]
      %v3667 = vld [vmem:[#allocation3 + $0x98] sm:$0xfe]
      %v3668 = vld [vmem:[#allocation3 + $0xa0] sm:$0xff]
      %v3669 = vld [vmem:[#allocation3 + $0xa8] sm:$0xff]
      %v3670 = vld [vmem:[#allocation3 + $0xb0] sm:$0x1]
      %v3671 = vld [vmem:[#allocation3 + $0xb8] sm:$0x1]
      %v3696 = vrot.slane %v3648, 1
      %v3697 = vrot.slane %v3650, 1
      %v3698 = vsel %vm2338, %v3696, %v3697
      %v3699 = vrot.slane %v3649, 1
      %v3700 = vrot.slane %v3651, 1
      %v3701 = vsel %vm2338, %v3699, %v3700
      %v3702 = vrot.slane %v3652, 1
      %v3703 = vsel %vm2338, %v3697, %v3702
      %v3704 = vrot.slane %v3653, 1
      %v3705 = vsel %vm2338, %v3700, %v3704
      %v3706 = vrot.slane %v3654, 1
      %v3707 = vrot.slane %v3656, 1
      %v3708 = vsel %vm2338, %v3706, %v3707
      %v3709 = vrot.slane %v3655, 1
      %v3710 = vrot.slane %v3657, 1
      %v3711 = vsel %vm2338, %v3709, %v3710
      %v3712 = vrot.slane %v3658, 1
      %v3713 = vsel %vm2338, %v3707, %v3712
      %v3714 = vrot.slane %v3659, 1
      %v3715 = vsel %vm2338, %v3710, %v3714
      %v3716 = vrot.slane %v3660, 1
      %v3717 = vrot.slane %v3662, 1
      %v3718 = vsel %vm2338, %v3716, %v3717
      %v3719 = vrot.slane %v3661, 1
      %v3720 = vrot.slane %v3663, 1
      %v3721 = vsel %vm2338, %v3719, %v3720
      %v3722 = vrot.slane %v3664, 1
      %v3723 = vsel %vm2338, %v3717, %v3722
      %v3724 = vrot.slane %v3665, 1
      %v3725 = vsel %vm2338, %v3720, %v3724
      %v3726 = vrot.slane %v3666, 1
      %v3727 = vrot.slane %v3668, 1
      %v3728 = vsel %vm2338, %v3726, %v3727
      %v3729 = vrot.slane %v3667, 1
      %v3730 = vrot.slane %v3669, 1
      %v3731 = vsel %vm2338, %v3729, %v3730
      %v3732 = vrot.slane %v3670, 1
      %v3733 = vsel %vm2338, %v3727, %v3732
      %v3734 = vrot.slane %v3671, 1
      %v3735 = vsel %vm2338, %v3730, %v3734
      %s3744 = scalar_lea.vmem %s9, 144
      %v3745 = vld [vmem:[%s3744] sm:$0xff]
      %v3746 = vld [vmem:[%s3744 + $0x8] sm:$0xff]
      %v3747 = vld [vmem:[%s3744 + $0x10] sm:$0xff]
      %v3748 = vld [vmem:[%s3744 + $0x18] sm:$0xff]
      %v3749 = vld [vmem:[%s3744 + $0x20] sm:$0xff]
      %v3750 = vld [vmem:[%s3744 + $0x28] sm:$0xff]
      %v3751 = vld [vmem:[%s3744 + $0x30] sm:$0xff]
      %v3752 = vld [vmem:[%s3744 + $0x38] sm:$0xff]
      %v3753 = vld [vmem:[%s3744 + $0x40] sm:$0xff]
      %v3754 = vld [vmem:[%s3744 + $0x48] sm:$0xff]
      %v3755 = vld [vmem:[%s3744 + $0x50] sm:$0xff]
      %v3756 = vld [vmem:[%s3744 + $0x58] sm:$0xff]
      %v3757 = vld [vmem:[%s3744 + $0x60] sm:$0xff]
      %v3758 = vld [vmem:[%s3744 + $0x68] sm:$0xff]
      %v3759 = vld [vmem:[%s3744 + $0x70] sm:$0xff]
      %v3760 = vld [vmem:[%s3744 + $0x78] sm:$0xff]
      %v3761 = vld [vmem:[%s3744 + $0x80] sm:$0xff]
      %v3762 = vld [vmem:[%s3744 + $0x88] sm:$0xff]
      %v3763 = vsel %vm3455, %v3701, 0
      %v3765 = vsel %vm3455, %v3705, 0
      %v3767 = vsel %vm3455, %v3711, 0
      %v3769 = vsel %vm3455, %v3715, 0
      %v3771 = vsel %vm3455, %v3721, 0
      %v3773 = vsel %vm3455, %v3725, 0
      %v3775 = vsel %vm3455, %v3731, 0
      %v3777 = vsel %vm3455, %v3735, 0
      %3779 = vmatprep.subr.mxu0 0.0
      %3780 = vmatpush1.msra.mxu0 %v3745
      %3781 = vmatprep.subr.mxu0 0.0
      %3782 = vmatpush1.msra.mxu0 %v3746
      %3783 = vmatprep.subr.mxu0 0.0
      %3784 = vmatpush1.msra.mxu0 %v3747
      %3785 = vmatprep.subr.mxu0 0.0
      %3786 = vmatpush1.msra.mxu0 %v3748
      %3787 = vmatprep.subr.mxu0 0.0
      %3788 = vmatpush1.msra.mxu0 %v3749
      %3789 = vmatprep.subr.mxu0 0.0
      %3790 = vmatpush1.msra.mxu0 %v3750
      %3791 = vmatprep.subr.mxu0 0.0
      %3792 = vmatpush1.msra.mxu0 %v3751
      %3793 = vmatprep.subr.mxu0 0.0
      %3794 = vmatpush1.msra.mxu0 %v3752
      %3795 = vmatprep.subr.mxu0 0.0
      %3796 = vmatpush1.msra.mxu0 %v3753
      %3797 = vmatprep.subr.mxu0 0.0
      %3798 = vmatpush1.msra.mxu0 %v3754
      %3799 = vmatprep.subr.mxu0 0.0
      %3800 = vmatpush1.msra.mxu0 %v3755
      %3801 = vmatprep.subr.mxu0 0.0
      %3802 = vmatpush1.msra.mxu0 %v3756
      %3803 = vmatprep.subr.mxu0 0.0
      %3804 = vmatpush1.msra.mxu0 %v3757
      %3805 = vmatprep.subr.mxu0 0.0
      %3806 = vmatpush1.msra.mxu0 %v3758
      %3807 = vmatprep.subr.mxu0 0.0
      %3808 = vmatpush1.msra.mxu0 %v3759
      %3809 = vmatprep.subr.mxu0 0.0
      %3810 = vmatpush1.msra.mxu0 %v3760
      %3811 = vmatprep.subr.mxu0 0.0
      %3812 = vmatpush1.msra.mxu0 %v3761
      %3813 = vmatprep.subr.mxu0 0.0
      %3814 = vmatpush1.msra.mxu0 %v3762
      %3815 = vmatprep.subr.mxu0 0.0
      %3816 = vmatpush1.msra.mxu0 0.0
      %3817 = vmatprep.subr.mxu0 0.0
      %3818 = vmatpush1.msra.mxu0 0.0
      %3819 = vmatprep.subr.mxu0 0.0
      %3820 = vmatpush1.msra.mxu0 0.0
      %3821 = vmatprep.subr.mxu0 0.0
      %3822 = vmatpush1.msra.mxu0 0.0
      %3823 = vmatprep.subr.mxu0 0.0
      %3824 = vmatpush1.msra.mxu0 0.0
      %3825 = vmatprep.subr.mxu0 0.0
      %3826 = vmatpush1.msra.mxu0 0.0
      %3827 = vmatprep.subr.mxu0 0.0
      %3828 = vmatpush1.msra.mxu0 0.0
      %3829 = vmatprep.subr.mxu0 0.0
      %3830 = vmatpush1.msra.mxu0 0.0
      %3831 = vmatprep.subr.mxu0 0.0
      %3832 = vmatpush1.msra.mxu0 0.0
      %3833 = vmatprep.subr.mxu0 0.0
      %3834 = vmatpush1.msra.mxu0 0.0
      %3835 = vmatprep.subr.mxu0 0.0
      %3836 = vmatpush1.msra.mxu0 0.0
      %3837 = vmatprep.subr.mxu0 0.0
      %3838 = vmatpush1.msra.mxu0 0.0
      %3839 = vmatprep.subr.mxu0 0.0
      %3840 = vmatpush1.msra.mxu0 0.0
      %3841 = vmatprep.subr.mxu0 0.0
      %3842 = vmatpush1.msra.mxu0 0.0
      %3843 = vmatprep.mubr.f32.mxu0 %v3763
      %3844 = vmatmul.mubr.f32.gmra.mrb[0].mxu0 %v3698
      %v3845 = vpop.f32.mrb[0].mxu0
      %v3846 = vadd.f32 0.0, %v3845
      %v3847 = vpop.f32.mrb[0].mxu0
      %3848 = vmatprep.mubr.f32.mxu0 %v3765
      %3849 = vmatmul.mubr.f32.gmra.mrb[0].mxu0 %v3703
      %v3850 = vpop.f32.mrb[0].mxu0
      %v3851 = vadd.f32 0.0, %v3850
      %v3852 = vpop.f32.mrb[0].mxu0
      %3853 = vmatprep.mubr.f32.mxu0 %v3767
      %3854 = vmatmul.mubr.f32.gmra.mrb[0].mxu0 %v3708
      %v3855 = vpop.f32.mrb[0].mxu0
      %v3856 = vadd.f32 0.0, %v3855
      %v3857 = vpop.f32.mrb[0].mxu0
      %3858 = vmatprep.mubr.f32.mxu0 %v3769
      %3859 = vmatmul.mubr.f32.gmra.mrb[0].mxu0 %v3713
      %v3860 = vpop.f32.mrb[0].mxu0
      %v3861 = vadd.f32 0.0, %v3860
      %v3862 = vpop.f32.mrb[0].mxu0
      %3863 = vmatprep.mubr.f32.mxu0 %v3771
      %3864 = vmatmul.mubr.f32.gmra.mrb[0].mxu0 %v3718
      %v3865 = vpop.f32.mrb[0].mxu0
      %v3866 = vadd.f32 0.0, %v3865
      %v3867 = vpop.f32.mrb[0].mxu0
      %3868 = vmatprep.mubr.f32.mxu0 %v3773
      %3869 = vmatmul.mubr.f32.gmra.mrb[0].mxu0 %v3723
      %v3870 = vpop.f32.mrb[0].mxu0
      %v3871 = vadd.f32 0.0, %v3870
      %v3872 = vpop.f32.mrb[0].mxu0
      %3873 = vmatprep.mubr.f32.mxu0 %v3775
      %3874 = vmatmul.mubr.f32.gmra.mrb[0].mxu0 %v3728
      %v3875 = vpop.f32.mrb[0].mxu0
      %v3876 = vadd.f32 0.0, %v3875
      %v3877 = vpop.f32.mrb[0].mxu0
      %3878 = vmatprep.mubr.f32.mxu0 %v3777
      %3879 = vmatmul.mubr.f32.gmra.mrb[0].mxu0 %v3733
      %v3880 = vpop.f32.mrb[0].mxu0
      %v3881 = vadd.f32 0.0, %v3880
      %v3882 = vpop.f32.mrb[0].mxu0
      %3883 = vdwg.mxu0
      %v3884 = vadd.f32 %v3610, %v3846
      %v3885 = vadd.f32 %v3615, %v3851
      %v3886 = vadd.f32 %v3620, %v3856
      %v3887 = vadd.f32 %v3625, %v3861
      %v3888 = vadd.f32 %v3630, %v3866
      %v3889 = vadd.f32 %v3635, %v3871
      %v3890 = vadd.f32 %v3640, %v3876
      %v3891 = vadd.f32 %v3645, %v3881
      %v3892 = vld [vmem:[#allocation3] sm:$0xfc]
      %v3893 = vld [vmem:[#allocation3 + $0x8] sm:$0xfc]
      %v3894 = vld [vmem:[#allocation3 + $0x20] sm:$0x3]
      %v3895 = vld [vmem:[#allocation3 + $0x28] sm:$0x3]
      %v3896 = vld [vmem:[#allocation3 + $0x30] sm:$0xfc]
      %v3897 = vld [vmem:[#allocation3 + $0x38] sm:$0xfc]
      %v3898 = vld [vmem:[#allocation3 + $0x50] sm:$0x3]
      %v3899 = vld [vmem:[#allocation3 + $0x58] sm:$0x3]
      %v3900 = vld [vmem:[#allocation3 + $0x60] sm:$0xfc]
      %v3901 = vld [vmem:[#allocation3 + $0x68] sm:$0xfc]
      %v3902 = vld [vmem:[#allocation3 + $0x80] sm:$0x3]
      %v3903 = vld [vmem:[#allocation3 + $0x88] sm:$0x3]
      %v3904 = vld [vmem:[#allocation3 + $0x90] sm:$0xfc]
      %v3905 = vld [vmem:[#allocation3 + $0x98] sm:$0xfc]
      %v3906 = vld [vmem:[#allocation3 + $0xb0] sm:$0x3]
      %v3907 = vld [vmem:[#allocation3 + $0xb8] sm:$0x3]
      %v3924 = vrot.slane %v3892, 2
      %v3925 = vrot.slane %v3650, 2
      %v3926 = vsel %vm2874, %v3924, %v3925
      %v3927 = vrot.slane %v3893, 2
      %v3928 = vrot.slane %v3651, 2
      %v3929 = vsel %vm2874, %v3927, %v3928
      %v3930 = vrot.slane %v3894, 2
      %v3931 = vsel %vm2874, %v3925, %v3930
      %v3932 = vrot.slane %v3895, 2
      %v3933 = vsel %vm2874, %v3928, %v3932
      %v3934 = vrot.slane %v3896, 2
      %v3935 = vrot.slane %v3656, 2
      %v3936 = vsel %vm2874, %v3934, %v3935
      %v3937 = vrot.slane %v3897, 2
      %v3938 = vrot.slane %v3657, 2
      %v3939 = vsel %vm2874, %v3937, %v3938
      %v3940 = vrot.slane %v3898, 2
      %v3941 = vsel %vm2874, %v3935, %v3940
      %v3942 = vrot.slane %v3899, 2
      %v3943 = vsel %vm2874, %v3938, %v3942
      %v3944 = vrot.slane %v3900, 2
      %v3945 = vrot.slane %v3662, 2
      %v3946 = vsel %vm2874, %v3944, %v3945
      %v3947 = vrot.slane %v3901, 2
      %v3948 = vrot.slane %v3663, 2
      %v3949 = vsel %vm2874, %v3947, %v3948
      %v3950 = vrot.slane %v3902, 2
      %v3951 = vsel %vm2874, %v3945, %v3950
      %v3952 = vrot.slane %v3903, 2
      %v3953 = vsel %vm2874, %v3948, %v3952
      %v3954 = vrot.slane %v3904, 2
      %v3955 = vrot.slane %v3668, 2
      %v3956 = vsel %vm2874, %v3954, %v3955
      %v3957 = vrot.slane %v3905, 2
      %v3958 = vrot.slane %v3669, 2
      %v3959 = vsel %vm2874, %v3957, %v3958
      %v3960 = vrot.slane %v3906, 2
      %v3961 = vsel %vm2874, %v3955, %v3960
      %v3962 = vrot.slane %v3907, 2
      %v3963 = vsel %vm2874, %v3958, %v3962
      %s3972 = scalar_lea.vmem %s9, 288
      %v3973 = vld [vmem:[%s3972] sm:$0xff]
      %v3974 = vld [vmem:[%s3972 + $0x8] sm:$0xff]
      %v3975 = vld [vmem:[%s3972 + $0x10] sm:$0xff]
      %v3976 = vld [vmem:[%s3972 + $0x18] sm:$0xff]
      %v3977 = vld [vmem:[%s3972 + $0x20] sm:$0xff]
      %v3978 = vld [vmem:[%s3972 + $0x28] sm:$0xff]
      %v3979 = vld [vmem:[%s3972 + $0x30] sm:$0xff]
      %v3980 = vld [vmem:[%s3972 + $0x38] sm:$0xff]
      %v3981 = vld [vmem:[%s3972 + $0x40] sm:$0xff]
      %v3982 = vld [vmem:[%s3972 + $0x48] sm:$0xff]
      %v3983 = vld [vmem:[%s3972 + $0x50] sm:$0xff]
      %v3984 = vld [vmem:[%s3972 + $0x58] sm:$0xff]
      %v3985 = vld [vmem:[%s3972 + $0x60] sm:$0xff]
      %v3986 = vld [vmem:[%s3972 + $0x68] sm:$0xff]
      %v3987 = vld [vmem:[%s3972 + $0x70] sm:$0xff]
      %v3988 = vld [vmem:[%s3972 + $0x78] sm:$0xff]
      %v3989 = vld [vmem:[%s3972 + $0x80] sm:$0xff]
      %v3990 = vld [vmem:[%s3972 + $0x88] sm:$0xff]
      %v3991 = vsel %vm3455, %v3929, 0
      %v3993 = vsel %vm3455, %v3933, 0
      %v3995 = vsel %vm3455, %v3939, 0
      %v3997 = vsel %vm3455, %v3943, 0
      %v3999 = vsel %vm3455, %v3949, 0
      %v4001 = vsel %vm3455, %v3953, 0
      %v4003 = vsel %vm3455, %v3959, 0
      %v4005 = vsel %vm3455, %v3963, 0
      %4007 = vmatprep.subr.mxu0 0.0
      %4008 = vmatpush1.msra.mxu0 %v3973
      %4009 = vmatprep.subr.mxu0 0.0
      %4010 = vmatpush1.msra.mxu0 %v3974
      %4011 = vmatprep.subr.mxu0 0.0
      %4012 = vmatpush1.msra.mxu0 %v3975
      %4013 = vmatprep.subr.mxu0 0.0
      %4014 = vmatpush1.msra.mxu0 %v3976
      %4015 = vmatprep.subr.mxu0 0.0
      %4016 = vmatpush1.msra.mxu0 %v3977
      %4017 = vmatprep.subr.mxu0 0.0
      %4018 = vmatpush1.msra.mxu0 %v3978
      %4019 = vmatprep.subr.mxu0 0.0
      %4020 = vmatpush1.msra.mxu0 %v3979
      %4021 = vmatprep.subr.mxu0 0.0
      %4022 = vmatpush1.msra.mxu0 %v3980
      %4023 = vmatprep.subr.mxu0 0.0
      %4024 = vmatpush1.msra.mxu0 %v3981
      %4025 = vmatprep.subr.mxu0 0.0
      %4026 = vmatpush1.msra.mxu0 %v3982
      %4027 = vmatprep.subr.mxu0 0.0
      %4028 = vmatpush1.msra.mxu0 %v3983
      %4029 = vmatprep.subr.mxu0 0.0
      %4030 = vmatpush1.msra.mxu0 %v3984
      %4031 = vmatprep.subr.mxu0 0.0
      %4032 = vmatpush1.msra.mxu0 %v3985
      %4033 = vmatprep.subr.mxu0 0.0
      %4034 = vmatpush1.msra.mxu0 %v3986
      %4035 = vmatprep.subr.mxu0 0.0
      %4036 = vmatpush1.msra.mxu0 %v3987
      %4037 = vmatprep.subr.mxu0 0.0
      %4038 = vmatpush1.msra.mxu0 %v3988
      %4039 = vmatprep.subr.mxu0 0.0
      %4040 = vmatpush1.msra.mxu0 %v3989
      %4041 = vmatprep.subr.mxu0 0.0
      %4042 = vmatpush1.msra.mxu0 %v3990
      %4043 = vmatprep.subr.mxu0 0.0
      %4044 = vmatpush1.msra.mxu0 0.0
      %4045 = vmatprep.subr.mxu0 0.0
      %4046 = vmatpush1.msra.mxu0 0.0
      %4047 = vmatprep.subr.mxu0 0.0
      %4048 = vmatpush1.msra.mxu0 0.0
      %4049 = vmatprep.subr.mxu0 0.0
      %4050 = vmatpush1.msra.mxu0 0.0
      %4051 = vmatprep.subr.mxu0 0.0
      %4052 = vmatpush1.msra.mxu0 0.0
      %4053 = vmatprep.subr.mxu0 0.0
      %4054 = vmatpush1.msra.mxu0 0.0
      %4055 = vmatprep.subr.mxu0 0.0
      %4056 = vmatpush1.msra.mxu0 0.0
      %4057 = vmatprep.subr.mxu0 0.0
      %4058 = vmatpush1.msra.mxu0 0.0
      %4059 = vmatprep.subr.mxu0 0.0
      %4060 = vmatpush1.msra.mxu0 0.0
      %4061 = vmatprep.subr.mxu0 0.0
      %4062 = vmatpush1.msra.mxu0 0.0
      %4063 = vmatprep.subr.mxu0 0.0
      %4064 = vmatpush1.msra.mxu0 0.0
      %4065 = vmatprep.subr.mxu0 0.0
      %4066 = vmatpush1.msra.mxu0 0.0
      %4067 = vmatprep.subr.mxu0 0.0
      %4068 = vmatpush1.msra.mxu0 0.0
      %4069 = vmatprep.subr.mxu0 0.0
      %4070 = vmatpush1.msra.mxu0 0.0
      %4071 = vmatprep.mubr.f32.mxu0 %v3991
      %4072 = vmatmul.mubr.f32.gmra.mrb[0].mxu0 %v3926
      %v4073 = vpop.f32.mrb[0].mxu0
      %v4074 = vadd.f32 0.0, %v4073
      %v4075 = vpop.f32.mrb[0].mxu0
      %4076 = vmatprep.mubr.f32.mxu0 %v3993
      %4077 = vmatmul.mubr.f32.gmra.mrb[0].mxu0 %v3931
      %v4078 = vpop.f32.mrb[0].mxu0
      %v4079 = vadd.f32 0.0, %v4078
      %v4080 = vpop.f32.mrb[0].mxu0
      %4081 = vmatprep.mubr.f32.mxu0 %v3995
      %4082 = vmatmul.mubr.f32.gmra.mrb[0].mxu0 %v3936
      %v4083 = vpop.f32.mrb[0].mxu0
      %v4084 = vadd.f32 0.0, %v4083
      %v4085 = vpop.f32.mrb[0].mxu0
      %4086 = vmatprep.mubr.f32.mxu0 %v3997
      %4087 = vmatmul.mubr.f32.gmra.mrb[0].mxu0 %v3941
      %v4088 = vpop.f32.mrb[0].mxu0
      %v4089 = vadd.f32 0.0, %v4088
      %v4090 = vpop.f32.mrb[0].mxu0
      %4091 = vmatprep.mubr.f32.mxu0 %v3999
      %4092 = vmatmul.mubr.f32.gmra.mrb[0].mxu0 %v3946
      %v4093 = vpop.f32.mrb[0].mxu0
      %v4094 = vadd.f32 0.0, %v4093
      %v4095 = vpop.f32.mrb[0].mxu0
      %4096 = vmatprep.mubr.f32.mxu0 %v4001
      %4097 = vmatmul.mubr.f32.gmra.mrb[0].mxu0 %v3951
      %v4098 = vpop.f32.mrb[0].mxu0
      %v4099 = vadd.f32 0.0, %v4098
      %v4100 = vpop.f32.mrb[0].mxu0
      %4101 = vmatprep.mubr.f32.mxu0 %v4003
      %4102 = vmatmul.mubr.f32.gmra.mrb[0].mxu0 %v3956
      %v4103 = vpop.f32.mrb[0].mxu0
      %v4104 = vadd.f32 0.0, %v4103
      %v4105 = vpop.f32.mrb[0].mxu0
      %4106 = vmatprep.mubr.f32.mxu0 %v4005
      %4107 = vmatmul.mubr.f32.gmra.mrb[0].mxu0 %v3961
      %v4108 = vpop.f32.mrb[0].mxu0
      %v4109 = vadd.f32 0.0, %v4108
      %v4110 = vpop.f32.mrb[0].mxu0
      %4111 = vdwg.mxu0
      %v4112 = vadd.f32 %v3884, %v4074
      %v4113 = vadd.f32 %v3885, %v4079
      %v4114 = vadd.f32 %v3886, %v4084
      %v4115 = vadd.f32 %v3887, %v4089
      %v4116 = vadd.f32 %v3888, %v4094
      %v4117 = vadd.f32 %v3889, %v4099
      %v4118 = vadd.f32 %v3890, %v4104
      %v4119 = vadd.f32 %v3891, %v4109
      %v4120 = vmax.f32 %v4112, 0.0
      %v4121 = vmax.f32 %v4113, 0.0
      %v4122 = vmax.f32 %v4114, 0.0
      %v4123 = vmax.f32 %v4115, 0.0
      %v4124 = vmax.f32 %v4116, 0.0
      %v4125 = vmax.f32 %v4117, 0.0
      %v4126 = vmax.f32 %v4118, 0.0
      %v4127 = vmax.f32 %v4119, 0.0
      %4128 = vst [vmem:[%s406] sm:$0xff] %v4120
      %4129 = vst [vmem:[%s406 + $0x8] sm:$0xff] %v4121
      %4130 = vst [vmem:[%s406 + $0x10] sm:$0xff] %v4122
      %4131 = vst [vmem:[%s406 + $0x18] sm:$0xff] %v4123
      %4132 = vst [vmem:[%s406 + $0x20] sm:$0xff] %v4124
      %4133 = vst [vmem:[%s406 + $0x28] sm:$0xff] %v4125
      %4134 = vst [vmem:[%s406 + $0x30] sm:$0xff] %v4126
      %4135 = vst [vmem:[%s406 + $0x38] sm:$0xff] %v4127
      %p4136 = scmp.lt.s32.totalorder %s22, 1
      %s4137 = scalar_select %p4136, %s22, 1
      %s4138 = smul.addr %s4137, 8
      %s4139 = smul.addr %s4138, 8
      %s4140 = scalar_lea.vmem %s11, %s4139
      // Predicated region
      $region65: #{unet_up3_sqex_forward.1} parent=63 // pred_check
        %p4141 = pneg %p281
      $region66: #{unet_up3_sqex_forward.1} parent=63 // pred_check_branch
        %4143 = sbr.rel (%p4141) target = $region68
      $region67: #{unet_up3_sqex_forward.1} parent=63 // pred_region
        _
      $region68: #{unet_up3_sqex_forward.1} parent=63 // pred_fallthru
        _
    $region64: #{unet_up3_sqex_forward.1} parent=5 // pred_fallthru
      _
    %p4144 = scmp.le.s32.totalorder 2, %s17
    // Predicated region
    $region69: #{unet_up3_sqex_forward.1} parent=5 // pred_check
      %p4145 = pneg %p4144
    $region70: #{unet_up3_sqex_forward.1} parent=5 // pred_check_branch
      %4147 = sbr.rel (%p4145) target = $region72
    $region71: #{unet_up3_sqex_forward.1} parent=5 // pred_region
      %s4148 = ssub.s32 %s17, 2
      // Predicated region
      $region73: #{unet_up3_sqex_forward.1} parent=71 // pred_check
        %p4149 = pneg %p287
      $region74: #{unet_up3_sqex_forward.1} parent=71 // pred_check_branch
        %4151 = sbr.rel (%p4149) target = $region76
      $region75: #{unet_up3_sqex_forward.1} parent=71 // pred_region
        %p4152 = scmp.lt.s32.totalorder %s23, 1
        %s4153 = scalar_select %p4152, %s23, 1
        %s4154 = smul.addr %s4153, 8
        %s4155 = smul.addr %s4154, 8
        %s4156 = scalar_lea.vmem %s11, %s4155
      $region76: #{unet_up3_sqex_forward.1} parent=71 // pred_fallthru
        _
    $region72: #{unet_up3_sqex_forward.1} parent=5 // pred_fallthru
      _
  $region6: #{unet_up3_sqex_forward.1} parent=0 // loop_footer
    %s21 = sadd.s32 1, %s17
  $region7: #{unet_up3_sqex_forward.1} parent=0 // loop_footer_branch
    %16 = sbr.rel target = $region3
  $region8: #{unet_up3_sqex_forward.1} parent=0 // loop_exit
    _

</llo_original>
